<compile_context>
chip_gen: v7x
topology: tpu7x:2x2x1
jax: 0.10.0
libtpu: 0.0.40
codegen_flags: <defaults>
</compile_context>

<pallas_src>
import numpy as np
import jax
import jax.numpy as jnp
from jax.experimental import pallas as pl
from jax.experimental.pallas import tpu as pltpu

# Model hyper-parameters (match the PyTorch __init__ defaults)
INPUT_DIM = 16
D_MODEL = 64
NUM_HEADS = 4
D_HEAD = D_MODEL // NUM_HEADS
NUM_LAYERS = 2
DIM_FF = 128
LN_EPS = 1e-5

# Packed-slab layout ---------------------------------------------------------
W_SLAB_WIDTH = 3 * D_MODEL                     # 192 (widest weight = fused QKV)
B_SLAB_WIDTH = 3 * D_MODEL                     # 192 (widest bias  = fused QKV)
# per-layer weight rows: wqkv(64) + wo(64) + w1(64) + w2(128)
LAYER_W_ROWS = D_MODEL + D_MODEL + D_MODEL + DIM_FF        # 320
LAYER_B_ROWS = 8                               # b_qkv, bo, g1, be1, b1, b2, g2, be2
EMB_W_ROWS = INPUT_DIM                         # 16
FC_W_ROW = EMB_W_ROWS + NUM_LAYERS * LAYER_W_ROWS          # 656
TOTAL_W_ROWS = FC_W_ROW + D_MODEL                          # 720
TOTAL_B_ROWS = 1 + NUM_LAYERS * LAYER_B_ROWS + 1           # 18


def _transformer_kernel(x_ref, w_ref, b_ref, out_ref):
    def mm(a, b):
        return jnp.dot(a, b, preferred_element_type=jnp.float32)

    def layer_norm(h, gamma, beta):
        mu = jnp.mean(h, axis=-1, keepdims=True)
        var = jnp.mean(jnp.square(h - mu), axis=-1, keepdims=True)
        return (h - mu) * jax.lax.rsqrt(var + LN_EPS) * gamma + beta

    x = x_ref[...].astype(jnp.float32)

    # ---- embedding: Linear(input_dim, d_model) ----
    h = mm(x, w_ref[0:EMB_W_ROWS, 0:D_MODEL]) + b_ref[0:1, 0:D_MODEL]

    w_row = EMB_W_ROWS
    b_row = 1
    for _ in range(NUM_LAYERS):
        base = w_row
        w_qkv = w_ref[base:base + D_MODEL, 0:3 * D_MODEL]            # (64, 192)
        wo_base = base + D_MODEL                                     # rows of wo
        w1 = w_ref[base + 2 * D_MODEL:base + 3 * D_MODEL, 0:DIM_FF]  # (64, 128)
        w2 = w_ref[base + 3 * D_MODEL:base + 3 * D_MODEL + DIM_FF, 0:D_MODEL]  # (128, 64)

        b_qkv = b_ref[b_row + 0:b_row + 1, 0:3 * D_MODEL]
        b_o   = b_ref[b_row + 1:b_row + 2, 0:D_MODEL]
        g1    = b_ref[b_row + 2:b_row + 3, 0:D_MODEL]
        be1   = b_ref[b_row + 3:b_row + 4, 0:D_MODEL]
        b_1   = b_ref[b_row + 4:b_row + 5, 0:DIM_FF]
        b_2   = b_ref[b_row + 5:b_row + 6, 0:D_MODEL]
        g2    = b_ref[b_row + 6:b_row + 7, 0:D_MODEL]
        be2   = b_ref[b_row + 7:b_row + 8, 0:D_MODEL]

        # ---- multi-head self-attention over the B "sequence" rows ----
        # One fused QKV matmul; 1/sqrt(d_head) already folded into Q cols/bias.
        qkv = mm(h, w_qkv) + b_qkv                                   # (B, 192)

        # Heads onto a leading (batch) axis: (H, B, d_head)
        q = jnp.stack([qkv[:, hd * D_HEAD:(hd + 1) * D_HEAD]
                       for hd in range(NUM_HEADS)], axis=0)
        k = jnp.stack([qkv[:, D_MODEL + hd * D_HEAD:D_MODEL + (hd + 1) * D_HEAD]
                       for hd in range(NUM_HEADS)], axis=0)
        v = jnp.stack([qkv[:, 2 * D_MODEL + hd * D_HEAD:2 * D_MODEL + (hd + 1) * D_HEAD]
                       for hd in range(NUM_HEADS)], axis=0)

        # Batched attention core (no explicit transposes).
        s = jnp.einsum('hbd,hkd->hbk', q, k,
                       preferred_element_type=jnp.float32)           # (H, B, B)
        s = s - jnp.max(s, axis=-1, keepdims=True)
        e = jnp.exp(s)
        p = e * pl.reciprocal(jnp.sum(e, axis=-1, keepdims=True), approx=True)
        ao = jnp.einsum('hbk,hkd->hbd', p, v,
                        preferred_element_type=jnp.float32)          # (H, B, d_head)

        # Output projection accumulated per head (no lane-axis concat).
        attn = b_o
        for hd in range(NUM_HEADS):
            wo_h = w_ref[wo_base + hd * D_HEAD:wo_base + (hd + 1) * D_HEAD, 0:D_MODEL]
            attn = attn + mm(ao[hd], wo_h)

        # residual + LayerNorm 1
        h = layer_norm(h + attn, g1, be1)

        # feed-forward: linear1 -> ReLU -> linear2
        ff = jnp.maximum(mm(h, w1) + b_1, 0.0)
        ff = mm(ff, w2) + b_2

        # residual + LayerNorm 2
        h = layer_norm(h + ff, g2, be2)

        w_row += LAYER_W_ROWS
        b_row += LAYER_B_ROWS

    # ---- mean over seq dim (size 1) is identity; final fc + sigmoid ----
    w_fc = w_ref[w_row:w_row + D_MODEL, 0:1]                         # (64, 1)
    b_fc = b_ref[b_row:b_row + 1, 0:1]                               # (1, 1)
    logits = mm(h, w_fc) + b_fc                                      # (B, 1)
    out_ref[...] = jax.nn.sigmoid(logits)


# ---------------------------------------------------------------------------
# Parameters: natural (x @ W + b) layout, then packed into two slabs.
# ---------------------------------------------------------------------------
def init_params(key):
    def dense(key, fan_in, fan_out):
        kw, kb = jax.random.split(key)
        w = jax.random.normal(kw, (fan_in, fan_out), jnp.float32) * 0.05
        b = jax.random.normal(kb, (fan_out,), jnp.float32) * 0.05
        return w, b

    keys = jax.random.split(key, 2 + NUM_LAYERS)
    params = {"emb": dense(keys[0], INPUT_DIM, D_MODEL), "layers": [],
              "fc": dense(keys[-1], D_MODEL, 1)}
    for li in range(NUM_LAYERS):
        lk = jax.random.split(keys[1 + li], 6)
        params["layers"].append({
            "wq": dense(lk[0], D_MODEL, D_MODEL),
            "wk": dense(lk[1], D_MODEL, D_MODEL),
            "wv": dense(lk[2], D_MODEL, D_MODEL),
            "wo": dense(lk[3], D_MODEL, D_MODEL),
            "ln1": (jnp.ones((D_MODEL,), jnp.float32), jnp.zeros((D_MODEL,), jnp.float32)),
            "w1": dense(lk[4], D_MODEL, DIM_FF),
            "w2": dense(lk[5], DIM_FF, D_MODEL),
            "ln2": (jnp.ones((D_MODEL,), jnp.float32), jnp.zeros((D_MODEL,), jnp.float32)),
        })
    return params


def pack_params(params):
    """Pack all parameters into (weights, biases) slabs for 3 kernel inputs."""
    scale = 1.0 / np.sqrt(D_HEAD)

    def wpad(w):
        w = jnp.asarray(w, jnp.float32)
        return jnp.pad(w, ((0, 0), (0, W_SLAB_WIDTH - w.shape[1])))

    def brow(v):
        v = jnp.asarray(v, jnp.float32).reshape(1, -1)
        return jnp.pad(v, ((0, 0), (0, B_SLAB_WIDTH - v.shape[1])))

    w_rows, b_rows = [], []

    w_emb, b_emb = params["emb"]
    w_rows.append(wpad(w_emb))
    b_rows.append(brow(b_emb))

    for layer in params["layers"]:
        wq, bq = layer["wq"]; wk, bk = layer["wk"]; wv, bv = layer["wv"]
        wo, bo = layer["wo"]
        g1, be1 = layer["ln1"]; w1, b1 = layer["w1"]; w2, b2 = layer["w2"]
        g2, be2 = layer["ln2"]
        # Fused QKV weight/bias with 1/sqrt(d_head) folded into the Q part.
        w_qkv = jnp.concatenate([wq * scale, wk, wv], axis=1)        # (64, 192)
        b_qkv = jnp.concatenate([bq * scale, bk, bv], axis=0)        # (192,)
        w_rows += [wpad(w_qkv), wpad(wo), wpad(w1), wpad(w2)]
        b_rows += [brow(b_qkv), brow(bo), brow(g1), brow(be1),
                   brow(b1), brow(b2), brow(g2), brow(be2)]

    w_fc, b_fc = params["fc"]
    w_rows.append(wpad(w_fc))                                        # (64, 1) padded
    b_rows.append(brow(b_fc))

    w_slab = jnp.concatenate(w_rows, axis=0)
    b_slab = jnp.concatenate(b_rows, axis=0)
    assert w_slab.shape == (TOTAL_W_ROWS, W_SLAB_WIDTH)
    assert b_slab.shape == (TOTAL_B_ROWS, B_SLAB_WIDTH)
    return w_slab, b_slab


def transformer_binary_classifier(x, w_slab, b_slab):
    return pl.pallas_call(
        _transformer_kernel,
        out_shape=jax.ShapeDtypeStruct((x.shape[0], 1), jnp.float32),
        in_specs=[pl.BlockSpec(memory_space=pltpu.MemorySpace.VMEM)] * 3,
        out_specs=pl.BlockSpec(memory_space=pltpu.MemorySpace.VMEM),
    )(x, w_slab, b_slab)


# ---------------------------------------------------------------------------
# Pure-JAX reference of the original PyTorch forward (eval mode) for checking.
# ---------------------------------------------------------------------------
def _reference_forward(x, params):
    w_emb, b_emb = params["emb"]
    h = x @ w_emb + b_emb
    scale = 1.0 / np.sqrt(D_HEAD)
    for layer in params["layers"]:
        wq, bq = layer["wq"]; wk, bk = layer["wk"]; wv, bv = layer["wv"]
        wo, bo = layer["wo"]
        g1, be1 = layer["ln1"]; w1, b1 = layer["w1"]; w2, b2 = layer["w2"]
        g2, be2 = layer["ln2"]
        q = h @ wq + bq; k = h @ wk + bk; v = h @ wv + bv
        heads = []
        for hd in range(NUM_HEADS):
            sl = slice(hd * D_HEAD, (hd + 1) * D_HEAD)
            s = (q[:, sl] * scale) @ k[:, sl].T
            heads.append(jax.nn.softmax(s, axis=-1) @ v[:, sl])
        attn = jnp.concatenate(heads, axis=-1) @ wo + bo
        h = h + attn
        mu = h.mean(-1, keepdims=True); var = ((h - mu) ** 2).mean(-1, keepdims=True)
        h = (h - mu) / jnp.sqrt(var + LN_EPS) * g1 + be1
        ff = jnp.maximum(h @ w1 + b1, 0.0) @ w2 + b2
        h = h + ff
        mu = h.mean(-1, keepdims=True); var = ((h - mu) ** 2).mean(-1, keepdims=True)
        h = (h - mu) / jnp.sqrt(var + LN_EPS) * g2 + be2
    w_fc, b_fc = params["fc"]
    return jax.nn.sigmoid(h @ w_fc + b_fc)


if __name__ == "__main__":
    key = jax.random.PRNGKey(0)
    kx, kp = jax.random.split(key)

    batch = 8
    x = jax.random.normal(kx, (batch, INPUT_DIM), jnp.float32)
    params = init_params(kp)
    w_slab, b_slab = pack_params(params)

    # Dropout layers are identity in eval mode (eval-mode forward implemented).
    out = transformer_binary_classifier(x, w_slab, b_slab)
    out = jax.block_until_ready(out)

    ref = _reference_forward(x, params)

    assert out.shape == (batch, 1)
    assert bool(jnp.all((out >= 0.0) & (out <= 1.0)))
    assert bool(jnp.allclose(out, ref, atol=2e-2, rtol=2e-2))
    print("KERNEL_OK")
</pallas_src>

<mosaic_0001>
module attributes {stable_mosaic.version = 11 : i64} {
  func.func @_transformer_kernel(%arg0: memref<8x16xf32, #tpu.memory_space<vmem>>, %arg1: memref<720x192xf32, #tpu.memory_space<vmem>>, %arg2: memref<18x192xf32, #tpu.memory_space<vmem>>, %arg3: memref<8x1xf32, #tpu.memory_space<vmem>>) attributes {dimension_semantics = [], scalar_prefetch = 0 : i64, scratch_operands = 0 : i64, tpu.core_type = #tpu.core_type<tc>} {
    %c0 = arith.constant 0 : index
    %c0_0 = arith.constant 0 : index
    %0 = vector.load %arg0[%c0, %c0_0] : memref<8x16xf32, #tpu.memory_space<vmem>>, vector<8x16xf32>
    %c0_1 = arith.constant 0 : index
    %c0_2 = arith.constant 0 : index
    %1 = vector.load %arg1[%c0_1, %c0_2] : memref<720x192xf32, #tpu.memory_space<vmem>>, vector<16x64xf32>
    %cst = arith.constant dense<0.000000e+00> : vector<8x64xf32>
    %2 = tpu.matmul %0, %1, %cst {dimension_numbers = #tpu.dot_dimension_numbers<[1], [0], [0], [1], [0, 0, 1, 1], [], []>} : vector<8x16xf32>, vector<16x64xf32>, vector<8x64xf32> -> vector<8x64xf32>
    %c0_3 = arith.constant 0 : index
    %c0_4 = arith.constant 0 : index
    %3 = vector.load %arg2[%c0_3, %c0_4] : memref<18x192xf32, #tpu.memory_space<vmem>>, vector<1x64xf32>
    %4 = vector.broadcast %3 : vector<1x64xf32> to vector<8x64xf32>
    %5 = arith.addf %2, %4 : vector<8x64xf32>
    %c16 = arith.constant 16 : index
    %c0_5 = arith.constant 0 : index
    %6 = vector.load %arg1[%c16, %c0_5] : memref<720x192xf32, #tpu.memory_space<vmem>>, vector<64x192xf32>
    %c144 = arith.constant 144 : index
    %c0_6 = arith.constant 0 : index
    %7 = vector.load %arg1[%c144, %c0_6] : memref<720x192xf32, #tpu.memory_space<vmem>>, vector<64x128xf32>
    %c208 = arith.constant 208 : index
    %c0_7 = arith.constant 0 : index
    %8 = vector.load %arg1[%c208, %c0_7] : memref<720x192xf32, #tpu.memory_space<vmem>>, vector<128x64xf32>
    %c1 = arith.constant 1 : index
    %c0_8 = arith.constant 0 : index
    %9 = vector.load %arg2[%c1, %c0_8] : memref<18x192xf32, #tpu.memory_space<vmem>>, vector<1x192xf32>
    %c2 = arith.constant 2 : index
    %c0_9 = arith.constant 0 : index
    %10 = vector.load %arg2[%c2, %c0_9] : memref<18x192xf32, #tpu.memory_space<vmem>>, vector<1x64xf32>
    %c3 = arith.constant 3 : index
    %c0_10 = arith.constant 0 : index
    %11 = vector.load %arg2[%c3, %c0_10] : memref<18x192xf32, #tpu.memory_space<vmem>>, vector<1x64xf32>
    %c4 = arith.constant 4 : index
    %c0_11 = arith.constant 0 : index
    %12 = vector.load %arg2[%c4, %c0_11] : memref<18x192xf32, #tpu.memory_space<vmem>>, vector<1x64xf32>
    %c5 = arith.constant 5 : index
    %c0_12 = arith.constant 0 : index
    %13 = vector.load %arg2[%c5, %c0_12] : memref<18x192xf32, #tpu.memory_space<vmem>>, vector<1x128xf32>
    %c6 = arith.constant 6 : index
    %c0_13 = arith.constant 0 : index
    %14 = vector.load %arg2[%c6, %c0_13] : memref<18x192xf32, #tpu.memory_space<vmem>>, vector<1x64xf32>
    %c7 = arith.constant 7 : index
    %c0_14 = arith.constant 0 : index
    %15 = vector.load %arg2[%c7, %c0_14] : memref<18x192xf32, #tpu.memory_space<vmem>>, vector<1x64xf32>
    %c8 = arith.constant 8 : index
    %c0_15 = arith.constant 0 : index
    %16 = vector.load %arg2[%c8, %c0_15] : memref<18x192xf32, #tpu.memory_space<vmem>>, vector<1x64xf32>
    %cst_16 = arith.constant dense<0.000000e+00> : vector<8x192xf32>
    %17 = tpu.matmul %5, %6, %cst_16 {dimension_numbers = #tpu.dot_dimension_numbers<[1], [0], [0], [1], [0, 0, 1, 1], [], []>} : vector<8x64xf32>, vector<64x192xf32>, vector<8x192xf32> -> vector<8x192xf32>
    %18 = vector.broadcast %9 : vector<1x192xf32> to vector<8x192xf32>
    %19 = arith.addf %17, %18 : vector<8x192xf32>
    %20 = vector.extract_strided_slice %19 {offsets = [0, 0], sizes = [8, 16], strides = [1, 1]} : vector<8x192xf32> to vector<8x16xf32>
    %21 = vector.extract_strided_slice %19 {offsets = [0, 16], sizes = [8, 16], strides = [1, 1]} : vector<8x192xf32> to vector<8x16xf32>
    %22 = vector.extract_strided_slice %19 {offsets = [0, 32], sizes = [8, 16], strides = [1, 1]} : vector<8x192xf32> to vector<8x16xf32>
    %23 = vector.extract_strided_slice %19 {offsets = [0, 48], sizes = [8, 16], strides = [1, 1]} : vector<8x192xf32> to vector<8x16xf32>
    %24 = vector.shape_cast %20 : vector<8x16xf32> to vector<1x8x16xf32>
    %25 = vector.shape_cast %21 : vector<8x16xf32> to vector<1x8x16xf32>
    %26 = vector.shape_cast %22 : vector<8x16xf32> to vector<1x8x16xf32>
    %27 = vector.shape_cast %23 : vector<8x16xf32> to vector<1x8x16xf32>
    %28 = tpu.concatenate %24, %25, %26, %27 in 0 : vector<1x8x16xf32>, vector<1x8x16xf32>, vector<1x8x16xf32>, vector<1x8x16xf32> -> vector<4x8x16xf32>
    %29 = vector.extract_strided_slice %19 {offsets = [0, 64], sizes = [8, 16], strides = [1, 1]} : vector<8x192xf32> to vector<8x16xf32>
    %30 = vector.extract_strided_slice %19 {offsets = [0, 80], sizes = [8, 16], strides = [1, 1]} : vector<8x192xf32> to vector<8x16xf32>
    %31 = vector.extract_strided_slice %19 {offsets = [0, 96], sizes = [8, 16], strides = [1, 1]} : vector<8x192xf32> to vector<8x16xf32>
    %32 = vector.extract_strided_slice %19 {offsets = [0, 112], sizes = [8, 16], strides = [1, 1]} : vector<8x192xf32> to vector<8x16xf32>
    %33 = vector.shape_cast %29 : vector<8x16xf32> to vector<1x8x16xf32>
    %34 = vector.shape_cast %30 : vector<8x16xf32> to vector<1x8x16xf32>
    %35 = vector.shape_cast %31 : vector<8x16xf32> to vector<1x8x16xf32>
    %36 = vector.shape_cast %32 : vector<8x16xf32> to vector<1x8x16xf32>
    %37 = tpu.concatenate %33, %34, %35, %36 in 0 : vector<1x8x16xf32>, vector<1x8x16xf32>, vector<1x8x16xf32>, vector<1x8x16xf32> -> vector<4x8x16xf32>
    %38 = vector.extract_strided_slice %19 {offsets = [0, 128], sizes = [8, 16], strides = [1, 1]} : vector<8x192xf32> to vector<8x16xf32>
    %39 = vector.extract_strided_slice %19 {offsets = [0, 144], sizes = [8, 16], strides = [1, 1]} : vector<8x192xf32> to vector<8x16xf32>
    %40 = vector.extract_strided_slice %19 {offsets = [0, 160], sizes = [8, 16], strides = [1, 1]} : vector<8x192xf32> to vector<8x16xf32>
    %41 = vector.extract_strided_slice %19 {offsets = [0, 176], sizes = [8, 16], strides = [1, 1]} : vector<8x192xf32> to vector<8x16xf32>
    %42 = vector.shape_cast %38 : vector<8x16xf32> to vector<1x8x16xf32>
    %43 = vector.shape_cast %39 : vector<8x16xf32> to vector<1x8x16xf32>
    %44 = vector.shape_cast %40 : vector<8x16xf32> to vector<1x8x16xf32>
    %45 = vector.shape_cast %41 : vector<8x16xf32> to vector<1x8x16xf32>
    %46 = tpu.concatenate %42, %43, %44, %45 in 0 : vector<1x8x16xf32>, vector<1x8x16xf32>, vector<1x8x16xf32>, vector<1x8x16xf32> -> vector<4x8x16xf32>
    "tpu.trace_start"() <{level = 10 : i32, message = "hbd,hkd->hbk"}> : () -> ()
    %cst_17 = arith.constant dense<0.000000e+00> : vector<4x8x8xf32>
    %47 = tpu.matmul %28, %37, %cst_17 {dimension_numbers = #tpu.dot_dimension_numbers<[2], [2], [1], [1], [0, 0, 0, 1, 1, 1], [0], [0]>} : vector<4x8x16xf32>, vector<4x8x16xf32>, vector<4x8x8xf32> -> vector<4x8x8xf32>
    "tpu.trace_stop"() : () -> ()
    %cst_18 = arith.constant dense<0xFF800000> : vector<4x8xf32>
    %48 = vector.multi_reduction <maximumf>, %47, %cst_18 [2] : vector<4x8x8xf32> to vector<4x8xf32>
    %49 = vector.shape_cast %48 : vector<4x8xf32> to vector<4x8x1xf32>
    %50 = vector.broadcast %49 : vector<4x8x1xf32> to vector<4x8x8xf32>
    %51 = arith.subf %47, %50 : vector<4x8x8xf32>
    %52 = math.exp %51 : vector<4x8x8xf32>
    %cst_19 = arith.constant dense<0.000000e+00> : vector<4x8xf32>
    %53 = vector.multi_reduction <add>, %52, %cst_19 [2] : vector<4x8x8xf32> to vector<4x8xf32>
    %54 = vector.shape_cast %53 : vector<4x8xf32> to vector<4x8x1xf32>
    %55 = tpu.reciprocal %54 {approx = true} : vector<4x8x1xf32> -> vector<4x8x1xf32>
    %56 = vector.broadcast %55 : vector<4x8x1xf32> to vector<4x8x8xf32>
    %57 = arith.mulf %52, %56 : vector<4x8x8xf32>
    "tpu.trace_start"() <{level = 10 : i32, message = "hbk,hkd->hbd"}> : () -> ()
    %cst_20 = arith.constant dense<0.000000e+00> : vector<4x8x16xf32>
    %58 = tpu.matmul %57, %46, %cst_20 {dimension_numbers = #tpu.dot_dimension_numbers<[2], [1], [1], [2], [0, 0, 0, 1, 1, 2], [0], [0]>} : vector<4x8x8xf32>, vector<4x8x16xf32>, vector<4x8x16xf32> -> vector<4x8x16xf32>
    "tpu.trace_stop"() : () -> ()
    %c80 = arith.constant 80 : index
    %c0_21 = arith.constant 0 : index
    %59 = vector.load %arg1[%c80, %c0_21] : memref<720x192xf32, #tpu.memory_space<vmem>>, vector<16x64xf32>
    %60 = vector.extract_strided_slice %58 {offsets = [0, 0, 0], sizes = [1, 8, 16], strides = [1, 1, 1]} : vector<4x8x16xf32> to vector<1x8x16xf32>
    %61 = vector.shape_cast %60 : vector<1x8x16xf32> to vector<8x16xf32>
    %cst_22 = arith.constant dense<0.000000e+00> : vector<8x64xf32>
    %62 = tpu.matmul %61, %59, %cst_22 {dimension_numbers = #tpu.dot_dimension_numbers<[1], [0], [0], [1], [0, 0, 1, 1], [], []>} : vector<8x16xf32>, vector<16x64xf32>, vector<8x64xf32> -> vector<8x64xf32>
    %63 = vector.broadcast %10 : vector<1x64xf32> to vector<8x64xf32>
    %64 = arith.addf %63, %62 : vector<8x64xf32>
    %c96 = arith.constant 96 : index
    %c0_23 = arith.constant 0 : index
    %65 = vector.load %arg1[%c96, %c0_23] : memref<720x192xf32, #tpu.memory_space<vmem>>, vector<16x64xf32>
    %66 = vector.extract_strided_slice %58 {offsets = [1, 0, 0], sizes = [1, 8, 16], strides = [1, 1, 1]} : vector<4x8x16xf32> to vector<1x8x16xf32>
    %67 = vector.shape_cast %66 : vector<1x8x16xf32> to vector<8x16xf32>
    %cst_24 = arith.constant dense<0.000000e+00> : vector<8x64xf32>
    %68 = tpu.matmul %67, %65, %cst_24 {dimension_numbers = #tpu.dot_dimension_numbers<[1], [0], [0], [1], [0, 0, 1, 1], [], []>} : vector<8x16xf32>, vector<16x64xf32>, vector<8x64xf32> -> vector<8x64xf32>
    %69 = arith.addf %64, %68 : vector<8x64xf32>
    %c112 = arith.constant 112 : index
    %c0_25 = arith.constant 0 : index
    %70 = vector.load %arg1[%c112, %c0_25] : memref<720x192xf32, #tpu.memory_space<vmem>>, vector<16x64xf32>
    %71 = vector.extract_strided_slice %58 {offsets = [2, 0, 0], sizes = [1, 8, 16], strides = [1, 1, 1]} : vector<4x8x16xf32> to vector<1x8x16xf32>
    %72 = vector.shape_cast %71 : vector<1x8x16xf32> to vector<8x16xf32>
    %cst_26 = arith.constant dense<0.000000e+00> : vector<8x64xf32>
    %73 = tpu.matmul %72, %70, %cst_26 {dimension_numbers = #tpu.dot_dimension_numbers<[1], [0], [0], [1], [0, 0, 1, 1], [], []>} : vector<8x16xf32>, vector<16x64xf32>, vector<8x64xf32> -> vector<8x64xf32>
    %74 = arith.addf %69, %73 : vector<8x64xf32>
    %c128 = arith.constant 128 : index
    %c0_27 = arith.constant 0 : index
    %75 = vector.load %arg1[%c128, %c0_27] : memref<720x192xf32, #tpu.memory_space<vmem>>, vector<16x64xf32>
    %76 = vector.extract_strided_slice %58 {offsets = [3, 0, 0], sizes = [1, 8, 16], strides = [1, 1, 1]} : vector<4x8x16xf32> to vector<1x8x16xf32>
    %77 = vector.shape_cast %76 : vector<1x8x16xf32> to vector<8x16xf32>
    %cst_28 = arith.constant dense<0.000000e+00> : vector<8x64xf32>
    %78 = tpu.matmul %77, %75, %cst_28 {dimension_numbers = #tpu.dot_dimension_numbers<[1], [0], [0], [1], [0, 0, 1, 1], [], []>} : vector<8x16xf32>, vector<16x64xf32>, vector<8x64xf32> -> vector<8x64xf32>
    %79 = arith.addf %74, %78 : vector<8x64xf32>
    %80 = arith.addf %5, %79 : vector<8x64xf32>
    %cst_29 = arith.constant dense<0.000000e+00> : vector<8xf32>
    %81 = vector.multi_reduction <add>, %80, %cst_29 [1] : vector<8x64xf32> to vector<8xf32>
    %82 = vector.shape_cast %81 : vector<8xf32> to vector<8x1xf32>
    %cst_30 = arith.constant 6.400000e+01 : f32
    %83 = vector.broadcast %cst_30 : f32 to vector<8x1xf32>
    %84 = arith.divf %82, %83 : vector<8x1xf32>
    %85 = vector.broadcast %84 : vector<8x1xf32> to vector<8x64xf32>
    %86 = arith.subf %80, %85 : vector<8x64xf32>
    %87 = arith.mulf %86, %86 : vector<8x64xf32>
    %cst_31 = arith.constant dense<0.000000e+00> : vector<8xf32>
    %88 = vector.multi_reduction <add>, %87, %cst_31 [1] : vector<8x64xf32> to vector<8xf32>
    %89 = vector.shape_cast %88 : vector<8xf32> to vector<8x1xf32>
    %cst_32 = arith.constant 6.400000e+01 : f32
    %90 = vector.broadcast %cst_32 : f32 to vector<8x1xf32>
    %91 = arith.divf %89, %90 : vector<8x1xf32>
    %92 = vector.broadcast %84 : vector<8x1xf32> to vector<8x64xf32>
    %93 = arith.subf %80, %92 : vector<8x64xf32>
    %cst_33 = arith.constant 9.99999974E-6 : f32
    %94 = vector.broadcast %cst_33 : f32 to vector<8x1xf32>
    %95 = arith.addf %91, %94 : vector<8x1xf32>
    %96 = math.rsqrt %95 : vector<8x1xf32>
    %97 = vector.broadcast %96 : vector<8x1xf32> to vector<8x64xf32>
    %98 = arith.mulf %93, %97 : vector<8x64xf32>
    %99 = vector.broadcast %11 : vector<1x64xf32> to vector<8x64xf32>
    %100 = arith.mulf %98, %99 : vector<8x64xf32>
    %101 = vector.broadcast %12 : vector<1x64xf32> to vector<8x64xf32>
    %102 = arith.addf %100, %101 : vector<8x64xf32>
    %cst_34 = arith.constant dense<0.000000e+00> : vector<8x128xf32>
    %103 = tpu.matmul %102, %7, %cst_34 {dimension_numbers = #tpu.dot_dimension_numbers<[1], [0], [0], [1], [0, 0, 1, 1], [], []>} : vector<8x64xf32>, vector<64x128xf32>, vector<8x128xf32> -> vector<8x128xf32>
    %104 = vector.broadcast %13 : vector<1x128xf32> to vector<8x128xf32>
    %105 = arith.addf %103, %104 : vector<8x128xf32>
    %cst_35 = arith.constant 0.000000e+00 : f32
    %106 = vector.broadcast %cst_35 : f32 to vector<8x128xf32>
    %107 = arith.maximumf %105, %106 : vector<8x128xf32>
    %cst_36 = arith.constant dense<0.000000e+00> : vector<8x64xf32>
    %108 = tpu.matmul %107, %8, %cst_36 {dimension_numbers = #tpu.dot_dimension_numbers<[1], [0], [0], [1], [0, 0, 1, 1], [], []>} : vector<8x128xf32>, vector<128x64xf32>, vector<8x64xf32> -> vector<8x64xf32>
    %109 = vector.broadcast %14 : vector<1x64xf32> to vector<8x64xf32>
    %110 = arith.addf %108, %109 : vector<8x64xf32>
    %111 = arith.addf %102, %110 : vector<8x64xf32>
    %cst_37 = arith.constant dense<0.000000e+00> : vector<8xf32>
    %112 = vector.multi_reduction <add>, %111, %cst_37 [1] : vector<8x64xf32> to vector<8xf32>
    %113 = vector.shape_cast %112 : vector<8xf32> to vector<8x1xf32>
    %cst_38 = arith.constant 6.400000e+01 : f32
    %114 = vector.broadcast %cst_38 : f32 to vector<8x1xf32>
    %115 = arith.divf %113, %114 : vector<8x1xf32>
    %116 = vector.broadcast %115 : vector<8x1xf32> to vector<8x64xf32>
    %117 = arith.subf %111, %116 : vector<8x64xf32>
    %118 = arith.mulf %117, %117 : vector<8x64xf32>
    %cst_39 = arith.constant dense<0.000000e+00> : vector<8xf32>
    %119 = vector.multi_reduction <add>, %118, %cst_39 [1] : vector<8x64xf32> to vector<8xf32>
    %120 = vector.shape_cast %119 : vector<8xf32> to vector<8x1xf32>
    %cst_40 = arith.constant 6.400000e+01 : f32
    %121 = vector.broadcast %cst_40 : f32 to vector<8x1xf32>
    %122 = arith.divf %120, %121 : vector<8x1xf32>
    %123 = vector.broadcast %115 : vector<8x1xf32> to vector<8x64xf32>
    %124 = arith.subf %111, %123 : vector<8x64xf32>
    %cst_41 = arith.constant 9.99999974E-6 : f32
    %125 = vector.broadcast %cst_41 : f32 to vector<8x1xf32>
    %126 = arith.addf %122, %125 : vector<8x1xf32>
    %127 = math.rsqrt %126 : vector<8x1xf32>
    %128 = vector.broadcast %127 : vector<8x1xf32> to vector<8x64xf32>
    %129 = arith.mulf %124, %128 : vector<8x64xf32>
    %130 = vector.broadcast %15 : vector<1x64xf32> to vector<8x64xf32>
    %131 = arith.mulf %129, %130 : vector<8x64xf32>
    %132 = vector.broadcast %16 : vector<1x64xf32> to vector<8x64xf32>
    %133 = arith.addf %131, %132 : vector<8x64xf32>
    %c336 = arith.constant 336 : index
    %c0_42 = arith.constant 0 : index
    %134 = vector.load %arg1[%c336, %c0_42] : memref<720x192xf32, #tpu.memory_space<vmem>>, vector<64x192xf32>
    %c464 = arith.constant 464 : index
    %c0_43 = arith.constant 0 : index
    %135 = vector.load %arg1[%c464, %c0_43] : memref<720x192xf32, #tpu.memory_space<vmem>>, vector<64x128xf32>
    %c528 = arith.constant 528 : index
    %c0_44 = arith.constant 0 : index
    %136 = vector.load %arg1[%c528, %c0_44] : memref<720x192xf32, #tpu.memory_space<vmem>>, vector<128x64xf32>
    %c9 = arith.constant 9 : index
    %c0_45 = arith.constant 0 : index
    %137 = vector.load %arg2[%c9, %c0_45] : memref<18x192xf32, #tpu.memory_space<vmem>>, vector<1x192xf32>
    %c10 = arith.constant 10 : index
    %c0_46 = arith.constant 0 : index
    %138 = vector.load %arg2[%c10, %c0_46] : memref<18x192xf32, #tpu.memory_space<vmem>>, vector<1x64xf32>
    %c11 = arith.constant 11 : index
    %c0_47 = arith.constant 0 : index
    %139 = vector.load %arg2[%c11, %c0_47] : memref<18x192xf32, #tpu.memory_space<vmem>>, vector<1x64xf32>
    %c12 = arith.constant 12 : index
    %c0_48 = arith.constant 0 : index
    %140 = vector.load %arg2[%c12, %c0_48] : memref<18x192xf32, #tpu.memory_space<vmem>>, vector<1x64xf32>
    %c13 = arith.constant 13 : index
    %c0_49 = arith.constant 0 : index
    %141 = vector.load %arg2[%c13, %c0_49] : memref<18x192xf32, #tpu.memory_space<vmem>>, vector<1x128xf32>
    %c14 = arith.constant 14 : index
    %c0_50 = arith.constant 0 : index
    %142 = vector.load %arg2[%c14, %c0_50] : memref<18x192xf32, #tpu.memory_space<vmem>>, vector<1x64xf32>
    %c15 = arith.constant 15 : index
    %c0_51 = arith.constant 0 : index
    %143 = vector.load %arg2[%c15, %c0_51] : memref<18x192xf32, #tpu.memory_space<vmem>>, vector<1x64xf32>
    %c16_52 = arith.constant 16 : index
    %c0_53 = arith.constant 0 : index
    %144 = vector.load %arg2[%c16_52, %c0_53] : memref<18x192xf32, #tpu.memory_space<vmem>>, vector<1x64xf32>
    %cst_54 = arith.constant dense<0.000000e+00> : vector<8x192xf32>
    %145 = tpu.matmul %133, %134, %cst_54 {dimension_numbers = #tpu.dot_dimension_numbers<[1], [0], [0], [1], [0, 0, 1, 1], [], []>} : vector<8x64xf32>, vector<64x192xf32>, vector<8x192xf32> -> vector<8x192xf32>
    %146 = vector.broadcast %137 : vector<1x192xf32> to vector<8x192xf32>
    %147 = arith.addf %145, %146 : vector<8x192xf32>
    %148 = vector.extract_strided_slice %147 {offsets = [0, 0], sizes = [8, 16], strides = [1, 1]} : vector<8x192xf32> to vector<8x16xf32>
    %149 = vector.extract_strided_slice %147 {offsets = [0, 16], sizes = [8, 16], strides = [1, 1]} : vector<8x192xf32> to vector<8x16xf32>
    %150 = vector.extract_strided_slice %147 {offsets = [0, 32], sizes = [8, 16], strides = [1, 1]} : vector<8x192xf32> to vector<8x16xf32>
    %151 = vector.extract_strided_slice %147 {offsets = [0, 48], sizes = [8, 16], strides = [1, 1]} : vector<8x192xf32> to vector<8x16xf32>
    %152 = vector.shape_cast %148 : vector<8x16xf32> to vector<1x8x16xf32>
    %153 = vector.shape_cast %149 : vector<8x16xf32> to vector<1x8x16xf32>
    %154 = vector.shape_cast %150 : vector<8x16xf32> to vector<1x8x16xf32>
    %155 = vector.shape_cast %151 : vector<8x16xf32> to vector<1x8x16xf32>
    %156 = tpu.concatenate %152, %153, %154, %155 in 0 : vector<1x8x16xf32>, vector<1x8x16xf32>, vector<1x8x16xf32>, vector<1x8x16xf32> -> vector<4x8x16xf32>
    %157 = vector.extract_strided_slice %147 {offsets = [0, 64], sizes = [8, 16], strides = [1, 1]} : vector<8x192xf32> to vector<8x16xf32>
    %158 = vector.extract_strided_slice %147 {offsets = [0, 80], sizes = [8, 16], strides = [1, 1]} : vector<8x192xf32> to vector<8x16xf32>
    %159 = vector.extract_strided_slice %147 {offsets = [0, 96], sizes = [8, 16], strides = [1, 1]} : vector<8x192xf32> to vector<8x16xf32>
    %160 = vector.extract_strided_slice %147 {offsets = [0, 112], sizes = [8, 16], strides = [1, 1]} : vector<8x192xf32> to vector<8x16xf32>
    %161 = vector.shape_cast %157 : vector<8x16xf32> to vector<1x8x16xf32>
    %162 = vector.shape_cast %158 : vector<8x16xf32> to vector<1x8x16xf32>
    %163 = vector.shape_cast %159 : vector<8x16xf32> to vector<1x8x16xf32>
    %164 = vector.shape_cast %160 : vector<8x16xf32> to vector<1x8x16xf32>
    %165 = tpu.concatenate %161, %162, %163, %164 in 0 : vector<1x8x16xf32>, vector<1x8x16xf32>, vector<1x8x16xf32>, vector<1x8x16xf32> -> vector<4x8x16xf32>
    %166 = vector.extract_strided_slice %147 {offsets = [0, 128], sizes = [8, 16], strides = [1, 1]} : vector<8x192xf32> to vector<8x16xf32>
    %167 = vector.extract_strided_slice %147 {offsets = [0, 144], sizes = [8, 16], strides = [1, 1]} : vector<8x192xf32> to vector<8x16xf32>
    %168 = vector.extract_strided_slice %147 {offsets = [0, 160], sizes = [8, 16], strides = [1, 1]} : vector<8x192xf32> to vector<8x16xf32>
    %169 = vector.extract_strided_slice %147 {offsets = [0, 176], sizes = [8, 16], strides = [1, 1]} : vector<8x192xf32> to vector<8x16xf32>
    %170 = vector.shape_cast %166 : vector<8x16xf32> to vector<1x8x16xf32>
    %171 = vector.shape_cast %167 : vector<8x16xf32> to vector<1x8x16xf32>
    %172 = vector.shape_cast %168 : vector<8x16xf32> to vector<1x8x16xf32>
    %173 = vector.shape_cast %169 : vector<8x16xf32> to vector<1x8x16xf32>
    %174 = tpu.concatenate %170, %171, %172, %173 in 0 : vector<1x8x16xf32>, vector<1x8x16xf32>, vector<1x8x16xf32>, vector<1x8x16xf32> -> vector<4x8x16xf32>
    "tpu.trace_start"() <{level = 10 : i32, message = "hbd,hkd->hbk"}> : () -> ()
    %cst_55 = arith.constant dense<0.000000e+00> : vector<4x8x8xf32>
    %175 = tpu.matmul %156, %165, %cst_55 {dimension_numbers = #tpu.dot_dimension_numbers<[2], [2], [1], [1], [0, 0, 0, 1, 1, 1], [0], [0]>} : vector<4x8x16xf32>, vector<4x8x16xf32>, vector<4x8x8xf32> -> vector<4x8x8xf32>
    "tpu.trace_stop"() : () -> ()
    %cst_56 = arith.constant dense<0xFF800000> : vector<4x8xf32>
    %176 = vector.multi_reduction <maximumf>, %175, %cst_56 [2] : vector<4x8x8xf32> to vector<4x8xf32>
    %177 = vector.shape_cast %176 : vector<4x8xf32> to vector<4x8x1xf32>
    %178 = vector.broadcast %177 : vector<4x8x1xf32> to vector<4x8x8xf32>
    %179 = arith.subf %175, %178 : vector<4x8x8xf32>
    %180 = math.exp %179 : vector<4x8x8xf32>
    %cst_57 = arith.constant dense<0.000000e+00> : vector<4x8xf32>
    %181 = vector.multi_reduction <add>, %180, %cst_57 [2] : vector<4x8x8xf32> to vector<4x8xf32>
    %182 = vector.shape_cast %181 : vector<4x8xf32> to vector<4x8x1xf32>
    %183 = tpu.reciprocal %182 {approx = true} : vector<4x8x1xf32> -> vector<4x8x1xf32>
    %184 = vector.broadcast %183 : vector<4x8x1xf32> to vector<4x8x8xf32>
    %185 = arith.mulf %180, %184 : vector<4x8x8xf32>
    "tpu.trace_start"() <{level = 10 : i32, message = "hbk,hkd->hbd"}> : () -> ()
    %cst_58 = arith.constant dense<0.000000e+00> : vector<4x8x16xf32>
    %186 = tpu.matmul %185, %174, %cst_58 {dimension_numbers = #tpu.dot_dimension_numbers<[2], [1], [1], [2], [0, 0, 0, 1, 1, 2], [0], [0]>} : vector<4x8x8xf32>, vector<4x8x16xf32>, vector<4x8x16xf32> -> vector<4x8x16xf32>
    "tpu.trace_stop"() : () -> ()
    %c400 = arith.constant 400 : index
    %c0_59 = arith.constant 0 : index
    %187 = vector.load %arg1[%c400, %c0_59] : memref<720x192xf32, #tpu.memory_space<vmem>>, vector<16x64xf32>
    %188 = vector.extract_strided_slice %186 {offsets = [0, 0, 0], sizes = [1, 8, 16], strides = [1, 1, 1]} : vector<4x8x16xf32> to vector<1x8x16xf32>
    %189 = vector.shape_cast %188 : vector<1x8x16xf32> to vector<8x16xf32>
    %cst_60 = arith.constant dense<0.000000e+00> : vector<8x64xf32>
    %190 = tpu.matmul %189, %187, %cst_60 {dimension_numbers = #tpu.dot_dimension_numbers<[1], [0], [0], [1], [0, 0, 1, 1], [], []>} : vector<8x16xf32>, vector<16x64xf32>, vector<8x64xf32> -> vector<8x64xf32>
    %191 = vector.broadcast %138 : vector<1x64xf32> to vector<8x64xf32>
    %192 = arith.addf %191, %190 : vector<8x64xf32>
    %c416 = arith.constant 416 : index
    %c0_61 = arith.constant 0 : index
    %193 = vector.load %arg1[%c416, %c0_61] : memref<720x192xf32, #tpu.memory_space<vmem>>, vector<16x64xf32>
    %194 = vector.extract_strided_slice %186 {offsets = [1, 0, 0], sizes = [1, 8, 16], strides = [1, 1, 1]} : vector<4x8x16xf32> to vector<1x8x16xf32>
    %195 = vector.shape_cast %194 : vector<1x8x16xf32> to vector<8x16xf32>
    %cst_62 = arith.constant dense<0.000000e+00> : vector<8x64xf32>
    %196 = tpu.matmul %195, %193, %cst_62 {dimension_numbers = #tpu.dot_dimension_numbers<[1], [0], [0], [1], [0, 0, 1, 1], [], []>} : vector<8x16xf32>, vector<16x64xf32>, vector<8x64xf32> -> vector<8x64xf32>
    %197 = arith.addf %192, %196 : vector<8x64xf32>
    %c432 = arith.constant 432 : index
    %c0_63 = arith.constant 0 : index
    %198 = vector.load %arg1[%c432, %c0_63] : memref<720x192xf32, #tpu.memory_space<vmem>>, vector<16x64xf32>
    %199 = vector.extract_strided_slice %186 {offsets = [2, 0, 0], sizes = [1, 8, 16], strides = [1, 1, 1]} : vector<4x8x16xf32> to vector<1x8x16xf32>
    %200 = vector.shape_cast %199 : vector<1x8x16xf32> to vector<8x16xf32>
    %cst_64 = arith.constant dense<0.000000e+00> : vector<8x64xf32>
    %201 = tpu.matmul %200, %198, %cst_64 {dimension_numbers = #tpu.dot_dimension_numbers<[1], [0], [0], [1], [0, 0, 1, 1], [], []>} : vector<8x16xf32>, vector<16x64xf32>, vector<8x64xf32> -> vector<8x64xf32>
    %202 = arith.addf %197, %201 : vector<8x64xf32>
    %c448 = arith.constant 448 : index
    %c0_65 = arith.constant 0 : index
    %203 = vector.load %arg1[%c448, %c0_65] : memref<720x192xf32, #tpu.memory_space<vmem>>, vector<16x64xf32>
    %204 = vector.extract_strided_slice %186 {offsets = [3, 0, 0], sizes = [1, 8, 16], strides = [1, 1, 1]} : vector<4x8x16xf32> to vector<1x8x16xf32>
    %205 = vector.shape_cast %204 : vector<1x8x16xf32> to vector<8x16xf32>
    %cst_66 = arith.constant dense<0.000000e+00> : vector<8x64xf32>
    %206 = tpu.matmul %205, %203, %cst_66 {dimension_numbers = #tpu.dot_dimension_numbers<[1], [0], [0], [1], [0, 0, 1, 1], [], []>} : vector<8x16xf32>, vector<16x64xf32>, vector<8x64xf32> -> vector<8x64xf32>
    %207 = arith.addf %202, %206 : vector<8x64xf32>
    %208 = arith.addf %133, %207 : vector<8x64xf32>
    %cst_67 = arith.constant dense<0.000000e+00> : vector<8xf32>
    %209 = vector.multi_reduction <add>, %208, %cst_67 [1] : vector<8x64xf32> to vector<8xf32>
    %210 = vector.shape_cast %209 : vector<8xf32> to vector<8x1xf32>
    %cst_68 = arith.constant 6.400000e+01 : f32
    %211 = vector.broadcast %cst_68 : f32 to vector<8x1xf32>
    %212 = arith.divf %210, %211 : vector<8x1xf32>
    %213 = vector.broadcast %212 : vector<8x1xf32> to vector<8x64xf32>
    %214 = arith.subf %208, %213 : vector<8x64xf32>
    %215 = arith.mulf %214, %214 : vector<8x64xf32>
    %cst_69 = arith.constant dense<0.000000e+00> : vector<8xf32>
    %216 = vector.multi_reduction <add>, %215, %cst_69 [1] : vector<8x64xf32> to vector<8xf32>
    %217 = vector.shape_cast %216 : vector<8xf32> to vector<8x1xf32>
    %cst_70 = arith.constant 6.400000e+01 : f32
    %218 = vector.broadcast %cst_70 : f32 to vector<8x1xf32>
    %219 = arith.divf %217, %218 : vector<8x1xf32>
    %220 = vector.broadcast %212 : vector<8x1xf32> to vector<8x64xf32>
    %221 = arith.subf %208, %220 : vector<8x64xf32>
    %cst_71 = arith.constant 9.99999974E-6 : f32
    %222 = vector.broadcast %cst_71 : f32 to vector<8x1xf32>
    %223 = arith.addf %219, %222 : vector<8x1xf32>
    %224 = math.rsqrt %223 : vector<8x1xf32>
    %225 = vector.broadcast %224 : vector<8x1xf32> to vector<8x64xf32>
    %226 = arith.mulf %221, %225 : vector<8x64xf32>
    %227 = vector.broadcast %139 : vector<1x64xf32> to vector<8x64xf32>
    %228 = arith.mulf %226, %227 : vector<8x64xf32>
    %229 = vector.broadcast %140 : vector<1x64xf32> to vector<8x64xf32>
    %230 = arith.addf %228, %229 : vector<8x64xf32>
    %cst_72 = arith.constant dense<0.000000e+00> : vector<8x128xf32>
    %231 = tpu.matmul %230, %135, %cst_72 {dimension_numbers = #tpu.dot_dimension_numbers<[1], [0], [0], [1], [0, 0, 1, 1], [], []>} : vector<8x64xf32>, vector<64x128xf32>, vector<8x128xf32> -> vector<8x128xf32>
    %232 = vector.broadcast %141 : vector<1x128xf32> to vector<8x128xf32>
    %233 = arith.addf %231, %232 : vector<8x128xf32>
    %cst_73 = arith.constant 0.000000e+00 : f32
    %234 = vector.broadcast %cst_73 : f32 to vector<8x128xf32>
    %235 = arith.maximumf %233, %234 : vector<8x128xf32>
    %cst_74 = arith.constant dense<0.000000e+00> : vector<8x64xf32>
    %236 = tpu.matmul %235, %136, %cst_74 {dimension_numbers = #tpu.dot_dimension_numbers<[1], [0], [0], [1], [0, 0, 1, 1], [], []>} : vector<8x128xf32>, vector<128x64xf32>, vector<8x64xf32> -> vector<8x64xf32>
    %237 = vector.broadcast %142 : vector<1x64xf32> to vector<8x64xf32>
    %238 = arith.addf %236, %237 : vector<8x64xf32>
    %239 = arith.addf %230, %238 : vector<8x64xf32>
    %cst_75 = arith.constant dense<0.000000e+00> : vector<8xf32>
    %240 = vector.multi_reduction <add>, %239, %cst_75 [1] : vector<8x64xf32> to vector<8xf32>
    %241 = vector.shape_cast %240 : vector<8xf32> to vector<8x1xf32>
    %cst_76 = arith.constant 6.400000e+01 : f32
    %242 = vector.broadcast %cst_76 : f32 to vector<8x1xf32>
    %243 = arith.divf %241, %242 : vector<8x1xf32>
    %244 = vector.broadcast %243 : vector<8x1xf32> to vector<8x64xf32>
    %245 = arith.subf %239, %244 : vector<8x64xf32>
    %246 = arith.mulf %245, %245 : vector<8x64xf32>
    %cst_77 = arith.constant dense<0.000000e+00> : vector<8xf32>
    %247 = vector.multi_reduction <add>, %246, %cst_77 [1] : vector<8x64xf32> to vector<8xf32>
    %248 = vector.shape_cast %247 : vector<8xf32> to vector<8x1xf32>
    %cst_78 = arith.constant 6.400000e+01 : f32
    %249 = vector.broadcast %cst_78 : f32 to vector<8x1xf32>
    %250 = arith.divf %248, %249 : vector<8x1xf32>
    %251 = vector.broadcast %243 : vector<8x1xf32> to vector<8x64xf32>
    %252 = arith.subf %239, %251 : vector<8x64xf32>
    %cst_79 = arith.constant 9.99999974E-6 : f32
    %253 = vector.broadcast %cst_79 : f32 to vector<8x1xf32>
    %254 = arith.addf %250, %253 : vector<8x1xf32>
    %255 = math.rsqrt %254 : vector<8x1xf32>
    %256 = vector.broadcast %255 : vector<8x1xf32> to vector<8x64xf32>
    %257 = arith.mulf %252, %256 : vector<8x64xf32>
    %258 = vector.broadcast %143 : vector<1x64xf32> to vector<8x64xf32>
    %259 = arith.mulf %257, %258 : vector<8x64xf32>
    %260 = vector.broadcast %144 : vector<1x64xf32> to vector<8x64xf32>
    %261 = arith.addf %259, %260 : vector<8x64xf32>
    %c656 = arith.constant 656 : index
    %c0_80 = arith.constant 0 : index
    %262 = vector.load %arg1[%c656, %c0_80] : memref<720x192xf32, #tpu.memory_space<vmem>>, vector<64x1xf32>
    %c17 = arith.constant 17 : index
    %c0_81 = arith.constant 0 : index
    %263 = vector.load %arg2[%c17, %c0_81] : memref<18x192xf32, #tpu.memory_space<vmem>>, vector<1x1xf32>
    %cst_82 = arith.constant dense<0.000000e+00> : vector<8x1xf32>
    %264 = tpu.matmul %261, %262, %cst_82 {dimension_numbers = #tpu.dot_dimension_numbers<[1], [0], [0], [1], [0, 0, 1, 1], [], []>} : vector<8x64xf32>, vector<64x1xf32>, vector<8x1xf32> -> vector<8x1xf32>
    %265 = vector.broadcast %263 : vector<1x1xf32> to vector<8x1xf32>
    %266 = arith.addf %264, %265 : vector<8x1xf32>
    %267 = arith.negf %266 : vector<8x1xf32>
    %268 = math.exp %267 : vector<8x1xf32>
    %cst_83 = arith.constant 1.000000e+00 : f32
    %269 = vector.broadcast %cst_83 : f32 to vector<8x1xf32>
    %270 = arith.addf %269, %268 : vector<8x1xf32>
    %271 = arith.divf %269, %270 : vector<8x1xf32>
    %c0_84 = arith.constant 0 : index
    %c0_85 = arith.constant 0 : index
    %272 = vector.load %arg3[%c0_84, %c0_85] : memref<8x1xf32, #tpu.memory_space<vmem>>, vector<8x1xf32>
    tpu.vector_store %arg3[%c0_84, %c0_85], %271 {strides = array<i32>} : memref<8x1xf32, #tpu.memory_space<vmem>>, vector<8x1xf32>,
    return
  }
}

</mosaic_0001>

<llo_original>
// kernel: tpu_custom_call.1
$region0: #{tpu_custom_call.1}
  #allocation0 [shape = 'u32[]', space=smem, size = 0x4, offset = 0x4, fixed_abs, tag = 'smem constant byte address 0x4 - core index']
  #allocation1 [shape = 'u32[144,128]{1,0:T(1,128)}', space=vmem, size = 0x12000, scoped, tag = 'internal scratch']
  %s0 = inlined_call_operand.vmem [shape: f32[8,16], index: 0, kind: input, shape index: {}]
  %s1 = inlined_call_operand.vmem [shape: f32[720,192], index: 1, kind: input, shape index: {}]
  %s2 = inlined_call_operand.vmem [shape: f32[18,192], index: 2, kind: input, shape index: {}]
  %s3 = inlined_call_operand.vmem [shape: f32[8,1], index: 3, kind: output, shape index: {}]
  %s4 = sld [smem:[#allocation0]]
  $region22: #{tpu_custom_call.1} parent=0
    _
  %s6 = ssub.s32 1, %s4
  %s7 = scalar_select 0, %s6, %s4
  // Predicated region
  $region2: #{tpu_custom_call.1} parent=0 // pred_check
    _
  $region3: #{tpu_custom_call.1} parent=0 // pred_check_branch
    %9 = sbr.rel (0) target = $region5
  $region4: #{tpu_custom_call.1} parent=0 // pred_region
    _
  $region5: #{tpu_custom_call.1} parent=0 // pred_fallthru
    _
  // Predicated region
  $region6: #{tpu_custom_call.1} parent=0 // pred_check
    _
  $region7: #{tpu_custom_call.1} parent=0 // pred_check_branch
    %11 = sbr.rel (0) target = $region9
  $region8: #{tpu_custom_call.1} parent=0 // pred_region
    _
  $region9: #{tpu_custom_call.1} parent=0 // pred_fallthru
    _
  // Predicated region
  $region10: #{tpu_custom_call.1} parent=0 // pred_check
    _
  $region11: #{tpu_custom_call.1} parent=0 // pred_check_branch
    %13 = sbr.rel (0) target = $region13
  $region12: #{tpu_custom_call.1} parent=0 // pred_region
    _
  $region13: #{tpu_custom_call.1} parent=0 // pred_fallthru
    _
  %v14 = vld [vmem:[%s0] sm:$0xff]
  %v15 = vld [vmem:[%s1] sm:$0xff]
  %v16 = vld [vmem:[%s1 + $0x10] sm:$0xff]
  %v17 = vld [vmem:[%s2] ss:$0 sm:$0xff]
  %vm18 = vcmask 130048
  %v20 = vsel %vm18, %v14, 0
  %22 = vmatprep.subr.mxu0 0.0
  %23 = vmatpush1.msra.mxu0 %v15
  %24 = vmatprep.subr.mxu0 0.0
  %25 = vmatpush1.msra.mxu0 %v16
  %26 = vmatprep.subr.mxu0 0.0
  %27 = vmatpush1.msra.mxu0 0.0
  %28 = vmatprep.subr.mxu0 0.0
  %29 = vmatpush1.msra.mxu0 0.0
  %30 = vmatprep.subr.mxu0 0.0
  %31 = vmatpush1.msra.mxu0 0.0
  %32 = vmatprep.subr.mxu0 0.0
  %33 = vmatpush1.msra.mxu0 0.0
  %34 = vmatprep.subr.mxu0 0.0
  %35 = vmatpush1.msra.mxu0 0.0
  %36 = vmatprep.subr.mxu0 0.0
  %37 = vmatpush1.msra.mxu0 0.0
  %38 = vmatprep.subr.mxu0 0.0
  %39 = vmatpush1.msra.mxu0 0.0
  %40 = vmatprep.subr.mxu0 0.0
  %41 = vmatpush1.msra.mxu0 0.0
  %42 = vmatprep.subr.mxu0 0.0
  %43 = vmatpush1.msra.mxu0 0.0
  %44 = vmatprep.subr.mxu0 0.0
  %45 = vmatpush1.msra.mxu0 0.0
  %46 = vmatprep.subr.mxu0 0.0
  %47 = vmatpush1.msra.mxu0 0.0
  %48 = vmatprep.subr.mxu0 0.0
  %49 = vmatpush1.msra.mxu0 0.0
  %50 = vmatprep.subr.mxu0 0.0
  %51 = vmatpush1.msra.mxu0 0.0
  %52 = vmatprep.subr.mxu0 0.0
  %53 = vmatpush1.msra.mxu0 0.0
  %54 = vmatprep.subr.mxu0 0.0
  %55 = vmatpush1.msra.mxu0 0.0
  %56 = vmatprep.subr.mxu0 0.0
  %57 = vmatpush1.msra.mxu0 0.0
  %58 = vmatprep.subr.mxu0 0.0
  %59 = vmatpush1.msra.mxu0 0.0
  %60 = vmatprep.subr.mxu0 0.0
  %61 = vmatpush1.msra.mxu0 0.0
  %62 = vmatprep.subr.mxu0 0.0
  %63 = vmatpush1.msra.mxu0 0.0
  %64 = vmatprep.subr.mxu0 0.0
  %65 = vmatpush1.msra.mxu0 0.0
  %66 = vmatprep.subr.mxu0 0.0
  %67 = vmatpush1.msra.mxu0 0.0
  %68 = vmatprep.subr.mxu0 0.0
  %69 = vmatpush1.msra.mxu0 0.0
  %70 = vmatprep.subr.mxu0 0.0
  %71 = vmatpush1.msra.mxu0 0.0
  %72 = vmatprep.subr.mxu0 0.0
  %73 = vmatpush1.msra.mxu0 0.0
  %74 = vmatprep.subr.mxu0 0.0
  %75 = vmatpush1.msra.mxu0 0.0
  %76 = vmatprep.subr.mxu0 0.0
  %77 = vmatpush1.msra.mxu0 0.0
  %78 = vmatprep.subr.mxu0 0.0
  %79 = vmatpush1.msra.mxu0 0.0
  %80 = vmatprep.subr.mxu0 0.0
  %81 = vmatpush1.msra.mxu0 0.0
  %82 = vmatprep.subr.mxu0 0.0
  %83 = vmatpush1.msra.mxu0 0.0
  %84 = vmatprep.subr.mxu0 0.0
  %85 = vmatpush1.msra.mxu0 0.0
  %86 = vmatprep.mubr.f32.mxu0 0.0
  %87 = vmatmul.mubr.f32.gmra.mrb[0].mxu0 %v20
  %v88 = vpop.f32.mrb[0].mxu0
  %v89 = vadd.f32 %v17, %v88
  %v90 = vpop.f32.mrb[0].mxu0
  %91 = vdwg.mxu0
  %v92 = vld [vmem:[%s1 + $0x20] sm:$0xff]
  %v93 = vld [vmem:[%s1 + $0x28] sm:$0xff]
  %v94 = vld [vmem:[%s1 + $0x30] sm:$0xff]
  %v95 = vld [vmem:[%s1 + $0x38] sm:$0xff]
  %v96 = vld [vmem:[%s1 + $0x40] sm:$0xff]
  %v97 = vld [vmem:[%s1 + $0x48] sm:$0xff]
  %v98 = vld [vmem:[%s1 + $0x50] sm:$0xff]
  %v99 = vld [vmem:[%s1 + $0x58] sm:$0xff]
  %v100 = vld [vmem:[%s1 + $0x60] sm:$0xff]
  %v101 = vld [vmem:[%s1 + $0x68] sm:$0xff]
  %v102 = vld [vmem:[%s1 + $0x70] sm:$0xff]
  %v103 = vld [vmem:[%s1 + $0x78] sm:$0xff]
  %v104 = vld [vmem:[%s1 + $0x80] sm:$0xff]
  %v105 = vld [vmem:[%s1 + $0x88] sm:$0xff]
  %v106 = vld [vmem:[%s1 + $0x90] sm:$0xff]
  %v107 = vld [vmem:[%s1 + $0x98] sm:$0xff]
  %v108 = vld [vmem:[%s1 + $0x120] sm:$0xff]
  %v109 = vld [vmem:[%s1 + $0x130] sm:$0xff]
  %v110 = vld [vmem:[%s1 + $0x140] sm:$0xff]
  %v111 = vld [vmem:[%s1 + $0x150] sm:$0xff]
  %v112 = vld [vmem:[%s1 + $0x160] sm:$0xff]
  %v113 = vld [vmem:[%s1 + $0x170] sm:$0xff]
  %v114 = vld [vmem:[%s1 + $0x180] sm:$0xff]
  %v115 = vld [vmem:[%s1 + $0x190] sm:$0xff]
  %v116 = vld [vmem:[%s1 + $0x1a0] sm:$0xff]
  %v117 = vld [vmem:[%s1 + $0x1b0] sm:$0xff]
  %v118 = vld [vmem:[%s1 + $0x1c0] sm:$0xff]
  %v119 = vld [vmem:[%s1 + $0x1d0] sm:$0xff]
  %v120 = vld [vmem:[%s1 + $0x1e0] sm:$0xff]
  %v121 = vld [vmem:[%s1 + $0x1f0] sm:$0xff]
  %v122 = vld [vmem:[%s1 + $0x200] sm:$0xff]
  %v123 = vld [vmem:[%s1 + $0x210] sm:$0xff]
  %v124 = vld [vmem:[%s1 + $0x220] sm:$0xff]
  %v125 = vld [vmem:[%s1 + $0x230] sm:$0xff]
  %v126 = vld [vmem:[%s1 + $0x240] sm:$0xff]
  %v127 = vld [vmem:[%s1 + $0x250] sm:$0xff]
  %v128 = vld [vmem:[%s1 + $0x260] sm:$0xff]
  %v129 = vld [vmem:[%s1 + $0x270] sm:$0xff]
  %v130 = vld [vmem:[%s1 + $0x280] sm:$0xff]
  %v131 = vld [vmem:[%s1 + $0x290] sm:$0xff]
  %s132 = scalar_lea.vmem %s2, 1
  %v133 = vld [vmem:[%s132] ss:$8 sm:$0x3]
  %v134 = vld [vmem:[%s2 + $0x2] ss:$0 sm:$0xff]
  %v135 = vld [vmem:[%s2 + $0x3] ss:$0 sm:$0xff]
  %v136 = vld [vmem:[%s2 + $0x4] ss:$0 sm:$0xff]
  %v137 = vld [vmem:[%s2 + $0x5] ss:$0 sm:$0xff]
  %v138 = vld [vmem:[%s2 + $0x6] ss:$0 sm:$0xff]
  %v139 = vld [vmem:[%s2 + $0x7] ss:$0 sm:$0xff]
  %v140 = vld [vmem:[%s2 + $0x10] ss:$0 sm:$0xff]
  %v142 = vlaneseq
  %v143 = vshrl.u32 %v142, 7
  %v144 = vsub.s32 0, %v143
  %v145 = vrot.slane %v133, %v144
  %v146 = vlaneseq
  %v147 = vshrl.u32 %v146, 7
  %v148 = vsub.s32 1, %v147
  %v149 = vrot.slane %v133, %v148
  %vm152 = vcmask 523264
  %v154 = vsel %vm152, %v89, 0
  %156 = vmatprep.subr.mxu0 %v93
  %157 = vmatpush1.msra.mxu0 %v92
  %158 = vmatprep.subr.mxu0 %v95
  %159 = vmatpush1.msra.mxu0 %v94
  %160 = vmatprep.subr.mxu0 %v97
  %161 = vmatpush1.msra.mxu0 %v96
  %162 = vmatprep.subr.mxu0 %v99
  %163 = vmatpush1.msra.mxu0 %v98
  %164 = vmatprep.subr.mxu0 %v101
  %165 = vmatpush1.msra.mxu0 %v100
  %166 = vmatprep.subr.mxu0 %v103
  %167 = vmatpush1.msra.mxu0 %v102
  %168 = vmatprep.subr.mxu0 %v105
  %169 = vmatpush1.msra.mxu0 %v104
  %170 = vmatprep.subr.mxu0 %v107
  %171 = vmatpush1.msra.mxu0 %v106
  %172 = vmatprep.subr.mxu0 0.0
  %173 = vmatpush1.msra.mxu0 0.0
  %174 = vmatprep.subr.mxu0 0.0
  %175 = vmatpush1.msra.mxu0 0.0
  %176 = vmatprep.subr.mxu0 0.0
  %177 = vmatpush1.msra.mxu0 0.0
  %178 = vmatprep.subr.mxu0 0.0
  %179 = vmatpush1.msra.mxu0 0.0
  %180 = vmatprep.subr.mxu0 0.0
  %181 = vmatpush1.msra.mxu0 0.0
  %182 = vmatprep.subr.mxu0 0.0
  %183 = vmatpush1.msra.mxu0 0.0
  %184 = vmatprep.subr.mxu0 0.0
  %185 = vmatpush1.msra.mxu0 0.0
  %186 = vmatprep.subr.mxu0 0.0
  %187 = vmatpush1.msra.mxu0 0.0
  %188 = vmatprep.subr.mxu0 0.0
  %189 = vmatpush1.msra.mxu0 0.0
  %190 = vmatprep.subr.mxu0 0.0
  %191 = vmatpush1.msra.mxu0 0.0
  %192 = vmatprep.subr.mxu0 0.0
  %193 = vmatpush1.msra.mxu0 0.0
  %194 = vmatprep.subr.mxu0 0.0
  %195 = vmatpush1.msra.mxu0 0.0
  %196 = vmatprep.subr.mxu0 0.0
  %197 = vmatpush1.msra.mxu0 0.0
  %198 = vmatprep.subr.mxu0 0.0
  %199 = vmatpush1.msra.mxu0 0.0
  %200 = vmatprep.subr.mxu0 0.0
  %201 = vmatpush1.msra.mxu0 0.0
  %202 = vmatprep.subr.mxu0 0.0
  %203 = vmatpush1.msra.mxu0 0.0
  %204 = vmatprep.subr.mxu0 0.0
  %205 = vmatpush1.msra.mxu0 0.0
  %206 = vmatprep.subr.mxu0 0.0
  %207 = vmatpush1.msra.mxu0 0.0
  %208 = vmatprep.subr.mxu0 0.0
  %209 = vmatpush1.msra.mxu0 0.0
  %210 = vmatprep.subr.mxu0 0.0
  %211 = vmatpush1.msra.mxu0 0.0
  %212 = vmatprep.subr.mxu0 0.0
  %213 = vmatpush1.msra.mxu0 0.0
  %214 = vmatprep.subr.mxu0 0.0
  %215 = vmatpush1.msra.mxu0 0.0
  %216 = vmatprep.subr.mxu0 0.0
  %217 = vmatpush1.msra.mxu0 0.0
  %218 = vmatprep.subr.mxu0 0.0
  %219 = vmatpush1.msra.mxu0 0.0
  %220 = vmatprep.mubr.f32.mxu0 0.0
  %221 = vmatmul.mubr.f32.gmra.mrb[0].mxu0 %v154
  %v222 = vpop.f32.mrb[0].mxu0
  %v223 = vadd.f32 %v145, %v222
  %v224 = vpop.f32.mrb[0].mxu0
  %v225 = vadd.f32 %v149, %v224
  %226 = vdwg.mxu0
  %228 = vrot.lane.b32.xlu0 %v223, 112
  %v229 = vpop.permute.xlu0 %228
  %230 = vrot.lane.b32.xlu0 %v223, 96
  %v231 = vpop.permute.xlu0 %230
  %232 = vrot.lane.b32.xlu0 %v223, 80
  %v233 = vpop.permute.xlu0 %232
  %235 = vrot.lane.b32.xlu0 %v225, 112
  %v236 = vpop.permute.xlu0 %235
  %238 = vrot.lane.b32.xlu0 %v225, 96
  %v239 = vpop.permute.xlu0 %238
  %241 = vrot.lane.b32.xlu0 %v225, 80
  %v242 = vpop.permute.xlu0 %241
  %244 = vrot.lane.b32.xlu0 %v223, 64
  %v245 = vpop.permute.xlu0 %244
  %v246 = vsel %vm18, %v223, 0
  %v248 = vsel %vm18, %v245, 0
  %250 = vmatprep.subr.mxu0 0.0
  %251 = vmatpush1.xpose.msra.mxu0 %v248
  %252 = vmatprep.subr.mxu0 0.0
  %253 = vmatpush1.xpose.msra.mxu0 0.0
  %254 = vmatprep.subr.mxu0 0.0
  %255 = vmatpush1.xpose.msra.mxu0 0.0
  %256 = vmatprep.subr.mxu0 0.0
  %257 = vmatpush1.xpose.msra.mxu0 0.0
  %258 = vmatprep.subr.mxu0 0.0
  %259 = vmatpush1.xpose.msra.mxu0 0.0
  %260 = vmatprep.subr.mxu0 0.0
  %261 = vmatpush1.xpose.msra.mxu0 0.0
  %262 = vmatprep.subr.mxu0 0.0
  %263 = vmatpush1.xpose.msra.mxu0 0.0
  %264 = vmatprep.subr.mxu0 0.0
  %265 = vmatpush1.xpose.msra.mxu0 0.0
  %266 = vmatprep.subr.mxu0 0.0
  %267 = vmatpush1.xpose.msra.mxu0 0.0
  %268 = vmatprep.subr.mxu0 0.0
  %269 = vmatpush1.xpose.msra.mxu0 0.0
  %270 = vmatprep.subr.mxu0 0.0
  %271 = vmatpush1.xpose.msra.mxu0 0.0
  %272 = vmatprep.subr.mxu0 0.0
  %273 = vmatpush1.xpose.msra.mxu0 0.0
  %274 = vmatprep.subr.mxu0 0.0
  %275 = vmatpush1.xpose.msra.mxu0 0.0
  %276 = vmatprep.subr.mxu0 0.0
  %277 = vmatpush1.xpose.msra.mxu0 0.0
  %278 = vmatprep.subr.mxu0 0.0
  %279 = vmatpush1.xpose.msra.mxu0 0.0
  %280 = vmatprep.subr.mxu0 0.0
  %281 = vmatpush1.xpose.msra.mxu0 0.0
  %282 = vmatprep.subr.mxu0 0.0
  %283 = vmatpush1.xpose.msra.mxu0 0.0
  %284 = vmatprep.subr.mxu0 0.0
  %285 = vmatpush1.xpose.msra.mxu0 0.0
  %286 = vmatprep.subr.mxu0 0.0
  %287 = vmatpush1.xpose.msra.mxu0 0.0
  %288 = vmatprep.subr.mxu0 0.0
  %289 = vmatpush1.xpose.msra.mxu0 0.0
  %290 = vmatprep.subr.mxu0 0.0
  %291 = vmatpush1.xpose.msra.mxu0 0.0
  %292 = vmatprep.subr.mxu0 0.0
  %293 = vmatpush1.xpose.msra.mxu0 0.0
  %294 = vmatprep.subr.mxu0 0.0
  %295 = vmatpush1.xpose.msra.mxu0 0.0
  %296 = vmatprep.subr.mxu0 0.0
  %297 = vmatpush1.xpose.msra.mxu0 0.0
  %298 = vmatprep.subr.mxu0 0.0
  %299 = vmatpush1.xpose.msra.mxu0 0.0
  %300 = vmatprep.subr.mxu0 0.0
  %301 = vmatpush1.xpose.msra.mxu0 0.0
  %302 = vmatprep.subr.mxu0 0.0
  %303 = vmatpush1.xpose.msra.mxu0 0.0
  %304 = vmatprep.subr.mxu0 0.0
  %305 = vmatpush1.xpose.msra.mxu0 0.0
  %306 = vmatprep.subr.mxu0 0.0
  %307 = vmatpush1.xpose.msra.mxu0 0.0
  %308 = vmatprep.subr.mxu0 0.0
  %309 = vmatpush1.xpose.msra.mxu0 0.0
  %310 = vmatprep.subr.mxu0 0.0
  %311 = vmatpush1.xpose.msra.mxu0 0.0
  %312 = vmatprep.subr.mxu0 0.0
  %313 = vmatpush1.xpose.msra.mxu0 0.0
  %314 = vmatprep.mubr.f32.mxu0 0.0
  %315 = vmatmul.mubr.f32.gmra.mrb[0].mxu0 %v246
  %v316 = vpop.f32.mrb[0].mxu0
  %v317 = vadd.f32 0.0, %v316
  %v318 = vpop.f32.mrb[0].mxu0
  %319 = vdwg.mxu0
  %320 = vrot.lane.b32.xlu0 %v229, 64
  %v321 = vpop.permute.xlu0 %320
  %v322 = vsel %vm18, %v229, 0
  %v324 = vsel %vm18, %v321, 0
  %326 = vmatprep.subr.mxu0 0.0
  %327 = vmatpush1.xpose.msra.mxu0 %v324
  %328 = vmatprep.subr.mxu0 0.0
  %329 = vmatpush1.xpose.msra.mxu0 0.0
  %330 = vmatprep.subr.mxu0 0.0
  %331 = vmatpush1.xpose.msra.mxu0 0.0
  %332 = vmatprep.subr.mxu0 0.0
  %333 = vmatpush1.xpose.msra.mxu0 0.0
  %334 = vmatprep.subr.mxu0 0.0
  %335 = vmatpush1.xpose.msra.mxu0 0.0
  %336 = vmatprep.subr.mxu0 0.0
  %337 = vmatpush1.xpose.msra.mxu0 0.0
  %338 = vmatprep.subr.mxu0 0.0
  %339 = vmatpush1.xpose.msra.mxu0 0.0
  %340 = vmatprep.subr.mxu0 0.0
  %341 = vmatpush1.xpose.msra.mxu0 0.0
  %342 = vmatprep.subr.mxu0 0.0
  %343 = vmatpush1.xpose.msra.mxu0 0.0
  %344 = vmatprep.subr.mxu0 0.0
  %345 = vmatpush1.xpose.msra.mxu0 0.0
  %346 = vmatprep.subr.mxu0 0.0
  %347 = vmatpush1.xpose.msra.mxu0 0.0
  %348 = vmatprep.subr.mxu0 0.0
  %349 = vmatpush1.xpose.msra.mxu0 0.0
  %350 = vmatprep.subr.mxu0 0.0
  %351 = vmatpush1.xpose.msra.mxu0 0.0
  %352 = vmatprep.subr.mxu0 0.0
  %353 = vmatpush1.xpose.msra.mxu0 0.0
  %354 = vmatprep.subr.mxu0 0.0
  %355 = vmatpush1.xpose.msra.mxu0 0.0
  %356 = vmatprep.subr.mxu0 0.0
  %357 = vmatpush1.xpose.msra.mxu0 0.0
  %358 = vmatprep.subr.mxu0 0.0
  %359 = vmatpush1.xpose.msra.mxu0 0.0
  %360 = vmatprep.subr.mxu0 0.0
  %361 = vmatpush1.xpose.msra.mxu0 0.0
  %362 = vmatprep.subr.mxu0 0.0
  %363 = vmatpush1.xpose.msra.mxu0 0.0
  %364 = vmatprep.subr.mxu0 0.0
  %365 = vmatpush1.xpose.msra.mxu0 0.0
  %366 = vmatprep.subr.mxu0 0.0
  %367 = vmatpush1.xpose.msra.mxu0 0.0
  %368 = vmatprep.subr.mxu0 0.0
  %369 = vmatpush1.xpose.msra.mxu0 0.0
  %370 = vmatprep.subr.mxu0 0.0
  %371 = vmatpush1.xpose.msra.mxu0 0.0
  %372 = vmatprep.subr.mxu0 0.0
  %373 = vmatpush1.xpose.msra.mxu0 0.0
  %374 = vmatprep.subr.mxu0 0.0
  %375 = vmatpush1.xpose.msra.mxu0 0.0
  %376 = vmatprep.subr.mxu0 0.0
  %377 = vmatpush1.xpose.msra.mxu0 0.0
  %378 = vmatprep.subr.mxu0 0.0
  %379 = vmatpush1.xpose.msra.mxu0 0.0
  %380 = vmatprep.subr.mxu0 0.0
  %381 = vmatpush1.xpose.msra.mxu0 0.0
  %382 = vmatprep.subr.mxu0 0.0
  %383 = vmatpush1.xpose.msra.mxu0 0.0
  %384 = vmatprep.subr.mxu0 0.0
  %385 = vmatpush1.xpose.msra.mxu0 0.0
  %386 = vmatprep.subr.mxu0 0.0
  %387 = vmatpush1.xpose.msra.mxu0 0.0
  %388 = vmatprep.subr.mxu0 0.0
  %389 = vmatpush1.xpose.msra.mxu0 0.0
  %390 = vmatprep.mubr.f32.mxu0 0.0
  %391 = vmatmul.mubr.f32.gmra.mrb[0].mxu0 %v322
  %v392 = vpop.f32.mrb[0].mxu0
  %v393 = vadd.f32 0.0, %v392
  %v394 = vpop.f32.mrb[0].mxu0
  %395 = vdwg.mxu0
  %396 = vrot.lane.b32.xlu0 %v231, 64
  %v397 = vpop.permute.xlu0 %396
  %v398 = vsel %vm18, %v231, 0
  %v400 = vsel %vm18, %v397, 0
  %402 = vmatprep.subr.mxu0 0.0
  %403 = vmatpush1.xpose.msra.mxu0 %v400
  %404 = vmatprep.subr.mxu0 0.0
  %405 = vmatpush1.xpose.msra.mxu0 0.0
  %406 = vmatprep.subr.mxu0 0.0
  %407 = vmatpush1.xpose.msra.mxu0 0.0
  %408 = vmatprep.subr.mxu0 0.0
  %409 = vmatpush1.xpose.msra.mxu0 0.0
  %410 = vmatprep.subr.mxu0 0.0
  %411 = vmatpush1.xpose.msra.mxu0 0.0
  %412 = vmatprep.subr.mxu0 0.0
  %413 = vmatpush1.xpose.msra.mxu0 0.0
  %414 = vmatprep.subr.mxu0 0.0
  %415 = vmatpush1.xpose.msra.mxu0 0.0
  %416 = vmatprep.subr.mxu0 0.0
  %417 = vmatpush1.xpose.msra.mxu0 0.0
  %418 = vmatprep.subr.mxu0 0.0
  %419 = vmatpush1.xpose.msra.mxu0 0.0
  %420 = vmatprep.subr.mxu0 0.0
  %421 = vmatpush1.xpose.msra.mxu0 0.0
  %422 = vmatprep.subr.mxu0 0.0
  %423 = vmatpush1.xpose.msra.mxu0 0.0
  %424 = vmatprep.subr.mxu0 0.0
  %425 = vmatpush1.xpose.msra.mxu0 0.0
  %426 = vmatprep.subr.mxu0 0.0
  %427 = vmatpush1.xpose.msra.mxu0 0.0
  %428 = vmatprep.subr.mxu0 0.0
  %429 = vmatpush1.xpose.msra.mxu0 0.0
  %430 = vmatprep.subr.mxu0 0.0
  %431 = vmatpush1.xpose.msra.mxu0 0.0
  %432 = vmatprep.subr.mxu0 0.0
  %433 = vmatpush1.xpose.msra.mxu0 0.0
  %434 = vmatprep.subr.mxu0 0.0
  %435 = vmatpush1.xpose.msra.mxu0 0.0
  %436 = vmatprep.subr.mxu0 0.0
  %437 = vmatpush1.xpose.msra.mxu0 0.0
  %438 = vmatprep.subr.mxu0 0.0
  %439 = vmatpush1.xpose.msra.mxu0 0.0
  %440 = vmatprep.subr.mxu0 0.0
  %441 = vmatpush1.xpose.msra.mxu0 0.0
  %442 = vmatprep.subr.mxu0 0.0
  %443 = vmatpush1.xpose.msra.mxu0 0.0
  %444 = vmatprep.subr.mxu0 0.0
  %445 = vmatpush1.xpose.msra.mxu0 0.0
  %446 = vmatprep.subr.mxu0 0.0
  %447 = vmatpush1.xpose.msra.mxu0 0.0
  %448 = vmatprep.subr.mxu0 0.0
  %449 = vmatpush1.xpose.msra.mxu0 0.0
  %450 = vmatprep.subr.mxu0 0.0
  %451 = vmatpush1.xpose.msra.mxu0 0.0
  %452 = vmatprep.subr.mxu0 0.0
  %453 = vmatpush1.xpose.msra.mxu0 0.0
  %454 = vmatprep.subr.mxu0 0.0
  %455 = vmatpush1.xpose.msra.mxu0 0.0
  %456 = vmatprep.subr.mxu0 0.0
  %457 = vmatpush1.xpose.msra.mxu0 0.0
  %458 = vmatprep.subr.mxu0 0.0
  %459 = vmatpush1.xpose.msra.mxu0 0.0
  %460 = vmatprep.subr.mxu0 0.0
  %461 = vmatpush1.xpose.msra.mxu0 0.0
  %462 = vmatprep.subr.mxu0 0.0
  %463 = vmatpush1.xpose.msra.mxu0 0.0
  %464 = vmatprep.subr.mxu0 0.0
  %465 = vmatpush1.xpose.msra.mxu0 0.0
  %466 = vmatprep.mubr.f32.mxu0 0.0
  %467 = vmatmul.mubr.f32.gmra.mrb[0].mxu0 %v398
  %v468 = vpop.f32.mrb[0].mxu0
  %v469 = vadd.f32 0.0, %v468
  %v470 = vpop.f32.mrb[0].mxu0
  %471 = vdwg.mxu0
  %472 = vrot.lane.b32.xlu0 %v233, 64
  %v473 = vpop.permute.xlu0 %472
  %v474 = vsel %vm18, %v233, 0
  %v476 = vsel %vm18, %v473, 0
  %478 = vmatprep.subr.mxu0 0.0
  %479 = vmatpush1.xpose.msra.mxu0 %v476
  %480 = vmatprep.subr.mxu0 0.0
  %481 = vmatpush1.xpose.msra.mxu0 0.0
  %482 = vmatprep.subr.mxu0 0.0
  %483 = vmatpush1.xpose.msra.mxu0 0.0
  %484 = vmatprep.subr.mxu0 0.0
  %485 = vmatpush1.xpose.msra.mxu0 0.0
  %486 = vmatprep.subr.mxu0 0.0
  %487 = vmatpush1.xpose.msra.mxu0 0.0
  %488 = vmatprep.subr.mxu0 0.0
  %489 = vmatpush1.xpose.msra.mxu0 0.0
  %490 = vmatprep.subr.mxu0 0.0
  %491 = vmatpush1.xpose.msra.mxu0 0.0
  %492 = vmatprep.subr.mxu0 0.0
  %493 = vmatpush1.xpose.msra.mxu0 0.0
  %494 = vmatprep.subr.mxu0 0.0
  %495 = vmatpush1.xpose.msra.mxu0 0.0
  %496 = vmatprep.subr.mxu0 0.0
  %497 = vmatpush1.xpose.msra.mxu0 0.0
  %498 = vmatprep.subr.mxu0 0.0
  %499 = vmatpush1.xpose.msra.mxu0 0.0
  %500 = vmatprep.subr.mxu0 0.0
  %501 = vmatpush1.xpose.msra.mxu0 0.0
  %502 = vmatprep.subr.mxu0 0.0
  %503 = vmatpush1.xpose.msra.mxu0 0.0
  %504 = vmatprep.subr.mxu0 0.0
  %505 = vmatpush1.xpose.msra.mxu0 0.0
  %506 = vmatprep.subr.mxu0 0.0
  %507 = vmatpush1.xpose.msra.mxu0 0.0
  %508 = vmatprep.subr.mxu0 0.0
  %509 = vmatpush1.xpose.msra.mxu0 0.0
  %510 = vmatprep.subr.mxu0 0.0
  %511 = vmatpush1.xpose.msra.mxu0 0.0
  %512 = vmatprep.subr.mxu0 0.0
  %513 = vmatpush1.xpose.msra.mxu0 0.0
  %514 = vmatprep.subr.mxu0 0.0
  %515 = vmatpush1.xpose.msra.mxu0 0.0
  %516 = vmatprep.subr.mxu0 0.0
  %517 = vmatpush1.xpose.msra.mxu0 0.0
  %518 = vmatprep.subr.mxu0 0.0
  %519 = vmatpush1.xpose.msra.mxu0 0.0
  %520 = vmatprep.subr.mxu0 0.0
  %521 = vmatpush1.xpose.msra.mxu0 0.0
  %522 = vmatprep.subr.mxu0 0.0
  %523 = vmatpush1.xpose.msra.mxu0 0.0
  %524 = vmatprep.subr.mxu0 0.0
  %525 = vmatpush1.xpose.msra.mxu0 0.0
  %526 = vmatprep.subr.mxu0 0.0
  %527 = vmatpush1.xpose.msra.mxu0 0.0
  %528 = vmatprep.subr.mxu0 0.0
  %529 = vmatpush1.xpose.msra.mxu0 0.0
  %530 = vmatprep.subr.mxu0 0.0
  %531 = vmatpush1.xpose.msra.mxu0 0.0
  %532 = vmatprep.subr.mxu0 0.0
  %533 = vmatpush1.xpose.msra.mxu0 0.0
  %534 = vmatprep.subr.mxu0 0.0
  %535 = vmatpush1.xpose.msra.mxu0 0.0
  %536 = vmatprep.subr.mxu0 0.0
  %537 = vmatpush1.xpose.msra.mxu0 0.0
  %538 = vmatprep.subr.mxu0 0.0
  %539 = vmatpush1.xpose.msra.mxu0 0.0
  %540 = vmatprep.subr.mxu0 0.0
  %541 = vmatpush1.xpose.msra.mxu0 0.0
  %542 = vmatprep.mubr.f32.mxu0 0.0
  %543 = vmatmul.mubr.f32.gmra.mrb[0].mxu0 %v474
  %v544 = vpop.f32.mrb[0].mxu0
  %v545 = vadd.f32 0.0, %v544
  %v546 = vpop.f32.mrb[0].mxu0
  %547 = vdwg.mxu0
  %vm548 = vcmask 64512
  %v549 = vsel %vm548, %v317, -inf
  %550 = vmax.xlane.f32.xlu0 %v549
  %v551 = vpop.xlane.xlu0 %550
  %v552 = vsel %vm548, %v393, -inf
  %553 = vmax.xlane.f32.xlu0 %v552
  %v554 = vpop.xlane.xlu0 %553
  %v555 = vsel %vm548, %v469, -inf
  %556 = vmax.xlane.f32.xlu0 %v555
  %v557 = vpop.xlane.xlu0 %556
  %v558 = vsel %vm548, %v545, -inf
  %559 = vmax.xlane.f32.xlu0 %v558
  %v560 = vpop.xlane.xlu0 %559
  %v561 = vsub.f32 %v317, %v551
  %v562 = vsub.f32 %v393, %v554
  %v563 = vsub.f32 %v469, %v557
  %v564 = vsub.f32 %v545, %v560
  %v565 = vmul.f32 %v561, 1.442695
  %v566 = vpow.pop %v565
  %v567 = vmul.f32 %v562, 1.442695
  %v568 = vpow.pop %v567
  %v569 = vmul.f32 %v563, 1.442695
  %v570 = vpow.pop %v569
  %v571 = vmul.f32 %v564, 1.442695
  %v572 = vpow.pop %v571
  %v573 = vsel %vm548, %v566, 0.0
  %574 = vadd.xlane.f32.xlu0 %v573
  %v575 = vpop.xlane.xlu0 %574
  %v576 = vsel %vm548, %v568, 0.0
  %577 = vadd.xlane.f32.xlu0 %v576
  %v578 = vpop.xlane.xlu0 %577
  %v579 = vsel %vm548, %v570, 0.0
  %580 = vadd.xlane.f32.xlu0 %v579
  %v581 = vpop.xlane.xlu0 %580
  %v582 = vsel %vm548, %v572, 0.0
  %583 = vadd.xlane.f32.xlu0 %v582
  %v584 = vpop.xlane.xlu0 %583
  %v585 = vrcp.pop %v575
  %v586 = vrcp.pop %v578
  %v587 = vrcp.pop %v581
  %v588 = vrcp.pop %v584
  %v589 = vmul.f32 %v566, %v585
  %v590 = vmul.f32 %v568, %v586
  %v591 = vmul.f32 %v570, %v587
  %v592 = vmul.f32 %v572, %v588
  %v594 = vsel %vm548, %v589, 0
  %596 = vmatprep.subr.mxu0 0.0
  %597 = vmatpush1.msra.mxu0 %v225
  %598 = vmatprep.subr.mxu0 0.0
  %599 = vmatpush1.msra.mxu0 0.0
  %600 = vmatprep.subr.mxu0 0.0
  %601 = vmatpush1.msra.mxu0 0.0
  %602 = vmatprep.subr.mxu0 0.0
  %603 = vmatpush1.msra.mxu0 0.0
  %604 = vmatprep.subr.mxu0 0.0
  %605 = vmatpush1.msra.mxu0 0.0
  %606 = vmatprep.subr.mxu0 0.0
  %607 = vmatpush1.msra.mxu0 0.0
  %608 = vmatprep.subr.mxu0 0.0
  %609 = vmatpush1.msra.mxu0 0.0
  %610 = vmatprep.subr.mxu0 0.0
  %611 = vmatpush1.msra.mxu0 0.0
  %612 = vmatprep.subr.mxu0 0.0
  %613 = vmatpush1.msra.mxu0 0.0
  %614 = vmatprep.subr.mxu0 0.0
  %615 = vmatpush1.msra.mxu0 0.0
  %616 = vmatprep.subr.mxu0 0.0
  %617 = vmatpush1.msra.mxu0 0.0
  %618 = vmatprep.subr.mxu0 0.0
  %619 = vmatpush1.msra.mxu0 0.0
  %620 = vmatprep.subr.mxu0 0.0
  %621 = vmatpush1.msra.mxu0 0.0
  %622 = vmatprep.subr.mxu0 0.0
  %623 = vmatpush1.msra.mxu0 0.0
  %624 = vmatprep.subr.mxu0 0.0
  %625 = vmatpush1.msra.mxu0 0.0
  %626 = vmatprep.subr.mxu0 0.0
  %627 = vmatpush1.msra.mxu0 0.0
  %628 = vmatprep.subr.mxu0 0.0
  %629 = vmatpush1.msra.mxu0 0.0
  %630 = vmatprep.subr.mxu0 0.0
  %631 = vmatpush1.msra.mxu0 0.0
  %632 = vmatprep.subr.mxu0 0.0
  %633 = vmatpush1.msra.mxu0 0.0
  %634 = vmatprep.subr.mxu0 0.0
  %635 = vmatpush1.msra.mxu0 0.0
  %636 = vmatprep.subr.mxu0 0.0
  %637 = vmatpush1.msra.mxu0 0.0
  %638 = vmatprep.subr.mxu0 0.0
  %639 = vmatpush1.msra.mxu0 0.0
  %640 = vmatprep.subr.mxu0 0.0
  %641 = vmatpush1.msra.mxu0 0.0
  %642 = vmatprep.subr.mxu0 0.0
  %643 = vmatpush1.msra.mxu0 0.0
  %644 = vmatprep.subr.mxu0 0.0
  %645 = vmatpush1.msra.mxu0 0.0
  %646 = vmatprep.subr.mxu0 0.0
  %647 = vmatpush1.msra.mxu0 0.0
  %648 = vmatprep.subr.mxu0 0.0
  %649 = vmatpush1.msra.mxu0 0.0
  %650 = vmatprep.subr.mxu0 0.0
  %651 = vmatpush1.msra.mxu0 0.0
  %652 = vmatprep.subr.mxu0 0.0
  %653 = vmatpush1.msra.mxu0 0.0
  %654 = vmatprep.subr.mxu0 0.0
  %655 = vmatpush1.msra.mxu0 0.0
  %656 = vmatprep.subr.mxu0 0.0
  %657 = vmatpush1.msra.mxu0 0.0
  %658 = vmatprep.subr.mxu0 0.0
  %659 = vmatpush1.msra.mxu0 0.0
  %660 = vmatprep.mubr.f32.mxu0 0.0
  %661 = vmatmul.mubr.f32.gmra.mrb[0].mxu0 %v594
  %v662 = vpop.f32.mrb[0].mxu0
  %v663 = vadd.f32 0.0, %v662
  %v664 = vpop.f32.mrb[0].mxu0
  %665 = vdwg.mxu0
  %v667 = vsel %vm548, %v590, 0
  %669 = vmatprep.subr.mxu0 0.0
  %670 = vmatpush1.msra.mxu0 %v236
  %671 = vmatprep.subr.mxu0 0.0
  %672 = vmatpush1.msra.mxu0 0.0
  %673 = vmatprep.subr.mxu0 0.0
  %674 = vmatpush1.msra.mxu0 0.0
  %675 = vmatprep.subr.mxu0 0.0
  %676 = vmatpush1.msra.mxu0 0.0
  %677 = vmatprep.subr.mxu0 0.0
  %678 = vmatpush1.msra.mxu0 0.0
  %679 = vmatprep.subr.mxu0 0.0
  %680 = vmatpush1.msra.mxu0 0.0
  %681 = vmatprep.subr.mxu0 0.0
  %682 = vmatpush1.msra.mxu0 0.0
  %683 = vmatprep.subr.mxu0 0.0
  %684 = vmatpush1.msra.mxu0 0.0
  %685 = vmatprep.subr.mxu0 0.0
  %686 = vmatpush1.msra.mxu0 0.0
  %687 = vmatprep.subr.mxu0 0.0
  %688 = vmatpush1.msra.mxu0 0.0
  %689 = vmatprep.subr.mxu0 0.0
  %690 = vmatpush1.msra.mxu0 0.0
  %691 = vmatprep.subr.mxu0 0.0
  %692 = vmatpush1.msra.mxu0 0.0
  %693 = vmatprep.subr.mxu0 0.0
  %694 = vmatpush1.msra.mxu0 0.0
  %695 = vmatprep.subr.mxu0 0.0
  %696 = vmatpush1.msra.mxu0 0.0
  %697 = vmatprep.subr.mxu0 0.0
  %698 = vmatpush1.msra.mxu0 0.0
  %699 = vmatprep.subr.mxu0 0.0
  %700 = vmatpush1.msra.mxu0 0.0
  %701 = vmatprep.subr.mxu0 0.0
  %702 = vmatpush1.msra.mxu0 0.0
  %703 = vmatprep.subr.mxu0 0.0
  %704 = vmatpush1.msra.mxu0 0.0
  %705 = vmatprep.subr.mxu0 0.0
  %706 = vmatpush1.msra.mxu0 0.0
  %707 = vmatprep.subr.mxu0 0.0
  %708 = vmatpush1.msra.mxu0 0.0
  %709 = vmatprep.subr.mxu0 0.0
  %710 = vmatpush1.msra.mxu0 0.0
  %711 = vmatprep.subr.mxu0 0.0
  %712 = vmatpush1.msra.mxu0 0.0
  %713 = vmatprep.subr.mxu0 0.0
  %714 = vmatpush1.msra.mxu0 0.0
  %715 = vmatprep.subr.mxu0 0.0
  %716 = vmatpush1.msra.mxu0 0.0
  %717 = vmatprep.subr.mxu0 0.0
  %718 = vmatpush1.msra.mxu0 0.0
  %719 = vmatprep.subr.mxu0 0.0
  %720 = vmatpush1.msra.mxu0 0.0
  %721 = vmatprep.subr.mxu0 0.0
  %722 = vmatpush1.msra.mxu0 0.0
  %723 = vmatprep.subr.mxu0 0.0
  %724 = vmatpush1.msra.mxu0 0.0
  %725 = vmatprep.subr.mxu0 0.0
  %726 = vmatpush1.msra.mxu0 0.0
  %727 = vmatprep.subr.mxu0 0.0
  %728 = vmatpush1.msra.mxu0 0.0
  %729 = vmatprep.subr.mxu0 0.0
  %730 = vmatpush1.msra.mxu0 0.0
  %731 = vmatprep.subr.mxu0 0.0
  %732 = vmatpush1.msra.mxu0 0.0
  %733 = vmatprep.mubr.f32.mxu0 0.0
  %734 = vmatmul.mubr.f32.gmra.mrb[0].mxu0 %v667
  %v735 = vpop.f32.mrb[0].mxu0
  %v736 = vadd.f32 0.0, %v735
  %v737 = vpop.f32.mrb[0].mxu0
  %738 = vdwg.mxu0
  %v740 = vsel %vm548, %v591, 0
  %742 = vmatprep.subr.mxu0 0.0
  %743 = vmatpush1.msra.mxu0 %v239
  %744 = vmatprep.subr.mxu0 0.0
  %745 = vmatpush1.msra.mxu0 0.0
  %746 = vmatprep.subr.mxu0 0.0
  %747 = vmatpush1.msra.mxu0 0.0
  %748 = vmatprep.subr.mxu0 0.0
  %749 = vmatpush1.msra.mxu0 0.0
  %750 = vmatprep.subr.mxu0 0.0
  %751 = vmatpush1.msra.mxu0 0.0
  %752 = vmatprep.subr.mxu0 0.0
  %753 = vmatpush1.msra.mxu0 0.0
  %754 = vmatprep.subr.mxu0 0.0
  %755 = vmatpush1.msra.mxu0 0.0
  %756 = vmatprep.subr.mxu0 0.0
  %757 = vmatpush1.msra.mxu0 0.0
  %758 = vmatprep.subr.mxu0 0.0
  %759 = vmatpush1.msra.mxu0 0.0
  %760 = vmatprep.subr.mxu0 0.0
  %761 = vmatpush1.msra.mxu0 0.0
  %762 = vmatprep.subr.mxu0 0.0
  %763 = vmatpush1.msra.mxu0 0.0
  %764 = vmatprep.subr.mxu0 0.0
  %765 = vmatpush1.msra.mxu0 0.0
  %766 = vmatprep.subr.mxu0 0.0
  %767 = vmatpush1.msra.mxu0 0.0
  %768 = vmatprep.subr.mxu0 0.0
  %769 = vmatpush1.msra.mxu0 0.0
  %770 = vmatprep.subr.mxu0 0.0
  %771 = vmatpush1.msra.mxu0 0.0
  %772 = vmatprep.subr.mxu0 0.0
  %773 = vmatpush1.msra.mxu0 0.0
  %774 = vmatprep.subr.mxu0 0.0
  %775 = vmatpush1.msra.mxu0 0.0
  %776 = vmatprep.subr.mxu0 0.0
  %777 = vmatpush1.msra.mxu0 0.0
  %778 = vmatprep.subr.mxu0 0.0
  %779 = vmatpush1.msra.mxu0 0.0
  %780 = vmatprep.subr.mxu0 0.0
  %781 = vmatpush1.msra.mxu0 0.0
  %782 = vmatprep.subr.mxu0 0.0
  %783 = vmatpush1.msra.mxu0 0.0
  %784 = vmatprep.subr.mxu0 0.0
  %785 = vmatpush1.msra.mxu0 0.0
  %786 = vmatprep.subr.mxu0 0.0
  %787 = vmatpush1.msra.mxu0 0.0
  %788 = vmatprep.subr.mxu0 0.0
  %789 = vmatpush1.msra.mxu0 0.0
  %790 = vmatprep.subr.mxu0 0.0
  %791 = vmatpush1.msra.mxu0 0.0
  %792 = vmatprep.subr.mxu0 0.0
  %793 = vmatpush1.msra.mxu0 0.0
  %794 = vmatprep.subr.mxu0 0.0
  %795 = vmatpush1.msra.mxu0 0.0
  %796 = vmatprep.subr.mxu0 0.0
  %797 = vmatpush1.msra.mxu0 0.0
  %798 = vmatprep.subr.mxu0 0.0
  %799 = vmatpush1.msra.mxu0 0.0
  %800 = vmatprep.subr.mxu0 0.0
  %801 = vmatpush1.msra.mxu0 0.0
  %802 = vmatprep.subr.mxu0 0.0
  %803 = vmatpush1.msra.mxu0 0.0
  %804 = vmatprep.subr.mxu0 0.0
  %805 = vmatpush1.msra.mxu0 0.0
  %806 = vmatprep.mubr.f32.mxu0 0.0
  %807 = vmatmul.mubr.f32.gmra.mrb[0].mxu0 %v740
  %v808 = vpop.f32.mrb[0].mxu0
  %v809 = vadd.f32 0.0, %v808
  %v810 = vpop.f32.mrb[0].mxu0
  %811 = vdwg.mxu0
  %v813 = vsel %vm548, %v592, 0
  %815 = vmatprep.subr.mxu0 0.0
  %816 = vmatpush1.msra.mxu0 %v242
  %817 = vmatprep.subr.mxu0 0.0
  %818 = vmatpush1.msra.mxu0 0.0
  %819 = vmatprep.subr.mxu0 0.0
  %820 = vmatpush1.msra.mxu0 0.0
  %821 = vmatprep.subr.mxu0 0.0
  %822 = vmatpush1.msra.mxu0 0.0
  %823 = vmatprep.subr.mxu0 0.0
  %824 = vmatpush1.msra.mxu0 0.0
  %825 = vmatprep.subr.mxu0 0.0
  %826 = vmatpush1.msra.mxu0 0.0
  %827 = vmatprep.subr.mxu0 0.0
  %828 = vmatpush1.msra.mxu0 0.0
  %829 = vmatprep.subr.mxu0 0.0
  %830 = vmatpush1.msra.mxu0 0.0
  %831 = vmatprep.subr.mxu0 0.0
  %832 = vmatpush1.msra.mxu0 0.0
  %833 = vmatprep.subr.mxu0 0.0
  %834 = vmatpush1.msra.mxu0 0.0
  %835 = vmatprep.subr.mxu0 0.0
  %836 = vmatpush1.msra.mxu0 0.0
  %837 = vmatprep.subr.mxu0 0.0
  %838 = vmatpush1.msra.mxu0 0.0
  %839 = vmatprep.subr.mxu0 0.0
  %840 = vmatpush1.msra.mxu0 0.0
  %841 = vmatprep.subr.mxu0 0.0
  %842 = vmatpush1.msra.mxu0 0.0
  %843 = vmatprep.subr.mxu0 0.0
  %844 = vmatpush1.msra.mxu0 0.0
  %845 = vmatprep.subr.mxu0 0.0
  %846 = vmatpush1.msra.mxu0 0.0
  %847 = vmatprep.subr.mxu0 0.0
  %848 = vmatpush1.msra.mxu0 0.0
  %849 = vmatprep.subr.mxu0 0.0
  %850 = vmatpush1.msra.mxu0 0.0
  %851 = vmatprep.subr.mxu0 0.0
  %852 = vmatpush1.msra.mxu0 0.0
  %853 = vmatprep.subr.mxu0 0.0
  %854 = vmatpush1.msra.mxu0 0.0
  %855 = vmatprep.subr.mxu0 0.0
  %856 = vmatpush1.msra.mxu0 0.0
  %857 = vmatprep.subr.mxu0 0.0
  %858 = vmatpush1.msra.mxu0 0.0
  %859 = vmatprep.subr.mxu0 0.0
  %860 = vmatpush1.msra.mxu0 0.0
  %861 = vmatprep.subr.mxu0 0.0
  %862 = vmatpush1.msra.mxu0 0.0
  %863 = vmatprep.subr.mxu0 0.0
  %864 = vmatpush1.msra.mxu0 0.0
  %865 = vmatprep.subr.mxu0 0.0
  %866 = vmatpush1.msra.mxu0 0.0
  %867 = vmatprep.subr.mxu0 0.0
  %868 = vmatpush1.msra.mxu0 0.0
  %869 = vmatprep.subr.mxu0 0.0
  %870 = vmatpush1.msra.mxu0 0.0
  %871 = vmatprep.subr.mxu0 0.0
  %872 = vmatpush1.msra.mxu0 0.0
  %873 = vmatprep.subr.mxu0 0.0
  %874 = vmatpush1.msra.mxu0 0.0
  %875 = vmatprep.subr.mxu0 0.0
  %876 = vmatpush1.msra.mxu0 0.0
  %877 = vmatprep.subr.mxu0 0.0
  %878 = vmatpush1.msra.mxu0 0.0
  %879 = vmatprep.mubr.f32.mxu0 0.0
  %880 = vmatmul.mubr.f32.gmra.mrb[0].mxu0 %v813
  %v881 = vpop.f32.mrb[0].mxu0
  %v882 = vadd.f32 0.0, %v881
  %v883 = vpop.f32.mrb[0].mxu0
  %884 = vdwg.mxu0
  %v885 = vld [vmem:[%s1 + $0xa0] sm:$0xff]
  %v886 = vld [vmem:[%s1 + $0xb0] sm:$0xff]
  %v888 = vsel %vm18, %v663, 0
  %890 = vmatprep.subr.mxu0 0.0
  %891 = vmatpush1.msra.mxu0 %v885
  %892 = vmatprep.subr.mxu0 0.0
  %893 = vmatpush1.msra.mxu0 %v886
  %894 = vmatprep.subr.mxu0 0.0
  %895 = vmatpush1.msra.mxu0 0.0
  %896 = vmatprep.subr.mxu0 0.0
  %897 = vmatpush1.msra.mxu0 0.0
  %898 = vmatprep.subr.mxu0 0.0
  %899 = vmatpush1.msra.mxu0 0.0
  %900 = vmatprep.subr.mxu0 0.0
  %901 = vmatpush1.msra.mxu0 0.0
  %902 = vmatprep.subr.mxu0 0.0
  %903 = vmatpush1.msra.mxu0 0.0
  %904 = vmatprep.subr.mxu0 0.0
  %905 = vmatpush1.msra.mxu0 0.0
  %906 = vmatprep.subr.mxu0 0.0
  %907 = vmatpush1.msra.mxu0 0.0
  %908 = vmatprep.subr.mxu0 0.0
  %909 = vmatpush1.msra.mxu0 0.0
  %910 = vmatprep.subr.mxu0 0.0
  %911 = vmatpush1.msra.mxu0 0.0
  %912 = vmatprep.subr.mxu0 0.0
  %913 = vmatpush1.msra.mxu0 0.0
  %914 = vmatprep.subr.mxu0 0.0
  %915 = vmatpush1.msra.mxu0 0.0
  %916 = vmatprep.subr.mxu0 0.0
  %917 = vmatpush1.msra.mxu0 0.0
  %918 = vmatprep.subr.mxu0 0.0
  %919 = vmatpush1.msra.mxu0 0.0
  %920 = vmatprep.subr.mxu0 0.0
  %921 = vmatpush1.msra.mxu0 0.0
  %922 = vmatprep.subr.mxu0 0.0
  %923 = vmatpush1.msra.mxu0 0.0
  %924 = vmatprep.subr.mxu0 0.0
  %925 = vmatpush1.msra.mxu0 0.0
  %926 = vmatprep.subr.mxu0 0.0
  %927 = vmatpush1.msra.mxu0 0.0
  %928 = vmatprep.subr.mxu0 0.0
  %929 = vmatpush1.msra.mxu0 0.0
  %930 = vmatprep.subr.mxu0 0.0
  %931 = vmatpush1.msra.mxu0 0.0
  %932 = vmatprep.subr.mxu0 0.0
  %933 = vmatpush1.msra.mxu0 0.0
  %934 = vmatprep.subr.mxu0 0.0
  %935 = vmatpush1.msra.mxu0 0.0
  %936 = vmatprep.subr.mxu0 0.0
  %937 = vmatpush1.msra.mxu0 0.0
  %938 = vmatprep.subr.mxu0 0.0
  %939 = vmatpush1.msra.mxu0 0.0
  %940 = vmatprep.subr.mxu0 0.0
  %941 = vmatpush1.msra.mxu0 0.0
  %942 = vmatprep.subr.mxu0 0.0
  %943 = vmatpush1.msra.mxu0 0.0
  %944 = vmatprep.subr.mxu0 0.0
  %945 = vmatpush1.msra.mxu0 0.0
  %946 = vmatprep.subr.mxu0 0.0
  %947 = vmatpush1.msra.mxu0 0.0
  %948 = vmatprep.subr.mxu0 0.0
  %949 = vmatpush1.msra.mxu0 0.0
  %950 = vmatprep.subr.mxu0 0.0
  %951 = vmatpush1.msra.mxu0 0.0
  %952 = vmatprep.subr.mxu0 0.0
  %953 = vmatpush1.msra.mxu0 0.0
  %954 = vmatprep.mubr.f32.mxu0 0.0
  %955 = vmatmul.mubr.f32.gmra.mrb[0].mxu0 %v888
  %v956 = vpop.f32.mrb[0].mxu0
  %v957 = vadd.f32 0.0, %v956
  %v958 = vpop.f32.mrb[0].mxu0
  %959 = vdwg.mxu0
  %v960 = vadd.f32 %v134, %v957
  %v961 = vld [vmem:[%s1 + $0xc0] sm:$0xff]
  %v962 = vld [vmem:[%s1 + $0xd0] sm:$0xff]
  %v964 = vsel %vm18, %v736, 0
  %966 = vmatprep.subr.mxu0 0.0
  %967 = vmatpush1.msra.mxu0 %v961
  %968 = vmatprep.subr.mxu0 0.0
  %969 = vmatpush1.msra.mxu0 %v962
  %970 = vmatprep.subr.mxu0 0.0
  %971 = vmatpush1.msra.mxu0 0.0
  %972 = vmatprep.subr.mxu0 0.0
  %973 = vmatpush1.msra.mxu0 0.0
  %974 = vmatprep.subr.mxu0 0.0
  %975 = vmatpush1.msra.mxu0 0.0
  %976 = vmatprep.subr.mxu0 0.0
  %977 = vmatpush1.msra.mxu0 0.0
  %978 = vmatprep.subr.mxu0 0.0
  %979 = vmatpush1.msra.mxu0 0.0
  %980 = vmatprep.subr.mxu0 0.0
  %981 = vmatpush1.msra.mxu0 0.0
  %982 = vmatprep.subr.mxu0 0.0
  %983 = vmatpush1.msra.mxu0 0.0
  %984 = vmatprep.subr.mxu0 0.0
  %985 = vmatpush1.msra.mxu0 0.0
  %986 = vmatprep.subr.mxu0 0.0
  %987 = vmatpush1.msra.mxu0 0.0
  %988 = vmatprep.subr.mxu0 0.0
  %989 = vmatpush1.msra.mxu0 0.0
  %990 = vmatprep.subr.mxu0 0.0
  %991 = vmatpush1.msra.mxu0 0.0
  %992 = vmatprep.subr.mxu0 0.0
  %993 = vmatpush1.msra.mxu0 0.0
  %994 = vmatprep.subr.mxu0 0.0
  %995 = vmatpush1.msra.mxu0 0.0
  %996 = vmatprep.subr.mxu0 0.0
  %997 = vmatpush1.msra.mxu0 0.0
  %998 = vmatprep.subr.mxu0 0.0
  %999 = vmatpush1.msra.mxu0 0.0
  %1000 = vmatprep.subr.mxu0 0.0
  %1001 = vmatpush1.msra.mxu0 0.0
  %1002 = vmatprep.subr.mxu0 0.0
  %1003 = vmatpush1.msra.mxu0 0.0
  %1004 = vmatprep.subr.mxu0 0.0
  %1005 = vmatpush1.msra.mxu0 0.0
  %1006 = vmatprep.subr.mxu0 0.0
  %1007 = vmatpush1.msra.mxu0 0.0
  %1008 = vmatprep.subr.mxu0 0.0
  %1009 = vmatpush1.msra.mxu0 0.0
  %1010 = vmatprep.subr.mxu0 0.0
  %1011 = vmatpush1.msra.mxu0 0.0
  %1012 = vmatprep.subr.mxu0 0.0
  %1013 = vmatpush1.msra.mxu0 0.0
  %1014 = vmatprep.subr.mxu0 0.0
  %1015 = vmatpush1.msra.mxu0 0.0
  %1016 = vmatprep.subr.mxu0 0.0
  %1017 = vmatpush1.msra.mxu0 0.0
  %1018 = vmatprep.subr.mxu0 0.0
  %1019 = vmatpush1.msra.mxu0 0.0
  %1020 = vmatprep.subr.mxu0 0.0
  %1021 = vmatpush1.msra.mxu0 0.0
  %1022 = vmatprep.subr.mxu0 0.0
  %1023 = vmatpush1.msra.mxu0 0.0
  %1024 = vmatprep.subr.mxu0 0.0
  %1025 = vmatpush1.msra.mxu0 0.0
  %1026 = vmatprep.subr.mxu0 0.0
  %1027 = vmatpush1.msra.mxu0 0.0
  %1028 = vmatprep.subr.mxu0 0.0
  %1029 = vmatpush1.msra.mxu0 0.0
  %1030 = vmatprep.mubr.f32.mxu0 0.0
  %1031 = vmatmul.mubr.f32.gmra.mrb[0].mxu0 %v964
  %v1032 = vpop.f32.mrb[0].mxu0
  %v1033 = vadd.f32 0.0, %v1032
  %v1034 = vpop.f32.mrb[0].mxu0
  %1035 = vdwg.mxu0
  %v1036 = vadd.f32 %v960, %v1033
  %v1037 = vld [vmem:[%s1 + $0xe0] sm:$0xff]
  %v1038 = vld [vmem:[%s1 + $0xf0] sm:$0xff]
  %v1040 = vsel %vm18, %v809, 0
  %1042 = vmatprep.subr.mxu0 0.0
  %1043 = vmatpush1.msra.mxu0 %v1037
  %1044 = vmatprep.subr.mxu0 0.0
  %1045 = vmatpush1.msra.mxu0 %v1038
  %1046 = vmatprep.subr.mxu0 0.0
  %1047 = vmatpush1.msra.mxu0 0.0
  %1048 = vmatprep.subr.mxu0 0.0
  %1049 = vmatpush1.msra.mxu0 0.0
  %1050 = vmatprep.subr.mxu0 0.0
  %1051 = vmatpush1.msra.mxu0 0.0
  %1052 = vmatprep.subr.mxu0 0.0
  %1053 = vmatpush1.msra.mxu0 0.0
  %1054 = vmatprep.subr.mxu0 0.0
  %1055 = vmatpush1.msra.mxu0 0.0
  %1056 = vmatprep.subr.mxu0 0.0
  %1057 = vmatpush1.msra.mxu0 0.0
  %1058 = vmatprep.subr.mxu0 0.0
  %1059 = vmatpush1.msra.mxu0 0.0
  %1060 = vmatprep.subr.mxu0 0.0
  %1061 = vmatpush1.msra.mxu0 0.0
  %1062 = vmatprep.subr.mxu0 0.0
  %1063 = vmatpush1.msra.mxu0 0.0
  %1064 = vmatprep.subr.mxu0 0.0
  %1065 = vmatpush1.msra.mxu0 0.0
  %1066 = vmatprep.subr.mxu0 0.0
  %1067 = vmatpush1.msra.mxu0 0.0
  %1068 = vmatprep.subr.mxu0 0.0
  %1069 = vmatpush1.msra.mxu0 0.0
  %1070 = vmatprep.subr.mxu0 0.0
  %1071 = vmatpush1.msra.mxu0 0.0
  %1072 = vmatprep.subr.mxu0 0.0
  %1073 = vmatpush1.msra.mxu0 0.0
  %1074 = vmatprep.subr.mxu0 0.0
  %1075 = vmatpush1.msra.mxu0 0.0
  %1076 = vmatprep.subr.mxu0 0.0
  %1077 = vmatpush1.msra.mxu0 0.0
  %1078 = vmatprep.subr.mxu0 0.0
  %1079 = vmatpush1.msra.mxu0 0.0
  %1080 = vmatprep.subr.mxu0 0.0
  %1081 = vmatpush1.msra.mxu0 0.0
  %1082 = vmatprep.subr.mxu0 0.0
  %1083 = vmatpush1.msra.mxu0 0.0
  %1084 = vmatprep.subr.mxu0 0.0
  %1085 = vmatpush1.msra.mxu0 0.0
  %1086 = vmatprep.subr.mxu0 0.0
  %1087 = vmatpush1.msra.mxu0 0.0
  %1088 = vmatprep.subr.mxu0 0.0
  %1089 = vmatpush1.msra.mxu0 0.0
  %1090 = vmatprep.subr.mxu0 0.0
  %1091 = vmatpush1.msra.mxu0 0.0
  %1092 = vmatprep.subr.mxu0 0.0
  %1093 = vmatpush1.msra.mxu0 0.0
  %1094 = vmatprep.subr.mxu0 0.0
  %1095 = vmatpush1.msra.mxu0 0.0
  %1096 = vmatprep.subr.mxu0 0.0
  %1097 = vmatpush1.msra.mxu0 0.0
  %1098 = vmatprep.subr.mxu0 0.0
  %1099 = vmatpush1.msra.mxu0 0.0
  %1100 = vmatprep.subr.mxu0 0.0
  %1101 = vmatpush1.msra.mxu0 0.0
  %1102 = vmatprep.subr.mxu0 0.0
  %1103 = vmatpush1.msra.mxu0 0.0
  %1104 = vmatprep.subr.mxu0 0.0
  %1105 = vmatpush1.msra.mxu0 0.0
  %1106 = vmatprep.mubr.f32.mxu0 0.0
  %1107 = vmatmul.mubr.f32.gmra.mrb[0].mxu0 %v1040
  %v1108 = vpop.f32.mrb[0].mxu0
  %v1109 = vadd.f32 0.0, %v1108
  %v1110 = vpop.f32.mrb[0].mxu0
  %1111 = vdwg.mxu0
  %v1112 = vadd.f32 %v1036, %v1109
  %v1113 = vld [vmem:[%s1 + $0x100] sm:$0xff]
  %v1114 = vld [vmem:[%s1 + $0x110] sm:$0xff]
  %v1116 = vsel %vm18, %v882, 0
  %1118 = vmatprep.subr.mxu0 0.0
  %1119 = vmatpush1.msra.mxu0 %v1113
  %1120 = vmatprep.subr.mxu0 0.0
  %1121 = vmatpush1.msra.mxu0 %v1114
  %1122 = vmatprep.subr.mxu0 0.0
  %1123 = vmatpush1.msra.mxu0 0.0
  %1124 = vmatprep.subr.mxu0 0.0
  %1125 = vmatpush1.msra.mxu0 0.0
  %1126 = vmatprep.subr.mxu0 0.0
  %1127 = vmatpush1.msra.mxu0 0.0
  %1128 = vmatprep.subr.mxu0 0.0
  %1129 = vmatpush1.msra.mxu0 0.0
  %1130 = vmatprep.subr.mxu0 0.0
  %1131 = vmatpush1.msra.mxu0 0.0
  %1132 = vmatprep.subr.mxu0 0.0
  %1133 = vmatpush1.msra.mxu0 0.0
  %1134 = vmatprep.subr.mxu0 0.0
  %1135 = vmatpush1.msra.mxu0 0.0
  %1136 = vmatprep.subr.mxu0 0.0
  %1137 = vmatpush1.msra.mxu0 0.0
  %1138 = vmatprep.subr.mxu0 0.0
  %1139 = vmatpush1.msra.mxu0 0.0
  %1140 = vmatprep.subr.mxu0 0.0
  %1141 = vmatpush1.msra.mxu0 0.0
  %1142 = vmatprep.subr.mxu0 0.0
  %1143 = vmatpush1.msra.mxu0 0.0
  %1144 = vmatprep.subr.mxu0 0.0
  %1145 = vmatpush1.msra.mxu0 0.0
  %1146 = vmatprep.subr.mxu0 0.0
  %1147 = vmatpush1.msra.mxu0 0.0
  %1148 = vmatprep.subr.mxu0 0.0
  %1149 = vmatpush1.msra.mxu0 0.0
  %1150 = vmatprep.subr.mxu0 0.0
  %1151 = vmatpush1.msra.mxu0 0.0
  %1152 = vmatprep.subr.mxu0 0.0
  %1153 = vmatpush1.msra.mxu0 0.0
  %1154 = vmatprep.subr.mxu0 0.0
  %1155 = vmatpush1.msra.mxu0 0.0
  %1156 = vmatprep.subr.mxu0 0.0
  %1157 = vmatpush1.msra.mxu0 0.0
  %1158 = vmatprep.subr.mxu0 0.0
  %1159 = vmatpush1.msra.mxu0 0.0
  %1160 = vmatprep.subr.mxu0 0.0
  %1161 = vmatpush1.msra.mxu0 0.0
  %1162 = vmatprep.subr.mxu0 0.0
  %1163 = vmatpush1.msra.mxu0 0.0
  %1164 = vmatprep.subr.mxu0 0.0
  %1165 = vmatpush1.msra.mxu0 0.0
  %1166 = vmatprep.subr.mxu0 0.0
  %1167 = vmatpush1.msra.mxu0 0.0
  %1168 = vmatprep.subr.mxu0 0.0
  %1169 = vmatpush1.msra.mxu0 0.0
  %1170 = vmatprep.subr.mxu0 0.0
  %1171 = vmatpush1.msra.mxu0 0.0
  %1172 = vmatprep.subr.mxu0 0.0
  %1173 = vmatpush1.msra.mxu0 0.0
  %1174 = vmatprep.subr.mxu0 0.0
  %1175 = vmatpush1.msra.mxu0 0.0
  %1176 = vmatprep.subr.mxu0 0.0
  %1177 = vmatpush1.msra.mxu0 0.0
  %1178 = vmatprep.subr.mxu0 0.0
  %1179 = vmatpush1.msra.mxu0 0.0
  %1180 = vmatprep.subr.mxu0 0.0
  %1181 = vmatpush1.msra.mxu0 0.0
  %1182 = vmatprep.mubr.f32.mxu0 0.0
  %1183 = vmatmul.mubr.f32.gmra.mrb[0].mxu0 %v1116
  %v1184 = vpop.f32.mrb[0].mxu0
  %v1185 = vadd.f32 0.0, %v1184
  %v1186 = vpop.f32.mrb[0].mxu0
  %1187 = vdwg.mxu0
  %v1188 = vadd.f32 %v1112, %v1185
  %v1189 = vadd.f32 %v89, %v1188
  %v1190 = vsel %vm152, %v1189, 0.0
  %1191 = vadd.xlane.f32.xlu0 %v1190
  %v1192 = vpop.xlane.xlu0 %1191
  %v1193 = vrcp.pop 64.0
  %v1194 = vmul.f32 %v1192, %v1193
  %v1195 = vsub.f32 %v1189, %v1194
  %v1196 = vmul.f32 %v1195, %v1195
  %v1197 = vsel %vm152, %v1196, 0.0
  %1198 = vadd.xlane.f32.xlu0 %v1197
  %v1199 = vpop.xlane.xlu0 %1198
  %v1200 = vmul.f32 %v1199, %v1193
  %v1201 = vadd.f32 %v1200, 1e-05
  %v1202 = vrsqrt.pop %v1201
  %v1203 = vmul.f32 %v1195, %v1202
  %v1204 = vmul.f32 %v1203, %v135
  %v1205 = vadd.f32 %v1204, %v136
  %v1207 = vsel %vm152, %v1205, 0
  %1209 = vmatprep.subr.mxu0 0.0
  %1210 = vmatpush1.msra.mxu0 %v108
  %1211 = vmatprep.subr.mxu0 0.0
  %1212 = vmatpush1.msra.mxu0 %v109
  %1213 = vmatprep.subr.mxu0 0.0
  %1214 = vmatpush1.msra.mxu0 %v110
  %1215 = vmatprep.subr.mxu0 0.0
  %1216 = vmatpush1.msra.mxu0 %v111
  %1217 = vmatprep.subr.mxu0 0.0
  %1218 = vmatpush1.msra.mxu0 %v112
  %1219 = vmatprep.subr.mxu0 0.0
  %1220 = vmatpush1.msra.mxu0 %v113
  %1221 = vmatprep.subr.mxu0 0.0
  %1222 = vmatpush1.msra.mxu0 %v114
  %1223 = vmatprep.subr.mxu0 0.0
  %1224 = vmatpush1.msra.mxu0 %v115
  %1225 = vmatprep.subr.mxu0 0.0
  %1226 = vmatpush1.msra.mxu0 0.0
  %1227 = vmatprep.subr.mxu0 0.0
  %1228 = vmatpush1.msra.mxu0 0.0
  %1229 = vmatprep.subr.mxu0 0.0
  %1230 = vmatpush1.msra.mxu0 0.0
  %1231 = vmatprep.subr.mxu0 0.0
  %1232 = vmatpush1.msra.mxu0 0.0
  %1233 = vmatprep.subr.mxu0 0.0
  %1234 = vmatpush1.msra.mxu0 0.0
  %1235 = vmatprep.subr.mxu0 0.0
  %1236 = vmatpush1.msra.mxu0 0.0
  %1237 = vmatprep.subr.mxu0 0.0
  %1238 = vmatpush1.msra.mxu0 0.0
  %1239 = vmatprep.subr.mxu0 0.0
  %1240 = vmatpush1.msra.mxu0 0.0
  %1241 = vmatprep.subr.mxu0 0.0
  %1242 = vmatpush1.msra.mxu0 0.0
  %1243 = vmatprep.subr.mxu0 0.0
  %1244 = vmatpush1.msra.mxu0 0.0
  %1245 = vmatprep.subr.mxu0 0.0
  %1246 = vmatpush1.msra.mxu0 0.0
  %1247 = vmatprep.subr.mxu0 0.0
  %1248 = vmatpush1.msra.mxu0 0.0
  %1249 = vmatprep.subr.mxu0 0.0
  %1250 = vmatpush1.msra.mxu0 0.0
  %1251 = vmatprep.subr.mxu0 0.0
  %1252 = vmatpush1.msra.mxu0 0.0
  %1253 = vmatprep.subr.mxu0 0.0
  %1254 = vmatpush1.msra.mxu0 0.0
  %1255 = vmatprep.subr.mxu0 0.0
  %1256 = vmatpush1.msra.mxu0 0.0
  %1257 = vmatprep.subr.mxu0 0.0
  %1258 = vmatpush1.msra.mxu0 0.0
  %1259 = vmatprep.subr.mxu0 0.0
  %1260 = vmatpush1.msra.mxu0 0.0
  %1261 = vmatprep.subr.mxu0 0.0
  %1262 = vmatpush1.msra.mxu0 0.0
  %1263 = vmatprep.subr.mxu0 0.0
  %1264 = vmatpush1.msra.mxu0 0.0
  %1265 = vmatprep.subr.mxu0 0.0
  %1266 = vmatpush1.msra.mxu0 0.0
  %1267 = vmatprep.subr.mxu0 0.0
  %1268 = vmatpush1.msra.mxu0 0.0
  %1269 = vmatprep.subr.mxu0 0.0
  %1270 = vmatpush1.msra.mxu0 0.0
  %1271 = vmatprep.subr.mxu0 0.0
  %1272 = vmatpush1.msra.mxu0 0.0
  %1273 = vmatprep.mubr.f32.mxu0 0.0
  %1274 = vmatmul.mubr.f32.gmra.mrb[0].mxu0 %v1207
  %v1275 = vpop.f32.mrb[0].mxu0
  %v1276 = vadd.f32 %v137, %v1275
  %v1277 = vpop.f32.mrb[0].mxu0
  %1278 = vdwg.mxu0
  %v1279 = vmax.f32 %v1276, 0.0
  %1280 = vmatprep.subr.mxu0 0.0
  %1281 = vmatpush1.msra.mxu0 %v116
  %1282 = vmatprep.subr.mxu0 0.0
  %1283 = vmatpush1.msra.mxu0 %v117
  %1284 = vmatprep.subr.mxu0 0.0
  %1285 = vmatpush1.msra.mxu0 %v118
  %1286 = vmatprep.subr.mxu0 0.0
  %1287 = vmatpush1.msra.mxu0 %v119
  %1288 = vmatprep.subr.mxu0 0.0
  %1289 = vmatpush1.msra.mxu0 %v120
  %1290 = vmatprep.subr.mxu0 0.0
  %1291 = vmatpush1.msra.mxu0 %v121
  %1292 = vmatprep.subr.mxu0 0.0
  %1293 = vmatpush1.msra.mxu0 %v122
  %1294 = vmatprep.subr.mxu0 0.0
  %1295 = vmatpush1.msra.mxu0 %v123
  %1296 = vmatprep.subr.mxu0 0.0
  %1297 = vmatpush1.msra.mxu0 %v124
  %1298 = vmatprep.subr.mxu0 0.0
  %1299 = vmatpush1.msra.mxu0 %v125
  %1300 = vmatprep.subr.mxu0 0.0
  %1301 = vmatpush1.msra.mxu0 %v126
  %1302 = vmatprep.subr.mxu0 0.0
  %1303 = vmatpush1.msra.mxu0 %v127
  %1304 = vmatprep.subr.mxu0 0.0
  %1305 = vmatpush1.msra.mxu0 %v128
  %1306 = vmatprep.subr.mxu0 0.0
  %1307 = vmatpush1.msra.mxu0 %v129
  %1308 = vmatprep.subr.mxu0 0.0
  %1309 = vmatpush1.msra.mxu0 %v130
  %1310 = vmatprep.subr.mxu0 0.0
  %1311 = vmatpush1.msra.mxu0 %v131
  %1312 = vmatprep.subr.mxu0 0.0
  %1313 = vmatpush1.msra.mxu0 0.0
  %1314 = vmatprep.subr.mxu0 0.0
  %1315 = vmatpush1.msra.mxu0 0.0
  %1316 = vmatprep.subr.mxu0 0.0
  %1317 = vmatpush1.msra.mxu0 0.0
  %1318 = vmatprep.subr.mxu0 0.0
  %1319 = vmatpush1.msra.mxu0 0.0
  %1320 = vmatprep.subr.mxu0 0.0
  %1321 = vmatpush1.msra.mxu0 0.0
  %1322 = vmatprep.subr.mxu0 0.0
  %1323 = vmatpush1.msra.mxu0 0.0
  %1324 = vmatprep.subr.mxu0 0.0
  %1325 = vmatpush1.msra.mxu0 0.0
  %1326 = vmatprep.subr.mxu0 0.0
  %1327 = vmatpush1.msra.mxu0 0.0
  %1328 = vmatprep.subr.mxu0 0.0
  %1329 = vmatpush1.msra.mxu0 0.0
  %1330 = vmatprep.subr.mxu0 0.0
  %1331 = vmatpush1.msra.mxu0 0.0
  %1332 = vmatprep.subr.mxu0 0.0
  %1333 = vmatpush1.msra.mxu0 0.0
  %1334 = vmatprep.subr.mxu0 0.0
  %1335 = vmatpush1.msra.mxu0 0.0
  %1336 = vmatprep.subr.mxu0 0.0
  %1337 = vmatpush1.msra.mxu0 0.0
  %1338 = vmatprep.subr.mxu0 0.0
  %1339 = vmatpush1.msra.mxu0 0.0
  %1340 = vmatprep.subr.mxu0 0.0
  %1341 = vmatpush1.msra.mxu0 0.0
  %1342 = vmatprep.subr.mxu0 0.0
  %1343 = vmatpush1.msra.mxu0 0.0
  %1344 = vmatprep.mubr.f32.mxu0 0.0
  %1345 = vmatmul.mubr.f32.gmra.mrb[0].mxu0 %v1279
  %v1346 = vpop.f32.mrb[0].mxu0
  %v1347 = vadd.f32 %v138, %v1346
  %v1348 = vpop.f32.mrb[0].mxu0
  %1349 = vdwg.mxu0
  %v1350 = vadd.f32 %v1205, %v1347
  %v1351 = vsel %vm152, %v1350, 0.0
  %1352 = vadd.xlane.f32.xlu0 %v1351
  %v1353 = vpop.xlane.xlu0 %1352
  %v1354 = vmul.f32 %v1353, %v1193
  %v1355 = vsub.f32 %v1350, %v1354
  %v1356 = vmul.f32 %v1355, %v1355
  %v1357 = vsel %vm152, %v1356, 0.0
  %1358 = vadd.xlane.f32.xlu0 %v1357
  %v1359 = vpop.xlane.xlu0 %1358
  %v1360 = vmul.f32 %v1359, %v1193
  %v1361 = vadd.f32 %v1360, 1e-05
  %v1362 = vrsqrt.pop %v1361
  %v1363 = vmul.f32 %v1355, %v1362
  %v1364 = vmul.f32 %v1363, %v139
  %v1365 = vadd.f32 %v1364, %v140
  %v1366 = vld [vmem:[%s1 + $0x2a0] sm:$0xff]
  %v1367 = vld [vmem:[%s1 + $0x2a8] sm:$0xff]
  %v1368 = vld [vmem:[%s1 + $0x2b0] sm:$0xff]
  %v1369 = vld [vmem:[%s1 + $0x2b8] sm:$0xff]
  %v1370 = vld [vmem:[%s1 + $0x2c0] sm:$0xff]
  %v1371 = vld [vmem:[%s1 + $0x2c8] sm:$0xff]
  %v1372 = vld [vmem:[%s1 + $0x2d0] sm:$0xff]
  %v1373 = vld [vmem:[%s1 + $0x2d8] sm:$0xff]
  %v1374 = vld [vmem:[%s1 + $0x2e0] sm:$0xff]
  %v1375 = vld [vmem:[%s1 + $0x2e8] sm:$0xff]
  %v1376 = vld [vmem:[%s1 + $0x2f0] sm:$0xff]
  %v1377 = vld [vmem:[%s1 + $0x2f8] sm:$0xff]
  %v1378 = vld [vmem:[%s1 + $0x300] sm:$0xff]
  %v1379 = vld [vmem:[%s1 + $0x308] sm:$0xff]
  %v1380 = vld [vmem:[%s1 + $0x310] sm:$0xff]
  %v1381 = vld [vmem:[%s1 + $0x318] sm:$0xff]
  %v1382 = vld [vmem:[%s1 + $0x3a0] sm:$0xff]
  %v1383 = vld [vmem:[%s1 + $0x3b0] sm:$0xff]
  %v1384 = vld [vmem:[%s1 + $0x3c0] sm:$0xff]
  %v1385 = vld [vmem:[%s1 + $0x3d0] sm:$0xff]
  %v1386 = vld [vmem:[%s1 + $0x3e0] sm:$0xff]
  %v1387 = vld [vmem:[%s1 + $0x3f0] sm:$0xff]
  %v1388 = vld [vmem:[%s1 + $0x400] sm:$0xff]
  %v1389 = vld [vmem:[%s1 + $0x410] sm:$0xff]
  %v1390 = vld [vmem:[%s1 + $0x420] sm:$0xff]
  %v1391 = vld [vmem:[%s1 + $0x430] sm:$0xff]
  %v1392 = vld [vmem:[%s1 + $0x440] sm:$0xff]
  %v1393 = vld [vmem:[%s1 + $0x450] sm:$0xff]
  %v1394 = vld [vmem:[%s1 + $0x460] sm:$0xff]
  %v1395 = vld [vmem:[%s1 + $0x470] sm:$0xff]
  %v1396 = vld [vmem:[%s1 + $0x480] sm:$0xff]
  %v1397 = vld [vmem:[%s1 + $0x490] sm:$0xff]
  %v1398 = vld [vmem:[%s1 + $0x4a0] sm:$0xff]
  %v1399 = vld [vmem:[%s1 + $0x4b0] sm:$0xff]
  %v1400 = vld [vmem:[%s1 + $0x4c0] sm:$0xff]
  %v1401 = vld [vmem:[%s1 + $0x4d0] sm:$0xff]
  %v1402 = vld [vmem:[%s1 + $0x4e0] sm:$0xff]
  %v1403 = vld [vmem:[%s1 + $0x4f0] sm:$0xff]
  %v1404 = vld [vmem:[%s1 + $0x500] sm:$0xff]
  %v1405 = vld [vmem:[%s1 + $0x510] sm:$0xff]
  %s1406 = scalar_lea.vmem %s2, 17
  %v1407 = vld [vmem:[%s1406] ss:$8 sm:$0x3]
  %v1408 = vld [vmem:[%s2 + $0x12] ss:$0 sm:$0xff]
  %v1409 = vld [vmem:[%s2 + $0x13] ss:$0 sm:$0xff]
  %v1410 = vld [vmem:[%s2 + $0x14] ss:$0 sm:$0xff]
  %v1411 = vld [vmem:[%s2 + $0x15] ss:$0 sm:$0xff]
  %v1412 = vld [vmem:[%s2 + $0x16] ss:$0 sm:$0xff]
  %v1413 = vld [vmem:[%s2 + $0x17] ss:$0 sm:$0xff]
  %v1414 = vld [vmem:[%s2 + $0x20] ss:$0 sm:$0xff]
  %v1416 = vlaneseq
  %v1417 = vshrl.u32 %v1416, 7
  %v1418 = vsub.s32 0, %v1417
  %v1419 = vrot.slane %v1407, %v1418
  %v1420 = vlaneseq
  %v1421 = vshrl.u32 %v1420, 7
  %v1422 = vsub.s32 1, %v1421
  %v1423 = vrot.slane %v1407, %v1422
  %v1427 = vsel %vm152, %v1365, 0
  %1429 = vmatprep.subr.mxu0 %v1367
  %1430 = vmatpush1.msra.mxu0 %v1366
  %1431 = vmatprep.subr.mxu0 %v1369
  %1432 = vmatpush1.msra.mxu0 %v1368
  %1433 = vmatprep.subr.mxu0 %v1371
  %1434 = vmatpush1.msra.mxu0 %v1370
  %1435 = vmatprep.subr.mxu0 %v1373
  %1436 = vmatpush1.msra.mxu0 %v1372
  %1437 = vmatprep.subr.mxu0 %v1375
  %1438 = vmatpush1.msra.mxu0 %v1374
  %1439 = vmatprep.subr.mxu0 %v1377
  %1440 = vmatpush1.msra.mxu0 %v1376
  %1441 = vmatprep.subr.mxu0 %v1379
  %1442 = vmatpush1.msra.mxu0 %v1378
  %1443 = vmatprep.subr.mxu0 %v1381
  %1444 = vmatpush1.msra.mxu0 %v1380
  %1445 = vmatprep.subr.mxu0 0.0
  %1446 = vmatpush1.msra.mxu0 0.0
  %1447 = vmatprep.subr.mxu0 0.0
  %1448 = vmatpush1.msra.mxu0 0.0
  %1449 = vmatprep.subr.mxu0 0.0
  %1450 = vmatpush1.msra.mxu0 0.0
  %1451 = vmatprep.subr.mxu0 0.0
  %1452 = vmatpush1.msra.mxu0 0.0
  %1453 = vmatprep.subr.mxu0 0.0
  %1454 = vmatpush1.msra.mxu0 0.0
  %1455 = vmatprep.subr.mxu0 0.0
  %1456 = vmatpush1.msra.mxu0 0.0
  %1457 = vmatprep.subr.mxu0 0.0
  %1458 = vmatpush1.msra.mxu0 0.0
  %1459 = vmatprep.subr.mxu0 0.0
  %1460 = vmatpush1.msra.mxu0 0.0
  %1461 = vmatprep.subr.mxu0 0.0
  %1462 = vmatpush1.msra.mxu0 0.0
  %1463 = vmatprep.subr.mxu0 0.0
  %1464 = vmatpush1.msra.mxu0 0.0
  %1465 = vmatprep.subr.mxu0 0.0
  %1466 = vmatpush1.msra.mxu0 0.0
  %1467 = vmatprep.subr.mxu0 0.0
  %1468 = vmatpush1.msra.mxu0 0.0
  %1469 = vmatprep.subr.mxu0 0.0
  %1470 = vmatpush1.msra.mxu0 0.0
  %1471 = vmatprep.subr.mxu0 0.0
  %1472 = vmatpush1.msra.mxu0 0.0
  %1473 = vmatprep.subr.mxu0 0.0
  %1474 = vmatpush1.msra.mxu0 0.0
  %1475 = vmatprep.subr.mxu0 0.0
  %1476 = vmatpush1.msra.mxu0 0.0
  %1477 = vmatprep.subr.mxu0 0.0
  %1478 = vmatpush1.msra.mxu0 0.0
  %1479 = vmatprep.subr.mxu0 0.0
  %1480 = vmatpush1.msra.mxu0 0.0
  %1481 = vmatprep.subr.mxu0 0.0
  %1482 = vmatpush1.msra.mxu0 0.0
  %1483 = vmatprep.subr.mxu0 0.0
  %1484 = vmatpush1.msra.mxu0 0.0
  %1485 = vmatprep.subr.mxu0 0.0
  %1486 = vmatpush1.msra.mxu0 0.0
  %1487 = vmatprep.subr.mxu0 0.0
  %1488 = vmatpush1.msra.mxu0 0.0
  %1489 = vmatprep.subr.mxu0 0.0
  %1490 = vmatpush1.msra.mxu0 0.0
  %1491 = vmatprep.subr.mxu0 0.0
  %1492 = vmatpush1.msra.mxu0 0.0
  %1493 = vmatprep.mubr.f32.mxu0 0.0
  %1494 = vmatmul.mubr.f32.gmra.mrb[0].mxu0 %v1427
  %v1495 = vpop.f32.mrb[0].mxu0
  %v1496 = vadd.f32 %v1419, %v1495
  %v1497 = vpop.f32.mrb[0].mxu0
  %v1498 = vadd.f32 %v1423, %v1497
  %1499 = vdwg.mxu0
  %1501 = vrot.lane.b32.xlu0 %v1496, 112
  %v1502 = vpop.permute.xlu0 %1501
  %1503 = vrot.lane.b32.xlu0 %v1496, 96
  %v1504 = vpop.permute.xlu0 %1503
  %1505 = vrot.lane.b32.xlu0 %v1496, 80
  %v1506 = vpop.permute.xlu0 %1505
  %1508 = vrot.lane.b32.xlu0 %v1498, 112
  %v1509 = vpop.permute.xlu0 %1508
  %1511 = vrot.lane.b32.xlu0 %v1498, 96
  %v1512 = vpop.permute.xlu0 %1511
  %1514 = vrot.lane.b32.xlu0 %v1498, 80
  %v1515 = vpop.permute.xlu0 %1514
  %1517 = vrot.lane.b32.xlu0 %v1496, 64
  %v1518 = vpop.permute.xlu0 %1517
  %v1519 = vsel %vm18, %v1496, 0
  %v1521 = vsel %vm18, %v1518, 0
  %1523 = vmatprep.subr.mxu0 0.0
  %1524 = vmatpush1.xpose.msra.mxu0 %v1521
  %1525 = vmatprep.subr.mxu0 0.0
  %1526 = vmatpush1.xpose.msra.mxu0 0.0
  %1527 = vmatprep.subr.mxu0 0.0
  %1528 = vmatpush1.xpose.msra.mxu0 0.0
  %1529 = vmatprep.subr.mxu0 0.0
  %1530 = vmatpush1.xpose.msra.mxu0 0.0
  %1531 = vmatprep.subr.mxu0 0.0
  %1532 = vmatpush1.xpose.msra.mxu0 0.0
  %1533 = vmatprep.subr.mxu0 0.0
  %1534 = vmatpush1.xpose.msra.mxu0 0.0
  %1535 = vmatprep.subr.mxu0 0.0
  %1536 = vmatpush1.xpose.msra.mxu0 0.0
  %1537 = vmatprep.subr.mxu0 0.0
  %1538 = vmatpush1.xpose.msra.mxu0 0.0
  %1539 = vmatprep.subr.mxu0 0.0
  %1540 = vmatpush1.xpose.msra.mxu0 0.0
  %1541 = vmatprep.subr.mxu0 0.0
  %1542 = vmatpush1.xpose.msra.mxu0 0.0
  %1543 = vmatprep.subr.mxu0 0.0
  %1544 = vmatpush1.xpose.msra.mxu0 0.0
  %1545 = vmatprep.subr.mxu0 0.0
  %1546 = vmatpush1.xpose.msra.mxu0 0.0
  %1547 = vmatprep.subr.mxu0 0.0
  %1548 = vmatpush1.xpose.msra.mxu0 0.0
  %1549 = vmatprep.subr.mxu0 0.0
  %1550 = vmatpush1.xpose.msra.mxu0 0.0
  %1551 = vmatprep.subr.mxu0 0.0
  %1552 = vmatpush1.xpose.msra.mxu0 0.0
  %1553 = vmatprep.subr.mxu0 0.0
  %1554 = vmatpush1.xpose.msra.mxu0 0.0
  %1555 = vmatprep.subr.mxu0 0.0
  %1556 = vmatpush1.xpose.msra.mxu0 0.0
  %1557 = vmatprep.subr.mxu0 0.0
  %1558 = vmatpush1.xpose.msra.mxu0 0.0
  %1559 = vmatprep.subr.mxu0 0.0
  %1560 = vmatpush1.xpose.msra.mxu0 0.0
  %1561 = vmatprep.subr.mxu0 0.0
  %1562 = vmatpush1.xpose.msra.mxu0 0.0
  %1563 = vmatprep.subr.mxu0 0.0
  %1564 = vmatpush1.xpose.msra.mxu0 0.0
  %1565 = vmatprep.subr.mxu0 0.0
  %1566 = vmatpush1.xpose.msra.mxu0 0.0
  %1567 = vmatprep.subr.mxu0 0.0
  %1568 = vmatpush1.xpose.msra.mxu0 0.0
  %1569 = vmatprep.subr.mxu0 0.0
  %1570 = vmatpush1.xpose.msra.mxu0 0.0
  %1571 = vmatprep.subr.mxu0 0.0
  %1572 = vmatpush1.xpose.msra.mxu0 0.0
  %1573 = vmatprep.subr.mxu0 0.0
  %1574 = vmatpush1.xpose.msra.mxu0 0.0
  %1575 = vmatprep.subr.mxu0 0.0
  %1576 = vmatpush1.xpose.msra.mxu0 0.0
  %1577 = vmatprep.subr.mxu0 0.0
  %1578 = vmatpush1.xpose.msra.mxu0 0.0
  %1579 = vmatprep.subr.mxu0 0.0
  %1580 = vmatpush1.xpose.msra.mxu0 0.0
  %1581 = vmatprep.subr.mxu0 0.0
  %1582 = vmatpush1.xpose.msra.mxu0 0.0
  %1583 = vmatprep.subr.mxu0 0.0
  %1584 = vmatpush1.xpose.msra.mxu0 0.0
  %1585 = vmatprep.subr.mxu0 0.0
  %1586 = vmatpush1.xpose.msra.mxu0 0.0
  %1587 = vmatprep.mubr.f32.mxu0 0.0
  %1588 = vmatmul.mubr.f32.gmra.mrb[0].mxu0 %v1519
  %v1589 = vpop.f32.mrb[0].mxu0
  %v1590 = vadd.f32 0.0, %v1589
  %v1591 = vpop.f32.mrb[0].mxu0
  %1592 = vdwg.mxu0
  %1593 = vrot.lane.b32.xlu0 %v1502, 64
  %v1594 = vpop.permute.xlu0 %1593
  %v1595 = vsel %vm18, %v1502, 0
  %v1597 = vsel %vm18, %v1594, 0
  %1599 = vmatprep.subr.mxu0 0.0
  %1600 = vmatpush1.xpose.msra.mxu0 %v1597
  %1601 = vmatprep.subr.mxu0 0.0
  %1602 = vmatpush1.xpose.msra.mxu0 0.0
  %1603 = vmatprep.subr.mxu0 0.0
  %1604 = vmatpush1.xpose.msra.mxu0 0.0
  %1605 = vmatprep.subr.mxu0 0.0
  %1606 = vmatpush1.xpose.msra.mxu0 0.0
  %1607 = vmatprep.subr.mxu0 0.0
  %1608 = vmatpush1.xpose.msra.mxu0 0.0
  %1609 = vmatprep.subr.mxu0 0.0
  %1610 = vmatpush1.xpose.msra.mxu0 0.0
  %1611 = vmatprep.subr.mxu0 0.0
  %1612 = vmatpush1.xpose.msra.mxu0 0.0
  %1613 = vmatprep.subr.mxu0 0.0
  %1614 = vmatpush1.xpose.msra.mxu0 0.0
  %1615 = vmatprep.subr.mxu0 0.0
  %1616 = vmatpush1.xpose.msra.mxu0 0.0
  %1617 = vmatprep.subr.mxu0 0.0
  %1618 = vmatpush1.xpose.msra.mxu0 0.0
  %1619 = vmatprep.subr.mxu0 0.0
  %1620 = vmatpush1.xpose.msra.mxu0 0.0
  %1621 = vmatprep.subr.mxu0 0.0
  %1622 = vmatpush1.xpose.msra.mxu0 0.0
  %1623 = vmatprep.subr.mxu0 0.0
  %1624 = vmatpush1.xpose.msra.mxu0 0.0
  %1625 = vmatprep.subr.mxu0 0.0
  %1626 = vmatpush1.xpose.msra.mxu0 0.0
  %1627 = vmatprep.subr.mxu0 0.0
  %1628 = vmatpush1.xpose.msra.mxu0 0.0
  %1629 = vmatprep.subr.mxu0 0.0
  %1630 = vmatpush1.xpose.msra.mxu0 0.0
  %1631 = vmatprep.subr.mxu0 0.0
  %1632 = vmatpush1.xpose.msra.mxu0 0.0
  %1633 = vmatprep.subr.mxu0 0.0
  %1634 = vmatpush1.xpose.msra.mxu0 0.0
  %1635 = vmatprep.subr.mxu0 0.0
  %1636 = vmatpush1.xpose.msra.mxu0 0.0
  %1637 = vmatprep.subr.mxu0 0.0
  %1638 = vmatpush1.xpose.msra.mxu0 0.0
  %1639 = vmatprep.subr.mxu0 0.0
  %1640 = vmatpush1.xpose.msra.mxu0 0.0
  %1641 = vmatprep.subr.mxu0 0.0
  %1642 = vmatpush1.xpose.msra.mxu0 0.0
  %1643 = vmatprep.subr.mxu0 0.0
  %1644 = vmatpush1.xpose.msra.mxu0 0.0
  %1645 = vmatprep.subr.mxu0 0.0
  %1646 = vmatpush1.xpose.msra.mxu0 0.0
  %1647 = vmatprep.subr.mxu0 0.0
  %1648 = vmatpush1.xpose.msra.mxu0 0.0
  %1649 = vmatprep.subr.mxu0 0.0
  %1650 = vmatpush1.xpose.msra.mxu0 0.0
  %1651 = vmatprep.subr.mxu0 0.0
  %1652 = vmatpush1.xpose.msra.mxu0 0.0
  %1653 = vmatprep.subr.mxu0 0.0
  %1654 = vmatpush1.xpose.msra.mxu0 0.0
  %1655 = vmatprep.subr.mxu0 0.0
  %1656 = vmatpush1.xpose.msra.mxu0 0.0
  %1657 = vmatprep.subr.mxu0 0.0
  %1658 = vmatpush1.xpose.msra.mxu0 0.0
  %1659 = vmatprep.subr.mxu0 0.0
  %1660 = vmatpush1.xpose.msra.mxu0 0.0
  %1661 = vmatprep.subr.mxu0 0.0
  %1662 = vmatpush1.xpose.msra.mxu0 0.0
  %1663 = vmatprep.mubr.f32.mxu0 0.0
  %1664 = vmatmul.mubr.f32.gmra.mrb[0].mxu0 %v1595
  %v1665 = vpop.f32.mrb[0].mxu0
  %v1666 = vadd.f32 0.0, %v1665
  %v1667 = vpop.f32.mrb[0].mxu0
  %1668 = vdwg.mxu0
  %1669 = vrot.lane.b32.xlu0 %v1504, 64
  %v1670 = vpop.permute.xlu0 %1669
  %v1671 = vsel %vm18, %v1504, 0
  %v1673 = vsel %vm18, %v1670, 0
  %1675 = vmatprep.subr.mxu0 0.0
  %1676 = vmatpush1.xpose.msra.mxu0 %v1673
  %1677 = vmatprep.subr.mxu0 0.0
  %1678 = vmatpush1.xpose.msra.mxu0 0.0
  %1679 = vmatprep.subr.mxu0 0.0
  %1680 = vmatpush1.xpose.msra.mxu0 0.0
  %1681 = vmatprep.subr.mxu0 0.0
  %1682 = vmatpush1.xpose.msra.mxu0 0.0
  %1683 = vmatprep.subr.mxu0 0.0
  %1684 = vmatpush1.xpose.msra.mxu0 0.0
  %1685 = vmatprep.subr.mxu0 0.0
  %1686 = vmatpush1.xpose.msra.mxu0 0.0
  %1687 = vmatprep.subr.mxu0 0.0
  %1688 = vmatpush1.xpose.msra.mxu0 0.0
  %1689 = vmatprep.subr.mxu0 0.0
  %1690 = vmatpush1.xpose.msra.mxu0 0.0
  %1691 = vmatprep.subr.mxu0 0.0
  %1692 = vmatpush1.xpose.msra.mxu0 0.0
  %1693 = vmatprep.subr.mxu0 0.0
  %1694 = vmatpush1.xpose.msra.mxu0 0.0
  %1695 = vmatprep.subr.mxu0 0.0
  %1696 = vmatpush1.xpose.msra.mxu0 0.0
  %1697 = vmatprep.subr.mxu0 0.0
  %1698 = vmatpush1.xpose.msra.mxu0 0.0
  %1699 = vmatprep.subr.mxu0 0.0
  %1700 = vmatpush1.xpose.msra.mxu0 0.0
  %1701 = vmatprep.subr.mxu0 0.0
  %1702 = vmatpush1.xpose.msra.mxu0 0.0
  %1703 = vmatprep.subr.mxu0 0.0
  %1704 = vmatpush1.xpose.msra.mxu0 0.0
  %1705 = vmatprep.subr.mxu0 0.0
  %1706 = vmatpush1.xpose.msra.mxu0 0.0
  %1707 = vmatprep.subr.mxu0 0.0
  %1708 = vmatpush1.xpose.msra.mxu0 0.0
  %1709 = vmatprep.subr.mxu0 0.0
  %1710 = vmatpush1.xpose.msra.mxu0 0.0
  %1711 = vmatprep.subr.mxu0 0.0
  %1712 = vmatpush1.xpose.msra.mxu0 0.0
  %1713 = vmatprep.subr.mxu0 0.0
  %1714 = vmatpush1.xpose.msra.mxu0 0.0
  %1715 = vmatprep.subr.mxu0 0.0
  %1716 = vmatpush1.xpose.msra.mxu0 0.0
  %1717 = vmatprep.subr.mxu0 0.0
  %1718 = vmatpush1.xpose.msra.mxu0 0.0
  %1719 = vmatprep.subr.mxu0 0.0
  %1720 = vmatpush1.xpose.msra.mxu0 0.0
  %1721 = vmatprep.subr.mxu0 0.0
  %1722 = vmatpush1.xpose.msra.mxu0 0.0
  %1723 = vmatprep.subr.mxu0 0.0
  %1724 = vmatpush1.xpose.msra.mxu0 0.0
  %1725 = vmatprep.subr.mxu0 0.0
  %1726 = vmatpush1.xpose.msra.mxu0 0.0
  %1727 = vmatprep.subr.mxu0 0.0
  %1728 = vmatpush1.xpose.msra.mxu0 0.0
  %1729 = vmatprep.subr.mxu0 0.0
  %1730 = vmatpush1.xpose.msra.mxu0 0.0
  %1731 = vmatprep.subr.mxu0 0.0
  %1732 = vmatpush1.xpose.msra.mxu0 0.0
  %1733 = vmatprep.subr.mxu0 0.0
  %1734 = vmatpush1.xpose.msra.mxu0 0.0
  %1735 = vmatprep.subr.mxu0 0.0
  %1736 = vmatpush1.xpose.msra.mxu0 0.0
  %1737 = vmatprep.subr.mxu0 0.0
  %1738 = vmatpush1.xpose.msra.mxu0 0.0
  %1739 = vmatprep.mubr.f32.mxu0 0.0
  %1740 = vmatmul.mubr.f32.gmra.mrb[0].mxu0 %v1671
  %v1741 = vpop.f32.mrb[0].mxu0
  %v1742 = vadd.f32 0.0, %v1741
  %v1743 = vpop.f32.mrb[0].mxu0
  %1744 = vdwg.mxu0
  %1745 = vrot.lane.b32.xlu0 %v1506, 64
  %v1746 = vpop.permute.xlu0 %1745
  %v1747 = vsel %vm18, %v1506, 0
  %v1749 = vsel %vm18, %v1746, 0
  %1751 = vmatprep.subr.mxu0 0.0
  %1752 = vmatpush1.xpose.msra.mxu0 %v1749
  %1753 = vmatprep.subr.mxu0 0.0
  %1754 = vmatpush1.xpose.msra.mxu0 0.0
  %1755 = vmatprep.subr.mxu0 0.0
  %1756 = vmatpush1.xpose.msra.mxu0 0.0
  %1757 = vmatprep.subr.mxu0 0.0
  %1758 = vmatpush1.xpose.msra.mxu0 0.0
  %1759 = vmatprep.subr.mxu0 0.0
  %1760 = vmatpush1.xpose.msra.mxu0 0.0
  %1761 = vmatprep.subr.mxu0 0.0
  %1762 = vmatpush1.xpose.msra.mxu0 0.0
  %1763 = vmatprep.subr.mxu0 0.0
  %1764 = vmatpush1.xpose.msra.mxu0 0.0
  %1765 = vmatprep.subr.mxu0 0.0
  %1766 = vmatpush1.xpose.msra.mxu0 0.0
  %1767 = vmatprep.subr.mxu0 0.0
  %1768 = vmatpush1.xpose.msra.mxu0 0.0
  %1769 = vmatprep.subr.mxu0 0.0
  %1770 = vmatpush1.xpose.msra.mxu0 0.0
  %1771 = vmatprep.subr.mxu0 0.0
  %1772 = vmatpush1.xpose.msra.mxu0 0.0
  %1773 = vmatprep.subr.mxu0 0.0
  %1774 = vmatpush1.xpose.msra.mxu0 0.0
  %1775 = vmatprep.subr.mxu0 0.0
  %1776 = vmatpush1.xpose.msra.mxu0 0.0
  %1777 = vmatprep.subr.mxu0 0.0
  %1778 = vmatpush1.xpose.msra.mxu0 0.0
  %1779 = vmatprep.subr.mxu0 0.0
  %1780 = vmatpush1.xpose.msra.mxu0 0.0
  %1781 = vmatprep.subr.mxu0 0.0
  %1782 = vmatpush1.xpose.msra.mxu0 0.0
  %1783 = vmatprep.subr.mxu0 0.0
  %1784 = vmatpush1.xpose.msra.mxu0 0.0
  %1785 = vmatprep.subr.mxu0 0.0
  %1786 = vmatpush1.xpose.msra.mxu0 0.0
  %1787 = vmatprep.subr.mxu0 0.0
  %1788 = vmatpush1.xpose.msra.mxu0 0.0
  %1789 = vmatprep.subr.mxu0 0.0
  %1790 = vmatpush1.xpose.msra.mxu0 0.0
  %1791 = vmatprep.subr.mxu0 0.0
  %1792 = vmatpush1.xpose.msra.mxu0 0.0
  %1793 = vmatprep.subr.mxu0 0.0
  %1794 = vmatpush1.xpose.msra.mxu0 0.0
  %1795 = vmatprep.subr.mxu0 0.0
  %1796 = vmatpush1.xpose.msra.mxu0 0.0
  %1797 = vmatprep.subr.mxu0 0.0
  %1798 = vmatpush1.xpose.msra.mxu0 0.0
  %1799 = vmatprep.subr.mxu0 0.0
  %1800 = vmatpush1.xpose.msra.mxu0 0.0
  %1801 = vmatprep.subr.mxu0 0.0
  %1802 = vmatpush1.xpose.msra.mxu0 0.0
  %1803 = vmatprep.subr.mxu0 0.0
  %1804 = vmatpush1.xpose.msra.mxu0 0.0
  %1805 = vmatprep.subr.mxu0 0.0
  %1806 = vmatpush1.xpose.msra.mxu0 0.0
  %1807 = vmatprep.subr.mxu0 0.0
  %1808 = vmatpush1.xpose.msra.mxu0 0.0
  %1809 = vmatprep.subr.mxu0 0.0
  %1810 = vmatpush1.xpose.msra.mxu0 0.0
  %1811 = vmatprep.subr.mxu0 0.0
  %1812 = vmatpush1.xpose.msra.mxu0 0.0
  %1813 = vmatprep.subr.mxu0 0.0
  %1814 = vmatpush1.xpose.msra.mxu0 0.0
  %1815 = vmatprep.mubr.f32.mxu0 0.0
  %1816 = vmatmul.mubr.f32.gmra.mrb[0].mxu0 %v1747
  %v1817 = vpop.f32.mrb[0].mxu0
  %v1818 = vadd.f32 0.0, %v1817
  %v1819 = vpop.f32.mrb[0].mxu0
  %1820 = vdwg.mxu0
  %v1821 = vsel %vm548, %v1590, -inf
  %1822 = vmax.xlane.f32.xlu0 %v1821
  %v1823 = vpop.xlane.xlu0 %1822
  %v1824 = vsel %vm548, %v1666, -inf
  %1825 = vmax.xlane.f32.xlu0 %v1824
  %v1826 = vpop.xlane.xlu0 %1825
  %v1827 = vsel %vm548, %v1742, -inf
  %1828 = vmax.xlane.f32.xlu0 %v1827
  %v1829 = vpop.xlane.xlu0 %1828
  %v1830 = vsel %vm548, %v1818, -inf
  %1831 = vmax.xlane.f32.xlu0 %v1830
  %v1832 = vpop.xlane.xlu0 %1831
  %v1833 = vsub.f32 %v1590, %v1823
  %v1834 = vsub.f32 %v1666, %v1826
  %v1835 = vsub.f32 %v1742, %v1829
  %v1836 = vsub.f32 %v1818, %v1832
  %v1837 = vmul.f32 %v1833, 1.442695
  %v1838 = vpow.pop %v1837
  %v1839 = vmul.f32 %v1834, 1.442695
  %v1840 = vpow.pop %v1839
  %v1841 = vmul.f32 %v1835, 1.442695
  %v1842 = vpow.pop %v1841
  %v1843 = vmul.f32 %v1836, 1.442695
  %v1844 = vpow.pop %v1843
  %v1845 = vsel %vm548, %v1838, 0.0
  %1846 = vadd.xlane.f32.xlu0 %v1845
  %v1847 = vpop.xlane.xlu0 %1846
  %v1848 = vsel %vm548, %v1840, 0.0
  %1849 = vadd.xlane.f32.xlu0 %v1848
  %v1850 = vpop.xlane.xlu0 %1849
  %v1851 = vsel %vm548, %v1842, 0.0
  %1852 = vadd.xlane.f32.xlu0 %v1851
  %v1853 = vpop.xlane.xlu0 %1852
  %v1854 = vsel %vm548, %v1844, 0.0
  %1855 = vadd.xlane.f32.xlu0 %v1854
  %v1856 = vpop.xlane.xlu0 %1855
  %v1857 = vrcp.pop %v1847
  %v1858 = vrcp.pop %v1850
  %v1859 = vrcp.pop %v1853
  %v1860 = vrcp.pop %v1856
  %v1861 = vmul.f32 %v1838, %v1857
  %v1862 = vmul.f32 %v1840, %v1858
  %v1863 = vmul.f32 %v1842, %v1859
  %v1864 = vmul.f32 %v1844, %v1860
  %v1866 = vsel %vm548, %v1861, 0
  %1868 = vmatprep.subr.mxu0 0.0
  %1869 = vmatpush1.msra.mxu0 %v1498
  %1870 = vmatprep.subr.mxu0 0.0
  %1871 = vmatpush1.msra.mxu0 0.0
  %1872 = vmatprep.subr.mxu0 0.0
  %1873 = vmatpush1.msra.mxu0 0.0
  %1874 = vmatprep.subr.mxu0 0.0
  %1875 = vmatpush1.msra.mxu0 0.0
  %1876 = vmatprep.subr.mxu0 0.0
  %1877 = vmatpush1.msra.mxu0 0.0
  %1878 = vmatprep.subr.mxu0 0.0
  %1879 = vmatpush1.msra.mxu0 0.0
  %1880 = vmatprep.subr.mxu0 0.0
  %1881 = vmatpush1.msra.mxu0 0.0
  %1882 = vmatprep.subr.mxu0 0.0
  %1883 = vmatpush1.msra.mxu0 0.0
  %1884 = vmatprep.subr.mxu0 0.0
  %1885 = vmatpush1.msra.mxu0 0.0
  %1886 = vmatprep.subr.mxu0 0.0
  %1887 = vmatpush1.msra.mxu0 0.0
  %1888 = vmatprep.subr.mxu0 0.0
  %1889 = vmatpush1.msra.mxu0 0.0
  %1890 = vmatprep.subr.mxu0 0.0
  %1891 = vmatpush1.msra.mxu0 0.0
  %1892 = vmatprep.subr.mxu0 0.0
  %1893 = vmatpush1.msra.mxu0 0.0
  %1894 = vmatprep.subr.mxu0 0.0
  %1895 = vmatpush1.msra.mxu0 0.0
  %1896 = vmatprep.subr.mxu0 0.0
  %1897 = vmatpush1.msra.mxu0 0.0
  %1898 = vmatprep.subr.mxu0 0.0
  %1899 = vmatpush1.msra.mxu0 0.0
  %1900 = vmatprep.subr.mxu0 0.0
  %1901 = vmatpush1.msra.mxu0 0.0
  %1902 = vmatprep.subr.mxu0 0.0
  %1903 = vmatpush1.msra.mxu0 0.0
  %1904 = vmatprep.subr.mxu0 0.0
  %1905 = vmatpush1.msra.mxu0 0.0
  %1906 = vmatprep.subr.mxu0 0.0
  %1907 = vmatpush1.msra.mxu0 0.0
  %1908 = vmatprep.subr.mxu0 0.0
  %1909 = vmatpush1.msra.mxu0 0.0
  %1910 = vmatprep.subr.mxu0 0.0
  %1911 = vmatpush1.msra.mxu0 0.0
  %1912 = vmatprep.subr.mxu0 0.0
  %1913 = vmatpush1.msra.mxu0 0.0
  %1914 = vmatprep.subr.mxu0 0.0
  %1915 = vmatpush1.msra.mxu0 0.0
  %1916 = vmatprep.subr.mxu0 0.0
  %1917 = vmatpush1.msra.mxu0 0.0
  %1918 = vmatprep.subr.mxu0 0.0
  %1919 = vmatpush1.msra.mxu0 0.0
  %1920 = vmatprep.subr.mxu0 0.0
  %1921 = vmatpush1.msra.mxu0 0.0
  %1922 = vmatprep.subr.mxu0 0.0
  %1923 = vmatpush1.msra.mxu0 0.0
  %1924 = vmatprep.subr.mxu0 0.0
  %1925 = vmatpush1.msra.mxu0 0.0
  %1926 = vmatprep.subr.mxu0 0.0
  %1927 = vmatpush1.msra.mxu0 0.0
  %1928 = vmatprep.subr.mxu0 0.0
  %1929 = vmatpush1.msra.mxu0 0.0
  %1930 = vmatprep.subr.mxu0 0.0
  %1931 = vmatpush1.msra.mxu0 0.0
  %1932 = vmatprep.mubr.f32.mxu0 0.0
  %1933 = vmatmul.mubr.f32.gmra.mrb[0].mxu0 %v1866
  %v1934 = vpop.f32.mrb[0].mxu0
  %v1935 = vadd.f32 0.0, %v1934
  %v1936 = vpop.f32.mrb[0].mxu0
  %1937 = vdwg.mxu0
  %v1939 = vsel %vm548, %v1862, 0
  %1941 = vmatprep.subr.mxu0 0.0
  %1942 = vmatpush1.msra.mxu0 %v1509
  %1943 = vmatprep.subr.mxu0 0.0
  %1944 = vmatpush1.msra.mxu0 0.0
  %1945 = vmatprep.subr.mxu0 0.0
  %1946 = vmatpush1.msra.mxu0 0.0
  %1947 = vmatprep.subr.mxu0 0.0
  %1948 = vmatpush1.msra.mxu0 0.0
  %1949 = vmatprep.subr.mxu0 0.0
  %1950 = vmatpush1.msra.mxu0 0.0
  %1951 = vmatprep.subr.mxu0 0.0
  %1952 = vmatpush1.msra.mxu0 0.0
  %1953 = vmatprep.subr.mxu0 0.0
  %1954 = vmatpush1.msra.mxu0 0.0
  %1955 = vmatprep.subr.mxu0 0.0
  %1956 = vmatpush1.msra.mxu0 0.0
  %1957 = vmatprep.subr.mxu0 0.0
  %1958 = vmatpush1.msra.mxu0 0.0
  %1959 = vmatprep.subr.mxu0 0.0
  %1960 = vmatpush1.msra.mxu0 0.0
  %1961 = vmatprep.subr.mxu0 0.0
  %1962 = vmatpush1.msra.mxu0 0.0
  %1963 = vmatprep.subr.mxu0 0.0
  %1964 = vmatpush1.msra.mxu0 0.0
  %1965 = vmatprep.subr.mxu0 0.0
  %1966 = vmatpush1.msra.mxu0 0.0
  %1967 = vmatprep.subr.mxu0 0.0
  %1968 = vmatpush1.msra.mxu0 0.0
  %1969 = vmatprep.subr.mxu0 0.0
  %1970 = vmatpush1.msra.mxu0 0.0
  %1971 = vmatprep.subr.mxu0 0.0
  %1972 = vmatpush1.msra.mxu0 0.0
  %1973 = vmatprep.subr.mxu0 0.0
  %1974 = vmatpush1.msra.mxu0 0.0
  %1975 = vmatprep.subr.mxu0 0.0
  %1976 = vmatpush1.msra.mxu0 0.0
  %1977 = vmatprep.subr.mxu0 0.0
  %1978 = vmatpush1.msra.mxu0 0.0
  %1979 = vmatprep.subr.mxu0 0.0
  %1980 = vmatpush1.msra.mxu0 0.0
  %1981 = vmatprep.subr.mxu0 0.0
  %1982 = vmatpush1.msra.mxu0 0.0
  %1983 = vmatprep.subr.mxu0 0.0
  %1984 = vmatpush1.msra.mxu0 0.0
  %1985 = vmatprep.subr.mxu0 0.0
  %1986 = vmatpush1.msra.mxu0 0.0
  %1987 = vmatprep.subr.mxu0 0.0
  %1988 = vmatpush1.msra.mxu0 0.0
  %1989 = vmatprep.subr.mxu0 0.0
  %1990 = vmatpush1.msra.mxu0 0.0
  %1991 = vmatprep.subr.mxu0 0.0
  %1992 = vmatpush1.msra.mxu0 0.0
  %1993 = vmatprep.subr.mxu0 0.0
  %1994 = vmatpush1.msra.mxu0 0.0
  %1995 = vmatprep.subr.mxu0 0.0
  %1996 = vmatpush1.msra.mxu0 0.0
  %1997 = vmatprep.subr.mxu0 0.0
  %1998 = vmatpush1.msra.mxu0 0.0
  %1999 = vmatprep.subr.mxu0 0.0
  %2000 = vmatpush1.msra.mxu0 0.0
  %2001 = vmatprep.subr.mxu0 0.0
  %2002 = vmatpush1.msra.mxu0 0.0
  %2003 = vmatprep.subr.mxu0 0.0
  %2004 = vmatpush1.msra.mxu0 0.0
  %2005 = vmatprep.mubr.f32.mxu0 0.0
  %2006 = vmatmul.mubr.f32.gmra.mrb[0].mxu0 %v1939
  %v2007 = vpop.f32.mrb[0].mxu0
  %v2008 = vadd.f32 0.0, %v2007
  %v2009 = vpop.f32.mrb[0].mxu0
  %2010 = vdwg.mxu0
  %v2012 = vsel %vm548, %v1863, 0
  %2014 = vmatprep.subr.mxu0 0.0
  %2015 = vmatpush1.msra.mxu0 %v1512
  %2016 = vmatprep.subr.mxu0 0.0
  %2017 = vmatpush1.msra.mxu0 0.0
  %2018 = vmatprep.subr.mxu0 0.0
  %2019 = vmatpush1.msra.mxu0 0.0
  %2020 = vmatprep.subr.mxu0 0.0
  %2021 = vmatpush1.msra.mxu0 0.0
  %2022 = vmatprep.subr.mxu0 0.0
  %2023 = vmatpush1.msra.mxu0 0.0
  %2024 = vmatprep.subr.mxu0 0.0
  %2025 = vmatpush1.msra.mxu0 0.0
  %2026 = vmatprep.subr.mxu0 0.0
  %2027 = vmatpush1.msra.mxu0 0.0
  %2028 = vmatprep.subr.mxu0 0.0
  %2029 = vmatpush1.msra.mxu0 0.0
  %2030 = vmatprep.subr.mxu0 0.0
  %2031 = vmatpush1.msra.mxu0 0.0
  %2032 = vmatprep.subr.mxu0 0.0
  %2033 = vmatpush1.msra.mxu0 0.0
  %2034 = vmatprep.subr.mxu0 0.0
  %2035 = vmatpush1.msra.mxu0 0.0
  %2036 = vmatprep.subr.mxu0 0.0
  %2037 = vmatpush1.msra.mxu0 0.0
  %2038 = vmatprep.subr.mxu0 0.0
  %2039 = vmatpush1.msra.mxu0 0.0
  %2040 = vmatprep.subr.mxu0 0.0
  %2041 = vmatpush1.msra.mxu0 0.0
  %2042 = vmatprep.subr.mxu0 0.0
  %2043 = vmatpush1.msra.mxu0 0.0
  %2044 = vmatprep.subr.mxu0 0.0
  %2045 = vmatpush1.msra.mxu0 0.0
  %2046 = vmatprep.subr.mxu0 0.0
  %2047 = vmatpush1.msra.mxu0 0.0
  %2048 = vmatprep.subr.mxu0 0.0
  %2049 = vmatpush1.msra.mxu0 0.0
  %2050 = vmatprep.subr.mxu0 0.0
  %2051 = vmatpush1.msra.mxu0 0.0
  %2052 = vmatprep.subr.mxu0 0.0
  %2053 = vmatpush1.msra.mxu0 0.0
  %2054 = vmatprep.subr.mxu0 0.0
  %2055 = vmatpush1.msra.mxu0 0.0
  %2056 = vmatprep.subr.mxu0 0.0
  %2057 = vmatpush1.msra.mxu0 0.0
  %2058 = vmatprep.subr.mxu0 0.0
  %2059 = vmatpush1.msra.mxu0 0.0
  %2060 = vmatprep.subr.mxu0 0.0
  %2061 = vmatpush1.msra.mxu0 0.0
  %2062 = vmatprep.subr.mxu0 0.0
  %2063 = vmatpush1.msra.mxu0 0.0
  %2064 = vmatprep.subr.mxu0 0.0
  %2065 = vmatpush1.msra.mxu0 0.0
  %2066 = vmatprep.subr.mxu0 0.0
  %2067 = vmatpush1.msra.mxu0 0.0
  %2068 = vmatprep.subr.mxu0 0.0
  %2069 = vmatpush1.msra.mxu0 0.0
  %2070 = vmatprep.subr.mxu0 0.0
  %2071 = vmatpush1.msra.mxu0 0.0
  %2072 = vmatprep.subr.mxu0 0.0
  %2073 = vmatpush1.msra.mxu0 0.0
  %2074 = vmatprep.subr.mxu0 0.0
  %2075 = vmatpush1.msra.mxu0 0.0
  %2076 = vmatprep.subr.mxu0 0.0
  %2077 = vmatpush1.msra.mxu0 0.0
  %2078 = vmatprep.mubr.f32.mxu0 0.0
  %2079 = vmatmul.mubr.f32.gmra.mrb[0].mxu0 %v2012
  %v2080 = vpop.f32.mrb[0].mxu0
  %v2081 = vadd.f32 0.0, %v2080
  %v2082 = vpop.f32.mrb[0].mxu0
  %2083 = vdwg.mxu0
  %v2085 = vsel %vm548, %v1864, 0
  %2087 = vmatprep.subr.mxu0 0.0
  %2088 = vmatpush1.msra.mxu0 %v1515
  %2089 = vmatprep.subr.mxu0 0.0
  %2090 = vmatpush1.msra.mxu0 0.0
  %2091 = vmatprep.subr.mxu0 0.0
  %2092 = vmatpush1.msra.mxu0 0.0
  %2093 = vmatprep.subr.mxu0 0.0
  %2094 = vmatpush1.msra.mxu0 0.0
  %2095 = vmatprep.subr.mxu0 0.0
  %2096 = vmatpush1.msra.mxu0 0.0
  %2097 = vmatprep.subr.mxu0 0.0
  %2098 = vmatpush1.msra.mxu0 0.0
  %2099 = vmatprep.subr.mxu0 0.0
  %2100 = vmatpush1.msra.mxu0 0.0
  %2101 = vmatprep.subr.mxu0 0.0
  %2102 = vmatpush1.msra.mxu0 0.0
  %2103 = vmatprep.subr.mxu0 0.0
  %2104 = vmatpush1.msra.mxu0 0.0
  %2105 = vmatprep.subr.mxu0 0.0
  %2106 = vmatpush1.msra.mxu0 0.0
  %2107 = vmatprep.subr.mxu0 0.0
  %2108 = vmatpush1.msra.mxu0 0.0
  %2109 = vmatprep.subr.mxu0 0.0
  %2110 = vmatpush1.msra.mxu0 0.0
  %2111 = vmatprep.subr.mxu0 0.0
  %2112 = vmatpush1.msra.mxu0 0.0
  %2113 = vmatprep.subr.mxu0 0.0
  %2114 = vmatpush1.msra.mxu0 0.0
  %2115 = vmatprep.subr.mxu0 0.0
  %2116 = vmatpush1.msra.mxu0 0.0
  %2117 = vmatprep.subr.mxu0 0.0
  %2118 = vmatpush1.msra.mxu0 0.0
  %2119 = vmatprep.subr.mxu0 0.0
  %2120 = vmatpush1.msra.mxu0 0.0
  %2121 = vmatprep.subr.mxu0 0.0
  %2122 = vmatpush1.msra.mxu0 0.0
  %2123 = vmatprep.subr.mxu0 0.0
  %2124 = vmatpush1.msra.mxu0 0.0
  %2125 = vmatprep.subr.mxu0 0.0
  %2126 = vmatpush1.msra.mxu0 0.0
  %2127 = vmatprep.subr.mxu0 0.0
  %2128 = vmatpush1.msra.mxu0 0.0
  %2129 = vmatprep.subr.mxu0 0.0
  %2130 = vmatpush1.msra.mxu0 0.0
  %2131 = vmatprep.subr.mxu0 0.0
  %2132 = vmatpush1.msra.mxu0 0.0
  %2133 = vmatprep.subr.mxu0 0.0
  %2134 = vmatpush1.msra.mxu0 0.0
  %2135 = vmatprep.subr.mxu0 0.0
  %2136 = vmatpush1.msra.mxu0 0.0
  %2137 = vmatprep.subr.mxu0 0.0
  %2138 = vmatpush1.msra.mxu0 0.0
  %2139 = vmatprep.subr.mxu0 0.0
  %2140 = vmatpush1.msra.mxu0 0.0
  %2141 = vmatprep.subr.mxu0 0.0
  %2142 = vmatpush1.msra.mxu0 0.0
  %2143 = vmatprep.subr.mxu0 0.0
  %2144 = vmatpush1.msra.mxu0 0.0
  %2145 = vmatprep.subr.mxu0 0.0
  %2146 = vmatpush1.msra.mxu0 0.0
  %2147 = vmatprep.subr.mxu0 0.0
  %2148 = vmatpush1.msra.mxu0 0.0
  %2149 = vmatprep.subr.mxu0 0.0
  %2150 = vmatpush1.msra.mxu0 0.0
  %2151 = vmatprep.mubr.f32.mxu0 0.0
  %2152 = vmatmul.mubr.f32.gmra.mrb[0].mxu0 %v2085
  %v2153 = vpop.f32.mrb[0].mxu0
  %v2154 = vadd.f32 0.0, %v2153
  %v2155 = vpop.f32.mrb[0].mxu0
  %2156 = vdwg.mxu0
  %v2157 = vld [vmem:[%s1 + $0x320] sm:$0xff]
  %v2158 = vld [vmem:[%s1 + $0x330] sm:$0xff]
  %v2160 = vsel %vm18, %v1935, 0
  %2162 = vmatprep.subr.mxu0 0.0
  %2163 = vmatpush1.msra.mxu0 %v2157
  %2164 = vmatprep.subr.mxu0 0.0
  %2165 = vmatpush1.msra.mxu0 %v2158
  %2166 = vmatprep.subr.mxu0 0.0
  %2167 = vmatpush1.msra.mxu0 0.0
  %2168 = vmatprep.subr.mxu0 0.0
  %2169 = vmatpush1.msra.mxu0 0.0
  %2170 = vmatprep.subr.mxu0 0.0
  %2171 = vmatpush1.msra.mxu0 0.0
  %2172 = vmatprep.subr.mxu0 0.0
  %2173 = vmatpush1.msra.mxu0 0.0
  %2174 = vmatprep.subr.mxu0 0.0
  %2175 = vmatpush1.msra.mxu0 0.0
  %2176 = vmatprep.subr.mxu0 0.0
  %2177 = vmatpush1.msra.mxu0 0.0
  %2178 = vmatprep.subr.mxu0 0.0
  %2179 = vmatpush1.msra.mxu0 0.0
  %2180 = vmatprep.subr.mxu0 0.0
  %2181 = vmatpush1.msra.mxu0 0.0
  %2182 = vmatprep.subr.mxu0 0.0
  %2183 = vmatpush1.msra.mxu0 0.0
  %2184 = vmatprep.subr.mxu0 0.0
  %2185 = vmatpush1.msra.mxu0 0.0
  %2186 = vmatprep.subr.mxu0 0.0
  %2187 = vmatpush1.msra.mxu0 0.0
  %2188 = vmatprep.subr.mxu0 0.0
  %2189 = vmatpush1.msra.mxu0 0.0
  %2190 = vmatprep.subr.mxu0 0.0
  %2191 = vmatpush1.msra.mxu0 0.0
  %2192 = vmatprep.subr.mxu0 0.0
  %2193 = vmatpush1.msra.mxu0 0.0
  %2194 = vmatprep.subr.mxu0 0.0
  %2195 = vmatpush1.msra.mxu0 0.0
  %2196 = vmatprep.subr.mxu0 0.0
  %2197 = vmatpush1.msra.mxu0 0.0
  %2198 = vmatprep.subr.mxu0 0.0
  %2199 = vmatpush1.msra.mxu0 0.0
  %2200 = vmatprep.subr.mxu0 0.0
  %2201 = vmatpush1.msra.mxu0 0.0
  %2202 = vmatprep.subr.mxu0 0.0
  %2203 = vmatpush1.msra.mxu0 0.0
  %2204 = vmatprep.subr.mxu0 0.0
  %2205 = vmatpush1.msra.mxu0 0.0
  %2206 = vmatprep.subr.mxu0 0.0
  %2207 = vmatpush1.msra.mxu0 0.0
  %2208 = vmatprep.subr.mxu0 0.0
  %2209 = vmatpush1.msra.mxu0 0.0
  %2210 = vmatprep.subr.mxu0 0.0
  %2211 = vmatpush1.msra.mxu0 0.0
  %2212 = vmatprep.subr.mxu0 0.0
  %2213 = vmatpush1.msra.mxu0 0.0
  %2214 = vmatprep.subr.mxu0 0.0
  %2215 = vmatpush1.msra.mxu0 0.0
  %2216 = vmatprep.subr.mxu0 0.0
  %2217 = vmatpush1.msra.mxu0 0.0
  %2218 = vmatprep.subr.mxu0 0.0
  %2219 = vmatpush1.msra.mxu0 0.0
  %2220 = vmatprep.subr.mxu0 0.0
  %2221 = vmatpush1.msra.mxu0 0.0
  %2222 = vmatprep.subr.mxu0 0.0
  %2223 = vmatpush1.msra.mxu0 0.0
  %2224 = vmatprep.subr.mxu0 0.0
  %2225 = vmatpush1.msra.mxu0 0.0
  %2226 = vmatprep.mubr.f32.mxu0 0.0
  %2227 = vmatmul.mubr.f32.gmra.mrb[0].mxu0 %v2160
  %v2228 = vpop.f32.mrb[0].mxu0
  %v2229 = vadd.f32 0.0, %v2228
  %v2230 = vpop.f32.mrb[0].mxu0
  %2231 = vdwg.mxu0
  %v2232 = vadd.f32 %v1408, %v2229
  %v2233 = vld [vmem:[%s1 + $0x340] sm:$0xff]
  %v2234 = vld [vmem:[%s1 + $0x350] sm:$0xff]
  %v2236 = vsel %vm18, %v2008, 0
  %2238 = vmatprep.subr.mxu0 0.0
  %2239 = vmatpush1.msra.mxu0 %v2233
  %2240 = vmatprep.subr.mxu0 0.0
  %2241 = vmatpush1.msra.mxu0 %v2234
  %2242 = vmatprep.subr.mxu0 0.0
  %2243 = vmatpush1.msra.mxu0 0.0
  %2244 = vmatprep.subr.mxu0 0.0
  %2245 = vmatpush1.msra.mxu0 0.0
  %2246 = vmatprep.subr.mxu0 0.0
  %2247 = vmatpush1.msra.mxu0 0.0
  %2248 = vmatprep.subr.mxu0 0.0
  %2249 = vmatpush1.msra.mxu0 0.0
  %2250 = vmatprep.subr.mxu0 0.0
  %2251 = vmatpush1.msra.mxu0 0.0
  %2252 = vmatprep.subr.mxu0 0.0
  %2253 = vmatpush1.msra.mxu0 0.0
  %2254 = vmatprep.subr.mxu0 0.0
  %2255 = vmatpush1.msra.mxu0 0.0
  %2256 = vmatprep.subr.mxu0 0.0
  %2257 = vmatpush1.msra.mxu0 0.0
  %2258 = vmatprep.subr.mxu0 0.0
  %2259 = vmatpush1.msra.mxu0 0.0
  %2260 = vmatprep.subr.mxu0 0.0
  %2261 = vmatpush1.msra.mxu0 0.0
  %2262 = vmatprep.subr.mxu0 0.0
  %2263 = vmatpush1.msra.mxu0 0.0
  %2264 = vmatprep.subr.mxu0 0.0
  %2265 = vmatpush1.msra.mxu0 0.0
  %2266 = vmatprep.subr.mxu0 0.0
  %2267 = vmatpush1.msra.mxu0 0.0
  %2268 = vmatprep.subr.mxu0 0.0
  %2269 = vmatpush1.msra.mxu0 0.0
  %2270 = vmatprep.subr.mxu0 0.0
  %2271 = vmatpush1.msra.mxu0 0.0
  %2272 = vmatprep.subr.mxu0 0.0
  %2273 = vmatpush1.msra.mxu0 0.0
  %2274 = vmatprep.subr.mxu0 0.0
  %2275 = vmatpush1.msra.mxu0 0.0
  %2276 = vmatprep.subr.mxu0 0.0
  %2277 = vmatpush1.msra.mxu0 0.0
  %2278 = vmatprep.subr.mxu0 0.0
  %2279 = vmatpush1.msra.mxu0 0.0
  %2280 = vmatprep.subr.mxu0 0.0
  %2281 = vmatpush1.msra.mxu0 0.0
  %2282 = vmatprep.subr.mxu0 0.0
  %2283 = vmatpush1.msra.mxu0 0.0
  %2284 = vmatprep.subr.mxu0 0.0
  %2285 = vmatpush1.msra.mxu0 0.0
  %2286 = vmatprep.subr.mxu0 0.0
  %2287 = vmatpush1.msra.mxu0 0.0
  %2288 = vmatprep.subr.mxu0 0.0
  %2289 = vmatpush1.msra.mxu0 0.0
  %2290 = vmatprep.subr.mxu0 0.0
  %2291 = vmatpush1.msra.mxu0 0.0
  %2292 = vmatprep.subr.mxu0 0.0
  %2293 = vmatpush1.msra.mxu0 0.0
  %2294 = vmatprep.subr.mxu0 0.0
  %2295 = vmatpush1.msra.mxu0 0.0
  %2296 = vmatprep.subr.mxu0 0.0
  %2297 = vmatpush1.msra.mxu0 0.0
  %2298 = vmatprep.subr.mxu0 0.0
  %2299 = vmatpush1.msra.mxu0 0.0
  %2300 = vmatprep.subr.mxu0 0.0
  %2301 = vmatpush1.msra.mxu0 0.0
  %2302 = vmatprep.mubr.f32.mxu0 0.0
  %2303 = vmatmul.mubr.f32.gmra.mrb[0].mxu0 %v2236
  %v2304 = vpop.f32.mrb[0].mxu0
  %v2305 = vadd.f32 0.0, %v2304
  %v2306 = vpop.f32.mrb[0].mxu0
  %2307 = vdwg.mxu0
  %v2308 = vadd.f32 %v2232, %v2305
  %v2309 = vld [vmem:[%s1 + $0x360] sm:$0xff]
  %v2310 = vld [vmem:[%s1 + $0x370] sm:$0xff]
  %v2312 = vsel %vm18, %v2081, 0
  %2314 = vmatprep.subr.mxu0 0.0
  %2315 = vmatpush1.msra.mxu0 %v2309
  %2316 = vmatprep.subr.mxu0 0.0
  %2317 = vmatpush1.msra.mxu0 %v2310
  %2318 = vmatprep.subr.mxu0 0.0
  %2319 = vmatpush1.msra.mxu0 0.0
  %2320 = vmatprep.subr.mxu0 0.0
  %2321 = vmatpush1.msra.mxu0 0.0
  %2322 = vmatprep.subr.mxu0 0.0
  %2323 = vmatpush1.msra.mxu0 0.0
  %2324 = vmatprep.subr.mxu0 0.0
  %2325 = vmatpush1.msra.mxu0 0.0
  %2326 = vmatprep.subr.mxu0 0.0
  %2327 = vmatpush1.msra.mxu0 0.0
  %2328 = vmatprep.subr.mxu0 0.0
  %2329 = vmatpush1.msra.mxu0 0.0
  %2330 = vmatprep.subr.mxu0 0.0
  %2331 = vmatpush1.msra.mxu0 0.0
  %2332 = vmatprep.subr.mxu0 0.0
  %2333 = vmatpush1.msra.mxu0 0.0
  %2334 = vmatprep.subr.mxu0 0.0
  %2335 = vmatpush1.msra.mxu0 0.0
  %2336 = vmatprep.subr.mxu0 0.0
  %2337 = vmatpush1.msra.mxu0 0.0
  %2338 = vmatprep.subr.mxu0 0.0
  %2339 = vmatpush1.msra.mxu0 0.0
  %2340 = vmatprep.subr.mxu0 0.0
  %2341 = vmatpush1.msra.mxu0 0.0
  %2342 = vmatprep.subr.mxu0 0.0
  %2343 = vmatpush1.msra.mxu0 0.0
  %2344 = vmatprep.subr.mxu0 0.0
  %2345 = vmatpush1.msra.mxu0 0.0
  %2346 = vmatprep.subr.mxu0 0.0
  %2347 = vmatpush1.msra.mxu0 0.0
  %2348 = vmatprep.subr.mxu0 0.0
  %2349 = vmatpush1.msra.mxu0 0.0
  %2350 = vmatprep.subr.mxu0 0.0
  %2351 = vmatpush1.msra.mxu0 0.0
  %2352 = vmatprep.subr.mxu0 0.0
  %2353 = vmatpush1.msra.mxu0 0.0
  %2354 = vmatprep.subr.mxu0 0.0
  %2355 = vmatpush1.msra.mxu0 0.0
  %2356 = vmatprep.subr.mxu0 0.0
  %2357 = vmatpush1.msra.mxu0 0.0
  %2358 = vmatprep.subr.mxu0 0.0
  %2359 = vmatpush1.msra.mxu0 0.0
  %2360 = vmatprep.subr.mxu0 0.0
  %2361 = vmatpush1.msra.mxu0 0.0
  %2362 = vmatprep.subr.mxu0 0.0
  %2363 = vmatpush1.msra.mxu0 0.0
  %2364 = vmatprep.subr.mxu0 0.0
  %2365 = vmatpush1.msra.mxu0 0.0
  %2366 = vmatprep.subr.mxu0 0.0
  %2367 = vmatpush1.msra.mxu0 0.0
  %2368 = vmatprep.subr.mxu0 0.0
  %2369 = vmatpush1.msra.mxu0 0.0
  %2370 = vmatprep.subr.mxu0 0.0
  %2371 = vmatpush1.msra.mxu0 0.0
  %2372 = vmatprep.subr.mxu0 0.0
  %2373 = vmatpush1.msra.mxu0 0.0
  %2374 = vmatprep.subr.mxu0 0.0
  %2375 = vmatpush1.msra.mxu0 0.0
  %2376 = vmatprep.subr.mxu0 0.0
  %2377 = vmatpush1.msra.mxu0 0.0
  %2378 = vmatprep.mubr.f32.mxu0 0.0
  %2379 = vmatmul.mubr.f32.gmra.mrb[0].mxu0 %v2312
  %v2380 = vpop.f32.mrb[0].mxu0
  %v2381 = vadd.f32 0.0, %v2380
  %v2382 = vpop.f32.mrb[0].mxu0
  %2383 = vdwg.mxu0
  %v2384 = vadd.f32 %v2308, %v2381
  %v2385 = vld [vmem:[%s1 + $0x380] sm:$0xff]
  %v2386 = vld [vmem:[%s1 + $0x390] sm:$0xff]
  %v2388 = vsel %vm18, %v2154, 0
  %2390 = vmatprep.subr.mxu0 0.0
  %2391 = vmatpush1.msra.mxu0 %v2385
  %2392 = vmatprep.subr.mxu0 0.0
  %2393 = vmatpush1.msra.mxu0 %v2386
  %2394 = vmatprep.subr.mxu0 0.0
  %2395 = vmatpush1.msra.mxu0 0.0
  %2396 = vmatprep.subr.mxu0 0.0
  %2397 = vmatpush1.msra.mxu0 0.0
  %2398 = vmatprep.subr.mxu0 0.0
  %2399 = vmatpush1.msra.mxu0 0.0
  %2400 = vmatprep.subr.mxu0 0.0
  %2401 = vmatpush1.msra.mxu0 0.0
  %2402 = vmatprep.subr.mxu0 0.0
  %2403 = vmatpush1.msra.mxu0 0.0
  %2404 = vmatprep.subr.mxu0 0.0
  %2405 = vmatpush1.msra.mxu0 0.0
  %2406 = vmatprep.subr.mxu0 0.0
  %2407 = vmatpush1.msra.mxu0 0.0
  %2408 = vmatprep.subr.mxu0 0.0
  %2409 = vmatpush1.msra.mxu0 0.0
  %2410 = vmatprep.subr.mxu0 0.0
  %2411 = vmatpush1.msra.mxu0 0.0
  %2412 = vmatprep.subr.mxu0 0.0
  %2413 = vmatpush1.msra.mxu0 0.0
  %2414 = vmatprep.subr.mxu0 0.0
  %2415 = vmatpush1.msra.mxu0 0.0
  %2416 = vmatprep.subr.mxu0 0.0
  %2417 = vmatpush1.msra.mxu0 0.0
  %2418 = vmatprep.subr.mxu0 0.0
  %2419 = vmatpush1.msra.mxu0 0.0
  %2420 = vmatprep.subr.mxu0 0.0
  %2421 = vmatpush1.msra.mxu0 0.0
  %2422 = vmatprep.subr.mxu0 0.0
  %2423 = vmatpush1.msra.mxu0 0.0
  %2424 = vmatprep.subr.mxu0 0.0
  %2425 = vmatpush1.msra.mxu0 0.0
  %2426 = vmatprep.subr.mxu0 0.0
  %2427 = vmatpush1.msra.mxu0 0.0
  %2428 = vmatprep.subr.mxu0 0.0
  %2429 = vmatpush1.msra.mxu0 0.0
  %2430 = vmatprep.subr.mxu0 0.0
  %2431 = vmatpush1.msra.mxu0 0.0
  %2432 = vmatprep.subr.mxu0 0.0
  %2433 = vmatpush1.msra.mxu0 0.0
  %2434 = vmatprep.subr.mxu0 0.0
  %2435 = vmatpush1.msra.mxu0 0.0
  %2436 = vmatprep.subr.mxu0 0.0
  %2437 = vmatpush1.msra.mxu0 0.0
  %2438 = vmatprep.subr.mxu0 0.0
  %2439 = vmatpush1.msra.mxu0 0.0
  %2440 = vmatprep.subr.mxu0 0.0
  %2441 = vmatpush1.msra.mxu0 0.0
  %2442 = vmatprep.subr.mxu0 0.0
  %2443 = vmatpush1.msra.mxu0 0.0
  %2444 = vmatprep.subr.mxu0 0.0
  %2445 = vmatpush1.msra.mxu0 0.0
  %2446 = vmatprep.subr.mxu0 0.0
  %2447 = vmatpush1.msra.mxu0 0.0
  %2448 = vmatprep.subr.mxu0 0.0
  %2449 = vmatpush1.msra.mxu0 0.0
  %2450 = vmatprep.subr.mxu0 0.0
  %2451 = vmatpush1.msra.mxu0 0.0
  %2452 = vmatprep.subr.mxu0 0.0
  %2453 = vmatpush1.msra.mxu0 0.0
  %2454 = vmatprep.mubr.f32.mxu0 0.0
  %2455 = vmatmul.mubr.f32.gmra.mrb[0].mxu0 %v2388
  %v2456 = vpop.f32.mrb[0].mxu0
  %v2457 = vadd.f32 0.0, %v2456
  %v2458 = vpop.f32.mrb[0].mxu0
  %2459 = vdwg.mxu0
  %v2460 = vadd.f32 %v2384, %v2457
  %v2461 = vadd.f32 %v1365, %v2460
  %v2462 = vsel %vm152, %v2461, 0.0
  %2463 = vadd.xlane.f32.xlu0 %v2462
  %v2464 = vpop.xlane.xlu0 %2463
  %v2465 = vmul.f32 %v2464, %v1193
  %v2466 = vsub.f32 %v2461, %v2465
  %v2467 = vmul.f32 %v2466, %v2466
  %v2468 = vsel %vm152, %v2467, 0.0
  %2469 = vadd.xlane.f32.xlu0 %v2468
  %v2470 = vpop.xlane.xlu0 %2469
  %v2471 = vmul.f32 %v2470, %v1193
  %v2472 = vadd.f32 %v2471, 1e-05
  %v2473 = vrsqrt.pop %v2472
  %v2474 = vmul.f32 %v2466, %v2473
  %v2475 = vmul.f32 %v2474, %v1409
  %v2476 = vadd.f32 %v2475, %v1410
  %v2478 = vsel %vm152, %v2476, 0
  %2480 = vmatprep.subr.mxu0 0.0
  %2481 = vmatpush1.msra.mxu0 %v1382
  %2482 = vmatprep.subr.mxu0 0.0
  %2483 = vmatpush1.msra.mxu0 %v1383
  %2484 = vmatprep.subr.mxu0 0.0
  %2485 = vmatpush1.msra.mxu0 %v1384
  %2486 = vmatprep.subr.mxu0 0.0
  %2487 = vmatpush1.msra.mxu0 %v1385
  %2488 = vmatprep.subr.mxu0 0.0
  %2489 = vmatpush1.msra.mxu0 %v1386
  %2490 = vmatprep.subr.mxu0 0.0
  %2491 = vmatpush1.msra.mxu0 %v1387
  %2492 = vmatprep.subr.mxu0 0.0
  %2493 = vmatpush1.msra.mxu0 %v1388
  %2494 = vmatprep.subr.mxu0 0.0
  %2495 = vmatpush1.msra.mxu0 %v1389
  %2496 = vmatprep.subr.mxu0 0.0
  %2497 = vmatpush1.msra.mxu0 0.0
  %2498 = vmatprep.subr.mxu0 0.0
  %2499 = vmatpush1.msra.mxu0 0.0
  %2500 = vmatprep.subr.mxu0 0.0
  %2501 = vmatpush1.msra.mxu0 0.0
  %2502 = vmatprep.subr.mxu0 0.0
  %2503 = vmatpush1.msra.mxu0 0.0
  %2504 = vmatprep.subr.mxu0 0.0
  %2505 = vmatpush1.msra.mxu0 0.0
  %2506 = vmatprep.subr.mxu0 0.0
  %2507 = vmatpush1.msra.mxu0 0.0
  %2508 = vmatprep.subr.mxu0 0.0
  %2509 = vmatpush1.msra.mxu0 0.0
  %2510 = vmatprep.subr.mxu0 0.0
  %2511 = vmatpush1.msra.mxu0 0.0
  %2512 = vmatprep.subr.mxu0 0.0
  %2513 = vmatpush1.msra.mxu0 0.0
  %2514 = vmatprep.subr.mxu0 0.0
  %2515 = vmatpush1.msra.mxu0 0.0
  %2516 = vmatprep.subr.mxu0 0.0
  %2517 = vmatpush1.msra.mxu0 0.0
  %2518 = vmatprep.subr.mxu0 0.0
  %2519 = vmatpush1.msra.mxu0 0.0
  %2520 = vmatprep.subr.mxu0 0.0
  %2521 = vmatpush1.msra.mxu0 0.0
  %2522 = vmatprep.subr.mxu0 0.0
  %2523 = vmatpush1.msra.mxu0 0.0
  %2524 = vmatprep.subr.mxu0 0.0
  %2525 = vmatpush1.msra.mxu0 0.0
  %2526 = vmatprep.subr.mxu0 0.0
  %2527 = vmatpush1.msra.mxu0 0.0
  %2528 = vmatprep.subr.mxu0 0.0
  %2529 = vmatpush1.msra.mxu0 0.0
  %2530 = vmatprep.subr.mxu0 0.0
  %2531 = vmatpush1.msra.mxu0 0.0
  %2532 = vmatprep.subr.mxu0 0.0
  %2533 = vmatpush1.msra.mxu0 0.0
  %2534 = vmatprep.subr.mxu0 0.0
  %2535 = vmatpush1.msra.mxu0 0.0
  %2536 = vmatprep.subr.mxu0 0.0
  %2537 = vmatpush1.msra.mxu0 0.0
  %2538 = vmatprep.subr.mxu0 0.0
  %2539 = vmatpush1.msra.mxu0 0.0
  %2540 = vmatprep.subr.mxu0 0.0
  %2541 = vmatpush1.msra.mxu0 0.0
  %2542 = vmatprep.subr.mxu0 0.0
  %2543 = vmatpush1.msra.mxu0 0.0
  %2544 = vmatprep.mubr.f32.mxu0 0.0
  %2545 = vmatmul.mubr.f32.gmra.mrb[0].mxu0 %v2478
  %v2546 = vpop.f32.mrb[0].mxu0
  %v2547 = vadd.f32 %v1411, %v2546
  %v2548 = vpop.f32.mrb[0].mxu0
  %2549 = vdwg.mxu0
  %v2550 = vmax.f32 %v2547, 0.0
  %2551 = vmatprep.subr.mxu0 0.0
  %2552 = vmatpush1.msra.mxu0 %v1390
  %2553 = vmatprep.subr.mxu0 0.0
  %2554 = vmatpush1.msra.mxu0 %v1391
  %2555 = vmatprep.subr.mxu0 0.0
  %2556 = vmatpush1.msra.mxu0 %v1392
  %2557 = vmatprep.subr.mxu0 0.0
  %2558 = vmatpush1.msra.mxu0 %v1393
  %2559 = vmatprep.subr.mxu0 0.0
  %2560 = vmatpush1.msra.mxu0 %v1394
  %2561 = vmatprep.subr.mxu0 0.0
  %2562 = vmatpush1.msra.mxu0 %v1395
  %2563 = vmatprep.subr.mxu0 0.0
  %2564 = vmatpush1.msra.mxu0 %v1396
  %2565 = vmatprep.subr.mxu0 0.0
  %2566 = vmatpush1.msra.mxu0 %v1397
  %2567 = vmatprep.subr.mxu0 0.0
  %2568 = vmatpush1.msra.mxu0 %v1398
  %2569 = vmatprep.subr.mxu0 0.0
  %2570 = vmatpush1.msra.mxu0 %v1399
  %2571 = vmatprep.subr.mxu0 0.0
  %2572 = vmatpush1.msra.mxu0 %v1400
  %2573 = vmatprep.subr.mxu0 0.0
  %2574 = vmatpush1.msra.mxu0 %v1401
  %2575 = vmatprep.subr.mxu0 0.0
  %2576 = vmatpush1.msra.mxu0 %v1402
  %2577 = vmatprep.subr.mxu0 0.0
  %2578 = vmatpush1.msra.mxu0 %v1403
  %2579 = vmatprep.subr.mxu0 0.0
  %2580 = vmatpush1.msra.mxu0 %v1404
  %2581 = vmatprep.subr.mxu0 0.0
  %2582 = vmatpush1.msra.mxu0 %v1405
  %2583 = vmatprep.subr.mxu0 0.0
  %2584 = vmatpush1.msra.mxu0 0.0
  %2585 = vmatprep.subr.mxu0 0.0
  %2586 = vmatpush1.msra.mxu0 0.0
  %2587 = vmatprep.subr.mxu0 0.0
  %2588 = vmatpush1.msra.mxu0 0.0
  %2589 = vmatprep.subr.mxu0 0.0
  %2590 = vmatpush1.msra.mxu0 0.0
  %2591 = vmatprep.subr.mxu0 0.0
  %2592 = vmatpush1.msra.mxu0 0.0
  %2593 = vmatprep.subr.mxu0 0.0
  %2594 = vmatpush1.msra.mxu0 0.0
  %2595 = vmatprep.subr.mxu0 0.0
  %2596 = vmatpush1.msra.mxu0 0.0
  %2597 = vmatprep.subr.mxu0 0.0
  %2598 = vmatpush1.msra.mxu0 0.0
  %2599 = vmatprep.subr.mxu0 0.0
  %2600 = vmatpush1.msra.mxu0 0.0
  %2601 = vmatprep.subr.mxu0 0.0
  %2602 = vmatpush1.msra.mxu0 0.0
  %2603 = vmatprep.subr.mxu0 0.0
  %2604 = vmatpush1.msra.mxu0 0.0
  %2605 = vmatprep.subr.mxu0 0.0
  %2606 = vmatpush1.msra.mxu0 0.0
  %2607 = vmatprep.subr.mxu0 0.0
  %2608 = vmatpush1.msra.mxu0 0.0
  %2609 = vmatprep.subr.mxu0 0.0
  %2610 = vmatpush1.msra.mxu0 0.0
  %2611 = vmatprep.subr.mxu0 0.0
  %2612 = vmatpush1.msra.mxu0 0.0
  %2613 = vmatprep.subr.mxu0 0.0
  %2614 = vmatpush1.msra.mxu0 0.0
  %2615 = vmatprep.mubr.f32.mxu0 0.0
  %2616 = vmatmul.mubr.f32.gmra.mrb[0].mxu0 %v2550
  %v2617 = vpop.f32.mrb[0].mxu0
  %v2618 = vadd.f32 %v1412, %v2617
  %v2619 = vpop.f32.mrb[0].mxu0
  %2620 = vdwg.mxu0
  %v2621 = vadd.f32 %v2476, %v2618
  %v2622 = vsel %vm152, %v2621, 0.0
  %2623 = vadd.xlane.f32.xlu0 %v2622
  %v2624 = vpop.xlane.xlu0 %2623
  %v2625 = vmul.f32 %v2624, %v1193
  %v2626 = vsub.f32 %v2621, %v2625
  %v2627 = vmul.f32 %v2626, %v2626
  %v2628 = vsel %vm152, %v2627, 0.0
  %2629 = vadd.xlane.f32.xlu0 %v2628
  %v2630 = vpop.xlane.xlu0 %2629
  %v2631 = vmul.f32 %v2630, %v1193
  %v2632 = vadd.f32 %v2631, 1e-05
  %v2633 = vrsqrt.pop %v2632
  %v2634 = vmul.f32 %v2626, %v2633
  %v2635 = vmul.f32 %v2634, %v1413
  %v2636 = vadd.f32 %v2635, %v1414
  %v2637 = vld [vmem:[%s1 + $0x520] sm:$0xff]
  %v2638 = vld [vmem:[%s1 + $0x530] sm:$0xff]
  %v2639 = vld [vmem:[%s1 + $0x540] sm:$0xff]
  %v2640 = vld [vmem:[%s1 + $0x550] sm:$0xff]
  %v2641 = vld [vmem:[%s1 + $0x560] sm:$0xff]
  %v2642 = vld [vmem:[%s1 + $0x570] sm:$0xff]
  %v2643 = vld [vmem:[%s1 + $0x580] sm:$0xff]
  %v2644 = vld [vmem:[%s1 + $0x590] sm:$0xff]
  %v2645 = vld [vmem:[%s2 + $0x21] ss:$0 sm:$0xff]
  %v2647 = vsel %vm152, %v2636, 0
  %2649 = vmatprep.subr.mxu0 0.0
  %2650 = vmatpush1.msra.mxu0 %v2637
  %2651 = vmatprep.subr.mxu0 0.0
  %2652 = vmatpush1.msra.mxu0 %v2638
  %2653 = vmatprep.subr.mxu0 0.0
  %2654 = vmatpush1.msra.mxu0 %v2639
  %2655 = vmatprep.subr.mxu0 0.0
  %2656 = vmatpush1.msra.mxu0 %v2640
  %2657 = vmatprep.subr.mxu0 0.0
  %2658 = vmatpush1.msra.mxu0 %v2641
  %2659 = vmatprep.subr.mxu0 0.0
  %2660 = vmatpush1.msra.mxu0 %v2642
  %2661 = vmatprep.subr.mxu0 0.0
  %2662 = vmatpush1.msra.mxu0 %v2643
  %2663 = vmatprep.subr.mxu0 0.0
  %2664 = vmatpush1.msra.mxu0 %v2644
  %2665 = vmatprep.subr.mxu0 0.0
  %2666 = vmatpush1.msra.mxu0 0.0
  %2667 = vmatprep.subr.mxu0 0.0
  %2668 = vmatpush1.msra.mxu0 0.0
  %2669 = vmatprep.subr.mxu0 0.0
  %2670 = vmatpush1.msra.mxu0 0.0
  %2671 = vmatprep.subr.mxu0 0.0
  %2672 = vmatpush1.msra.mxu0 0.0
  %2673 = vmatprep.subr.mxu0 0.0
  %2674 = vmatpush1.msra.mxu0 0.0
  %2675 = vmatprep.subr.mxu0 0.0
  %2676 = vmatpush1.msra.mxu0 0.0
  %2677 = vmatprep.subr.mxu0 0.0
  %2678 = vmatpush1.msra.mxu0 0.0
  %2679 = vmatprep.subr.mxu0 0.0
  %2680 = vmatpush1.msra.mxu0 0.0
  %2681 = vmatprep.subr.mxu0 0.0
  %2682 = vmatpush1.msra.mxu0 0.0
  %2683 = vmatprep.subr.mxu0 0.0
  %2684 = vmatpush1.msra.mxu0 0.0
  %2685 = vmatprep.subr.mxu0 0.0
  %2686 = vmatpush1.msra.mxu0 0.0
  %2687 = vmatprep.subr.mxu0 0.0
  %2688 = vmatpush1.msra.mxu0 0.0
  %2689 = vmatprep.subr.mxu0 0.0
  %2690 = vmatpush1.msra.mxu0 0.0
  %2691 = vmatprep.subr.mxu0 0.0
  %2692 = vmatpush1.msra.mxu0 0.0
  %2693 = vmatprep.subr.mxu0 0.0
  %2694 = vmatpush1.msra.mxu0 0.0
  %2695 = vmatprep.subr.mxu0 0.0
  %2696 = vmatpush1.msra.mxu0 0.0
  %2697 = vmatprep.subr.mxu0 0.0
  %2698 = vmatpush1.msra.mxu0 0.0
  %2699 = vmatprep.subr.mxu0 0.0
  %2700 = vmatpush1.msra.mxu0 0.0
  %2701 = vmatprep.subr.mxu0 0.0
  %2702 = vmatpush1.msra.mxu0 0.0
  %2703 = vmatprep.subr.mxu0 0.0
  %2704 = vmatpush1.msra.mxu0 0.0
  %2705 = vmatprep.subr.mxu0 0.0
  %2706 = vmatpush1.msra.mxu0 0.0
  %2707 = vmatprep.subr.mxu0 0.0
  %2708 = vmatpush1.msra.mxu0 0.0
  %2709 = vmatprep.subr.mxu0 0.0
  %2710 = vmatpush1.msra.mxu0 0.0
  %2711 = vmatprep.subr.mxu0 0.0
  %2712 = vmatpush1.msra.mxu0 0.0
  %2713 = vmatprep.mubr.f32.mxu0 0.0
  %2714 = vmatmul.mubr.f32.gmra.mrb[0].mxu0 %v2647
  %v2715 = vpop.f32.mrb[0].mxu0
  %v2716 = vadd.f32 %v2645, %v2715
  %v2717 = vpop.f32.mrb[0].mxu0
  %2718 = vdwg.mxu0
  %v2719 = vxor.u32 %v2716, 2147483648
  %v2720 = vmul.f32 %v2719, 1.442695
  %v2721 = vpow.pop %v2720
  %v2722 = vadd.f32 %v2721, 1.0
  %v2723 = vrcp.pop %v2722
  %v2724 = vmul.f32 1.0, %v2723
  %vm2725 = vcmask 7168
  %2726 = vst.msk [vmem:[%s3] sm:$0xff] %vm2725, %v2724
  // Predicated region
  $region14: #{tpu_custom_call.1} parent=0 // pred_check
    _
  $region15: #{tpu_custom_call.1} parent=0 // pred_check_branch
    %2728 = sbr.rel (0) target = $region17
  $region16: #{tpu_custom_call.1} parent=0 // pred_region
    _
  $region17: #{tpu_custom_call.1} parent=0 // pred_fallthru
    _
  // Predicated region
  $region18: #{tpu_custom_call.1} parent=0 // pred_check
    _
  $region19: #{tpu_custom_call.1} parent=0 // pred_check_branch
    %2730 = sbr.rel (0) target = $region21
  $region20: #{tpu_custom_call.1} parent=0 // pred_region
    _
  $region21: #{tpu_custom_call.1} parent=0 // pred_fallthru
    _

</llo_original>
